<compile_context>
chip_gen: v6e
topology: v6e:2x2x1
jax: 0.10.0
libtpu: 0.0.40
codegen_flags: <defaults>
</compile_context>

<pallas_src>
import functools

import jax
import jax.numpy as jnp
from jax.experimental import pallas as pl
from jax.experimental.pallas import tpu as pltpu


# ----------------------------------------------------------------------------
# Fused kernel: dwconv7x7 -> LayerNorm -> Linear(C,4C) -> GELU -> Linear(4C,C)
#               -> gamma -> residual, `B` images per grid step.
# ----------------------------------------------------------------------------
def _block_kernel(x_ref, wmask_ref, hmask_ref, wdw_ref, bdw_ref,
                  lnw_ref, lnb_ref, w1_ref, b1_ref, w2_ref, b2_ref, g_ref,
                  o_ref, dw_ref, *, W, K, eps, c_block, approx_gelu):
    # x_ref    : (B, C, HW)  images of this grid step (channels-first, flattened HW)
    # wmask_ref: (K, HW)     f32 {0,1}: 0 <= w(p)+dw < W   for dw = kw - K//2
    # hmask_ref: (K, HW)     f32 {0,1}: 0 <= h(p)+dh < H   for dh = kh - K//2
    # wdw_ref  : (C, K*K)    depthwise weights, tap index t = kh*K + kw
    # bdw/lnw/lnb/b2/g_ref : (C, 1);   b1_ref : (4C, 1)
    # w1_ref   : (4C, C) bf16 (torch Linear layout);  w2_ref : (C, 4C) bf16
    # o_ref    : (B, C, HW)
    # dw_ref   : (C, HW) f32 VMEM scratch (dwconv output staging)
    B, C, HW = x_ref.shape
    P = K // 2

    wm = wmask_ref[...]          # (K, HW) f32
    hm = hmask_ref[...]          # (K, HW) f32

    for b in range(B):
        # ---- depthwise 7x7: 6 shared w-rolls + 6 h-rolls per channel block ------
        for c0 in range(0, C, c_block):
            xh = x_ref[b, c0:c0 + c_block, :].astype(jnp.float32)     # (CB, HW)
            wgt = wdw_ref[c0:c0 + c_block, :].astype(jnp.float32)     # (CB, K*K)

            # Masked, w-shifted copies (shared across all 7 kh rows).
            mys = []
            for kw in range(K):
                dw = kw - P
                if dw == 0:
                    mys.append(xh)                                    # mask == 1
                else:
                    y = pltpu.roll(xh, (-dw) % HW, axis=1)            # y[p] = x[p+dw]
                    mys.append(y * wm[kw:kw + 1, :])

            acc = None
            for kh in range(K):
                dh = kh - P
                t0 = kh * K
                inner = mys[0] * wgt[:, t0:t0 + 1]
                for kw in range(1, K):
                    t = t0 + kw
                    inner = inner + mys[kw] * wgt[:, t:t + 1]
                if dh != 0:
                    inner = pltpu.roll(inner, (-dh * W) % HW, axis=1)
                    inner = inner * hm[kh:kh + 1, :]                  # kill row wrap
                acc = inner if acc is None else acc + inner
            dw_ref[c0:c0 + c_block, :] = (
                acc + bdw_ref[c0:c0 + c_block, :].astype(jnp.float32))

        # ---- LayerNorm over channels (biased variance, like F.layer_norm) -------
        xdw = dw_ref[...]                                             # (C, HW) f32
        mu = jnp.mean(xdw, axis=0, keepdims=True)
        xc = xdw - mu
        var = jnp.mean(xc * xc, axis=0, keepdims=True)
        xn = xc * jax.lax.rsqrt(var + eps)
        xn = xn * lnw_ref[...].astype(jnp.float32) + lnb_ref[...].astype(jnp.float32)

        # ---- pwconv1 -> GELU -> pwconv2 : bf16 MXU operands, f32 accumulation ---
        h1 = jnp.dot(w1_ref[...], xn.astype(jnp.bfloat16),
                     preferred_element_type=jnp.float32)              # (4C, HW)
        h1 = h1 + b1_ref[...].astype(jnp.float32)
        h1 = jax.nn.gelu(h1, approximate=approx_gelu)                 # tanh -> EUP
        y = jnp.dot(w2_ref[...], h1.astype(jnp.bfloat16),
                    preferred_element_type=jnp.float32)               # (C, HW)
        y = y + b2_ref[...].astype(jnp.float32)

        # ---- layer scale + residual (drop_path = 0.0 -> identity) ---------------
        y = y * g_ref[...].astype(jnp.float32)
        # Residual re-read here (not kept live through the MLP): 8 cheap VMEM loads.
        o_ref[b] = (x_ref[b].astype(jnp.float32) + y).astype(o_ref.dtype)


# ----------------------------------------------------------------------------
# Block wrapper (takes NCHW like the PyTorch module)
# ----------------------------------------------------------------------------
def convnext_block(x_nchw, params, eps=1e-6, *, images_per_step=1, approx_gelu=True):
    N, C, H, W = x_nchw.shape
    HW = H * W
    K = params["dw_w"].shape[0]
    P = K // 2
    C4 = params["w1"].shape[0]
    B = images_per_step
    assert N % B == 0, "images_per_step must divide the batch"

    # dwconv runs on sublane blocks of <= 16 channels so the 7 rolled copies plus
    # accumulator fit in the 64 vregs (no spills onto the vst slot).
    c_block = 16 if (C % 16 == 0 and C >= 16) else (8 if C % 8 == 0 else C)

    # Free (layout-preserving) reshape: NCHW -> (N, C, H*W).  No pad / transpose.
    x_flat = x_nchw.reshape(N, C, HW)

    # Tiny one-time parameter repacks (KB-scale).
    w_dw = jnp.transpose(params["dw_w"], (2, 0, 1)).reshape(C, K * K)
    b_dw = params["dw_b"].reshape(C, 1)
    ln_w = params["ln_w"].reshape(C, 1)
    ln_b = params["ln_b"].reshape(C, 1)
    w1 = params["w1"].astype(jnp.bfloat16)            # (4C, C)
    b1 = params["b1"].reshape(C4, 1)
    w2 = params["w2"].astype(jnp.bfloat16)            # (C, 4C)
    b2 = params["b2"].reshape(C, 1)
    gamma = params["gamma"].reshape(C, 1)

    # Precomputed zero-padding boundary masks: one f32 row per kernel offset.
    pos = jnp.arange(HW, dtype=jnp.int32)
    h_idx = pos // W
    w_idx = pos % W
    offs = (jnp.arange(K, dtype=jnp.int32) - P)[:, None]              # (K, 1)
    wmask = ((w_idx[None, :] + offs >= 0) &
             (w_idx[None, :] + offs < W)).astype(jnp.float32)         # (K, HW)
    hmask = ((h_idx[None, :] + offs >= 0) &
             (h_idx[None, :] + offs < H)).astype(jnp.float32)         # (K, HW)

    kernel = functools.partial(_block_kernel, W=W, K=K, eps=eps,
                               c_block=c_block, approx_gelu=approx_gelu)
    const = lambda n: (0, 0)

    out_flat = pl.pallas_call(
        kernel,
        out_shape=jax.ShapeDtypeStruct((N, C, HW), x_nchw.dtype),
        grid=(N // B,),
        in_specs=[
            pl.BlockSpec((B, C, HW), lambda n: (n, 0, 0)),   # x (also residual)
            pl.BlockSpec((K, HW), const),                    # w boundary masks
            pl.BlockSpec((K, HW), const),                    # h boundary masks
            pl.BlockSpec((C, K * K), const),                 # dw weights
            pl.BlockSpec((C, 1), const),                     # dw bias
            pl.BlockSpec((C, 1), const),                     # LN weight
            pl.BlockSpec((C, 1), const),                     # LN bias
            pl.BlockSpec((C4, C), const),                    # W1 (bf16)
            pl.BlockSpec((C4, 1), const),                    # b1
            pl.BlockSpec((C, C4), const),                    # W2 (bf16)
            pl.BlockSpec((C, 1), const),                     # b2
            pl.BlockSpec((C, 1), const),                     # gamma
        ],
        out_specs=pl.BlockSpec((B, C, HW), lambda n: (n, 0, 0)),
        scratch_shapes=[pltpu.VMEM((C, HW), jnp.float32)],   # dwconv staging
        compiler_params=pltpu.CompilerParams(
            dimension_semantics=("parallel",)),
    )(x_flat, wmask, hmask, w_dw, b_dw, ln_w, ln_b, w1, b1, w2, b2, gamma)

    return out_flat.reshape(N, C, H, W)


# ----------------------------------------------------------------------------
# Pure-JAX f32 reference (matches the PyTorch Block forward: exact-erf GELU)
# ----------------------------------------------------------------------------
def convnext_block_ref(x_nchw, params, eps=1e-6):
    N, C, H, W = x_nchw.shape
    K = params["dw_w"].shape[0]
    P = K // 2
    x = jnp.transpose(x_nchw, (0, 2, 3, 1)).astype(jnp.float32)   # NHWC
    xp = jnp.pad(x, ((0, 0), (P, P), (P, P), (0, 0)))
    acc = jnp.zeros_like(x)
    for kh in range(K):
        for kw in range(K):
            acc = acc + xp[:, kh:kh + H, kw:kw + W, :] * params["dw_w"][kh, kw, :]
    y = acc + params["dw_b"]
    mu = jnp.mean(y, axis=-1, keepdims=True)
    var = jnp.mean((y - mu) ** 2, axis=-1, keepdims=True)
    yn = (y - mu) / jnp.sqrt(var + eps) * params["ln_w"] + params["ln_b"]
    h = jax.nn.gelu(yn @ params["w1"].T + params["b1"], approximate=False)
    z = h @ params["w2"].T + params["b2"]
    z = z * params["gamma"]
    out = x + z
    return jnp.transpose(out, (0, 3, 1, 2))


if __name__ == "__main__":
    # Small shapes consistent with the module: dim=32, batch=2, spatial=16x16.
    N, C, H, W = 2, 32, 16, 16
    key = jax.random.PRNGKey(0)
    ks = jax.random.split(key, 8)

    params = {
        # depthwise conv: (7,7,C) weight, (C,) bias
        "dw_w": 0.1 * jax.random.normal(ks[0], (7, 7, C), jnp.float32),
        "dw_b": 0.1 * jax.random.normal(ks[1], (C,), jnp.float32),
        # LayerNorm init per module: ones / zeros
        "ln_w": jnp.ones((C,), jnp.float32),
        "ln_b": jnp.zeros((C,), jnp.float32),
        # pwconv1: Linear(C -> 4C), torch layout (out, in) = (4C, C)
        "w1": 0.1 * jax.random.normal(ks[2], (4 * C, C), jnp.float32),
        "b1": 0.1 * jax.random.normal(ks[3], (4 * C,), jnp.float32),
        # pwconv2: Linear(4C -> C), torch layout (out, in) = (C, 4C)
        "w2": 0.1 * jax.random.normal(ks[4], (C, 4 * C), jnp.float32),
        "b2": 0.1 * jax.random.normal(ks[5], (C,), jnp.float32),
        # layer scale init value 1e-6 * ones(dim)
        "gamma": 1e-6 * jnp.ones((C,), jnp.float32),
        # drop_path = 0.0 -> Identity (nothing to do)
    }

    x = jax.random.normal(ks[6], (N, C, H, W), jnp.float32)
    ref = jax.block_until_ready(convnext_block_ref(x, params))

    # Default: one image per grid step (2 parallel steps -> both v7x TensorCores).
    out = jax.block_until_ready(convnext_block(x, params))
    assert out.shape == (N, C, H, W)
    assert jnp.allclose(out, ref, rtol=1e-4, atol=1e-4), (
        float(jnp.max(jnp.abs(out - ref))))

    # Batch-folded variant for single-TensorCore chips (v5e/v6e): whole batch in
    # one grid step, removing per-step overhead.
    out2 = jax.block_until_ready(convnext_block(x, params, images_per_step=N))
    assert jnp.allclose(out2, ref, rtol=1e-4, atol=1e-4), (
        float(jnp.max(jnp.abs(out2 - ref))))

    print("KERNEL_OK")
</pallas_src>

<mosaic_0001>
module attributes {stable_mosaic.version = 11 : i64} {
  func.func @_block_kernel(%arg0: i32, %arg1: memref<1x32x256xf32, #tpu.memory_space<vmem>>, %arg2: memref<7x256xf32, #tpu.memory_space<vmem>>, %arg3: memref<7x256xf32, #tpu.memory_space<vmem>>, %arg4: memref<32x49xf32, #tpu.memory_space<vmem>>, %arg5: memref<32x1xf32, #tpu.memory_space<vmem>>, %arg6: memref<32x1xf32, #tpu.memory_space<vmem>>, %arg7: memref<32x1xf32, #tpu.memory_space<vmem>>, %arg8: memref<128x32xbf16, #tpu.memory_space<vmem>>, %arg9: memref<128x1xf32, #tpu.memory_space<vmem>>, %arg10: memref<32x128xbf16, #tpu.memory_space<vmem>>, %arg11: memref<32x1xf32, #tpu.memory_space<vmem>>, %arg12: memref<32x1xf32, #tpu.memory_space<vmem>>, %arg13: memref<1x32x256xf32, #tpu.memory_space<vmem>>, %arg14: memref<32x256xf32, #tpu.memory_space<vmem>>) attributes {dimension_semantics = [#tpu.dimension_semantics<parallel>], iteration_bounds = array<i64: 2>, scalar_prefetch = 0 : i64, scratch_operands = 1 : i64, tpu.core_type = #tpu.core_type<tc>, window_params = [{transform_indices = @transform_0, window_bounds = array<i64: 1, 32, 256>}, {pipeline_mode = #tpu.pipeline_mode<synchronous>, transform_indices = @transform_1, window_bounds = array<i64: 7, 256>}, {pipeline_mode = #tpu.pipeline_mode<synchronous>, transform_indices = @transform_2, window_bounds = array<i64: 7, 256>}, {pipeline_mode = #tpu.pipeline_mode<synchronous>, transform_indices = @transform_3, window_bounds = array<i64: 32, 49>}, {pipeline_mode = #tpu.pipeline_mode<synchronous>, transform_indices = @transform_4, window_bounds = array<i64: 32, 1>}, {pipeline_mode = #tpu.pipeline_mode<synchronous>, transform_indices = @transform_5, window_bounds = array<i64: 32, 1>}, {pipeline_mode = #tpu.pipeline_mode<synchronous>, transform_indices = @transform_6, window_bounds = array<i64: 32, 1>}, {pipeline_mode = #tpu.pipeline_mode<synchronous>, transform_indices = @transform_7, window_bounds = array<i64: 128, 32>}, {pipeline_mode = #tpu.pipeline_mode<synchronous>, transform_indices = @transform_8, window_bounds = array<i64: 128, 1>}, {pipeline_mode = #tpu.pipeline_mode<synchronous>, transform_indices = @transform_9, window_bounds = array<i64: 32, 128>}, {pipeline_mode = #tpu.pipeline_mode<synchronous>, transform_indices = @transform_10, window_bounds = array<i64: 32, 1>}, {pipeline_mode = #tpu.pipeline_mode<synchronous>, transform_indices = @transform_11, window_bounds = array<i64: 32, 1>}, {transform_indices = @transform_12, window_bounds = array<i64: 1, 32, 256>}]} {
    %c0 = arith.constant 0 : index
    %c0_0 = arith.constant 0 : index
    %0 = vector.load %arg2[%c0, %c0_0] : memref<7x256xf32, #tpu.memory_space<vmem>>, vector<7x256xf32>
    %c0_1 = arith.constant 0 : index
    %c0_2 = arith.constant 0 : index
    %1 = vector.load %arg3[%c0_1, %c0_2] : memref<7x256xf32, #tpu.memory_space<vmem>>, vector<7x256xf32>
    %c0_3 = arith.constant 0 : index
    %c0_4 = arith.constant 0 : index
    %c0_5 = arith.constant 0 : index
    %2 = vector.load %arg1[%c0_3, %c0_4, %c0_5] : memref<1x32x256xf32, #tpu.memory_space<vmem>>, vector<1x16x256xf32>
    %3 = vector.shape_cast %2 : vector<1x16x256xf32> to vector<16x256xf32>
    %c0_6 = arith.constant 0 : index
    %c0_7 = arith.constant 0 : index
    %4 = vector.load %arg4[%c0_6, %c0_7] : memref<32x49xf32, #tpu.memory_space<vmem>>, vector<16x49xf32>
    %c3_i32 = arith.constant 3 : i32
    %5 = tpu.dynamic_rotate %3 by %c3_i32 dim 1 : vector<16x256xf32>, i32 -> vector<16x256xf32>
    %6 = vector.extract_strided_slice %0 {offsets = [0, 0], sizes = [1, 256], strides = [1, 1]} : vector<7x256xf32> to vector<1x256xf32>
    %7 = vector.broadcast %6 : vector<1x256xf32> to vector<16x256xf32>
    %8 = arith.mulf %5, %7 : vector<16x256xf32>
    %c2_i32 = arith.constant 2 : i32
    %9 = tpu.dynamic_rotate %3 by %c2_i32 dim 1 : vector<16x256xf32>, i32 -> vector<16x256xf32>
    %10 = vector.extract_strided_slice %0 {offsets = [1, 0], sizes = [1, 256], strides = [1, 1]} : vector<7x256xf32> to vector<1x256xf32>
    %11 = vector.broadcast %10 : vector<1x256xf32> to vector<16x256xf32>
    %12 = arith.mulf %9, %11 : vector<16x256xf32>
    %c1_i32 = arith.constant 1 : i32
    %13 = tpu.dynamic_rotate %3 by %c1_i32 dim 1 : vector<16x256xf32>, i32 -> vector<16x256xf32>
    %14 = vector.extract_strided_slice %0 {offsets = [2, 0], sizes = [1, 256], strides = [1, 1]} : vector<7x256xf32> to vector<1x256xf32>
    %15 = vector.broadcast %14 : vector<1x256xf32> to vector<16x256xf32>
    %16 = arith.mulf %13, %15 : vector<16x256xf32>
    %c255_i32 = arith.constant 255 : i32
    %17 = tpu.dynamic_rotate %3 by %c255_i32 dim 1 : vector<16x256xf32>, i32 -> vector<16x256xf32>
    %18 = vector.extract_strided_slice %0 {offsets = [4, 0], sizes = [1, 256], strides = [1, 1]} : vector<7x256xf32> to vector<1x256xf32>
    %19 = vector.broadcast %18 : vector<1x256xf32> to vector<16x256xf32>
    %20 = arith.mulf %17, %19 : vector<16x256xf32>
    %c254_i32 = arith.constant 254 : i32
    %21 = tpu.dynamic_rotate %3 by %c254_i32 dim 1 : vector<16x256xf32>, i32 -> vector<16x256xf32>
    %22 = vector.extract_strided_slice %0 {offsets = [5, 0], sizes = [1, 256], strides = [1, 1]} : vector<7x256xf32> to vector<1x256xf32>
    %23 = vector.broadcast %22 : vector<1x256xf32> to vector<16x256xf32>
    %24 = arith.mulf %21, %23 : vector<16x256xf32>
    %c253_i32 = arith.constant 253 : i32
    %25 = tpu.dynamic_rotate %3 by %c253_i32 dim 1 : vector<16x256xf32>, i32 -> vector<16x256xf32>
    %26 = vector.extract_strided_slice %0 {offsets = [6, 0], sizes = [1, 256], strides = [1, 1]} : vector<7x256xf32> to vector<1x256xf32>
    %27 = vector.broadcast %26 : vector<1x256xf32> to vector<16x256xf32>
    %28 = arith.mulf %25, %27 : vector<16x256xf32>
    %29 = vector.extract_strided_slice %4 {offsets = [0, 0], sizes = [16, 1], strides = [1, 1]} : vector<16x49xf32> to vector<16x1xf32>
    %30 = vector.broadcast %29 : vector<16x1xf32> to vector<16x256xf32>
    %31 = arith.mulf %8, %30 : vector<16x256xf32>
    %32 = vector.extract_strided_slice %4 {offsets = [0, 1], sizes = [16, 1], strides = [1, 1]} : vector<16x49xf32> to vector<16x1xf32>
    %33 = vector.broadcast %32 : vector<16x1xf32> to vector<16x256xf32>
    %34 = arith.mulf %12, %33 : vector<16x256xf32>
    %35 = arith.addf %31, %34 : vector<16x256xf32>
    %36 = vector.extract_strided_slice %4 {offsets = [0, 2], sizes = [16, 1], strides = [1, 1]} : vector<16x49xf32> to vector<16x1xf32>
    %37 = vector.broadcast %36 : vector<16x1xf32> to vector<16x256xf32>
    %38 = arith.mulf %16, %37 : vector<16x256xf32>
    %39 = arith.addf %35, %38 : vector<16x256xf32>
    %40 = vector.extract_strided_slice %4 {offsets = [0, 3], sizes = [16, 1], strides = [1, 1]} : vector<16x49xf32> to vector<16x1xf32>
    %41 = vector.broadcast %40 : vector<16x1xf32> to vector<16x256xf32>
    %42 = arith.mulf %3, %41 : vector<16x256xf32>
    %43 = arith.addf %39, %42 : vector<16x256xf32>
    %44 = vector.extract_strided_slice %4 {offsets = [0, 4], sizes = [16, 1], strides = [1, 1]} : vector<16x49xf32> to vector<16x1xf32>
    %45 = vector.broadcast %44 : vector<16x1xf32> to vector<16x256xf32>
    %46 = arith.mulf %20, %45 : vector<16x256xf32>
    %47 = arith.addf %43, %46 : vector<16x256xf32>
    %48 = vector.extract_strided_slice %4 {offsets = [0, 5], sizes = [16, 1], strides = [1, 1]} : vector<16x49xf32> to vector<16x1xf32>
    %49 = vector.broadcast %48 : vector<16x1xf32> to vector<16x256xf32>
    %50 = arith.mulf %24, %49 : vector<16x256xf32>
    %51 = arith.addf %47, %50 : vector<16x256xf32>
    %52 = vector.extract_strided_slice %4 {offsets = [0, 6], sizes = [16, 1], strides = [1, 1]} : vector<16x49xf32> to vector<16x1xf32>
    %53 = vector.broadcast %52 : vector<16x1xf32> to vector<16x256xf32>
    %54 = arith.mulf %28, %53 : vector<16x256xf32>
    %55 = arith.addf %51, %54 : vector<16x256xf32>
    %c48_i32 = arith.constant 48 : i32
    %56 = tpu.dynamic_rotate %55 by %c48_i32 dim 1 : vector<16x256xf32>, i32 -> vector<16x256xf32>
    %57 = vector.extract_strided_slice %1 {offsets = [0, 0], sizes = [1, 256], strides = [1, 1]} : vector<7x256xf32> to vector<1x256xf32>
    %58 = vector.broadcast %57 : vector<1x256xf32> to vector<16x256xf32>
    %59 = arith.mulf %56, %58 : vector<16x256xf32>
    %60 = vector.extract_strided_slice %4 {offsets = [0, 7], sizes = [16, 1], strides = [1, 1]} : vector<16x49xf32> to vector<16x1xf32>
    %61 = vector.broadcast %60 : vector<16x1xf32> to vector<16x256xf32>
    %62 = arith.mulf %8, %61 : vector<16x256xf32>
    %63 = vector.extract_strided_slice %4 {offsets = [0, 8], sizes = [16, 1], strides = [1, 1]} : vector<16x49xf32> to vector<16x1xf32>
    %64 = vector.broadcast %63 : vector<16x1xf32> to vector<16x256xf32>
    %65 = arith.mulf %12, %64 : vector<16x256xf32>
    %66 = arith.addf %62, %65 : vector<16x256xf32>
    %67 = vector.extract_strided_slice %4 {offsets = [0, 9], sizes = [16, 1], strides = [1, 1]} : vector<16x49xf32> to vector<16x1xf32>
    %68 = vector.broadcast %67 : vector<16x1xf32> to vector<16x256xf32>
    %69 = arith.mulf %16, %68 : vector<16x256xf32>
    %70 = arith.addf %66, %69 : vector<16x256xf32>
    %71 = vector.extract_strided_slice %4 {offsets = [0, 10], sizes = [16, 1], strides = [1, 1]} : vector<16x49xf32> to vector<16x1xf32>
    %72 = vector.broadcast %71 : vector<16x1xf32> to vector<16x256xf32>
    %73 = arith.mulf %3, %72 : vector<16x256xf32>
    %74 = arith.addf %70, %73 : vector<16x256xf32>
    %75 = vector.extract_strided_slice %4 {offsets = [0, 11], sizes = [16, 1], strides = [1, 1]} : vector<16x49xf32> to vector<16x1xf32>
    %76 = vector.broadcast %75 : vector<16x1xf32> to vector<16x256xf32>
    %77 = arith.mulf %20, %76 : vector<16x256xf32>
    %78 = arith.addf %74, %77 : vector<16x256xf32>
    %79 = vector.extract_strided_slice %4 {offsets = [0, 12], sizes = [16, 1], strides = [1, 1]} : vector<16x49xf32> to vector<16x1xf32>
    %80 = vector.broadcast %79 : vector<16x1xf32> to vector<16x256xf32>
    %81 = arith.mulf %24, %80 : vector<16x256xf32>
    %82 = arith.addf %78, %81 : vector<16x256xf32>
    %83 = vector.extract_strided_slice %4 {offsets = [0, 13], sizes = [16, 1], strides = [1, 1]} : vector<16x49xf32> to vector<16x1xf32>
    %84 = vector.broadcast %83 : vector<16x1xf32> to vector<16x256xf32>
    %85 = arith.mulf %28, %84 : vector<16x256xf32>
    %86 = arith.addf %82, %85 : vector<16x256xf32>
    %c32_i32 = arith.constant 32 : i32
    %87 = tpu.dynamic_rotate %86 by %c32_i32 dim 1 : vector<16x256xf32>, i32 -> vector<16x256xf32>
    %88 = vector.extract_strided_slice %1 {offsets = [1, 0], sizes = [1, 256], strides = [1, 1]} : vector<7x256xf32> to vector<1x256xf32>
    %89 = vector.broadcast %88 : vector<1x256xf32> to vector<16x256xf32>
    %90 = arith.mulf %87, %89 : vector<16x256xf32>
    %91 = arith.addf %59, %90 : vector<16x256xf32>
    %92 = vector.extract_strided_slice %4 {offsets = [0, 14], sizes = [16, 1], strides = [1, 1]} : vector<16x49xf32> to vector<16x1xf32>
    %93 = vector.broadcast %92 : vector<16x1xf32> to vector<16x256xf32>
    %94 = arith.mulf %8, %93 : vector<16x256xf32>
    %95 = vector.extract_strided_slice %4 {offsets = [0, 15], sizes = [16, 1], strides = [1, 1]} : vector<16x49xf32> to vector<16x1xf32>
    %96 = vector.broadcast %95 : vector<16x1xf32> to vector<16x256xf32>
    %97 = arith.mulf %12, %96 : vector<16x256xf32>
    %98 = arith.addf %94, %97 : vector<16x256xf32>
    %99 = vector.extract_strided_slice %4 {offsets = [0, 16], sizes = [16, 1], strides = [1, 1]} : vector<16x49xf32> to vector<16x1xf32>
    %100 = vector.broadcast %99 : vector<16x1xf32> to vector<16x256xf32>
    %101 = arith.mulf %16, %100 : vector<16x256xf32>
    %102 = arith.addf %98, %101 : vector<16x256xf32>
    %103 = vector.extract_strided_slice %4 {offsets = [0, 17], sizes = [16, 1], strides = [1, 1]} : vector<16x49xf32> to vector<16x1xf32>
    %104 = vector.broadcast %103 : vector<16x1xf32> to vector<16x256xf32>
    %105 = arith.mulf %3, %104 : vector<16x256xf32>
    %106 = arith.addf %102, %105 : vector<16x256xf32>
    %107 = vector.extract_strided_slice %4 {offsets = [0, 18], sizes = [16, 1], strides = [1, 1]} : vector<16x49xf32> to vector<16x1xf32>
    %108 = vector.broadcast %107 : vector<16x1xf32> to vector<16x256xf32>
    %109 = arith.mulf %20, %108 : vector<16x256xf32>
    %110 = arith.addf %106, %109 : vector<16x256xf32>
    %111 = vector.extract_strided_slice %4 {offsets = [0, 19], sizes = [16, 1], strides = [1, 1]} : vector<16x49xf32> to vector<16x1xf32>
    %112 = vector.broadcast %111 : vector<16x1xf32> to vector<16x256xf32>
    %113 = arith.mulf %24, %112 : vector<16x256xf32>
    %114 = arith.addf %110, %113 : vector<16x256xf32>
    %115 = vector.extract_strided_slice %4 {offsets = [0, 20], sizes = [16, 1], strides = [1, 1]} : vector<16x49xf32> to vector<16x1xf32>
    %116 = vector.broadcast %115 : vector<16x1xf32> to vector<16x256xf32>
    %117 = arith.mulf %28, %116 : vector<16x256xf32>
    %118 = arith.addf %114, %117 : vector<16x256xf32>
    %c16_i32 = arith.constant 16 : i32
    %119 = tpu.dynamic_rotate %118 by %c16_i32 dim 1 : vector<16x256xf32>, i32 -> vector<16x256xf32>
    %120 = vector.extract_strided_slice %1 {offsets = [2, 0], sizes = [1, 256], strides = [1, 1]} : vector<7x256xf32> to vector<1x256xf32>
    %121 = vector.broadcast %120 : vector<1x256xf32> to vector<16x256xf32>
    %122 = arith.mulf %119, %121 : vector<16x256xf32>
    %123 = arith.addf %91, %122 : vector<16x256xf32>
    %124 = vector.extract_strided_slice %4 {offsets = [0, 21], sizes = [16, 1], strides = [1, 1]} : vector<16x49xf32> to vector<16x1xf32>
    %125 = vector.broadcast %124 : vector<16x1xf32> to vector<16x256xf32>
    %126 = arith.mulf %8, %125 : vector<16x256xf32>
    %127 = vector.extract_strided_slice %4 {offsets = [0, 22], sizes = [16, 1], strides = [1, 1]} : vector<16x49xf32> to vector<16x1xf32>
    %128 = vector.broadcast %127 : vector<16x1xf32> to vector<16x256xf32>
    %129 = arith.mulf %12, %128 : vector<16x256xf32>
    %130 = arith.addf %126, %129 : vector<16x256xf32>
    %131 = vector.extract_strided_slice %4 {offsets = [0, 23], sizes = [16, 1], strides = [1, 1]} : vector<16x49xf32> to vector<16x1xf32>
    %132 = vector.broadcast %131 : vector<16x1xf32> to vector<16x256xf32>
    %133 = arith.mulf %16, %132 : vector<16x256xf32>
    %134 = arith.addf %130, %133 : vector<16x256xf32>
    %135 = vector.extract_strided_slice %4 {offsets = [0, 24], sizes = [16, 1], strides = [1, 1]} : vector<16x49xf32> to vector<16x1xf32>
    %136 = vector.broadcast %135 : vector<16x1xf32> to vector<16x256xf32>
    %137 = arith.mulf %3, %136 : vector<16x256xf32>
    %138 = arith.addf %134, %137 : vector<16x256xf32>
    %139 = vector.extract_strided_slice %4 {offsets = [0, 25], sizes = [16, 1], strides = [1, 1]} : vector<16x49xf32> to vector<16x1xf32>
    %140 = vector.broadcast %139 : vector<16x1xf32> to vector<16x256xf32>
    %141 = arith.mulf %20, %140 : vector<16x256xf32>
    %142 = arith.addf %138, %141 : vector<16x256xf32>
    %143 = vector.extract_strided_slice %4 {offsets = [0, 26], sizes = [16, 1], strides = [1, 1]} : vector<16x49xf32> to vector<16x1xf32>
    %144 = vector.broadcast %143 : vector<16x1xf32> to vector<16x256xf32>
    %145 = arith.mulf %24, %144 : vector<16x256xf32>
    %146 = arith.addf %142, %145 : vector<16x256xf32>
    %147 = vector.extract_strided_slice %4 {offsets = [0, 27], sizes = [16, 1], strides = [1, 1]} : vector<16x49xf32> to vector<16x1xf32>
    %148 = vector.broadcast %147 : vector<16x1xf32> to vector<16x256xf32>
    %149 = arith.mulf %28, %148 : vector<16x256xf32>
    %150 = arith.addf %146, %149 : vector<16x256xf32>
    %151 = arith.addf %123, %150 : vector<16x256xf32>
    %152 = vector.extract_strided_slice %4 {offsets = [0, 28], sizes = [16, 1], strides = [1, 1]} : vector<16x49xf32> to vector<16x1xf32>
    %153 = vector.broadcast %152 : vector<16x1xf32> to vector<16x256xf32>
    %154 = arith.mulf %8, %153 : vector<16x256xf32>
    %155 = vector.extract_strided_slice %4 {offsets = [0, 29], sizes = [16, 1], strides = [1, 1]} : vector<16x49xf32> to vector<16x1xf32>
    %156 = vector.broadcast %155 : vector<16x1xf32> to vector<16x256xf32>
    %157 = arith.mulf %12, %156 : vector<16x256xf32>
    %158 = arith.addf %154, %157 : vector<16x256xf32>
    %159 = vector.extract_strided_slice %4 {offsets = [0, 30], sizes = [16, 1], strides = [1, 1]} : vector<16x49xf32> to vector<16x1xf32>
    %160 = vector.broadcast %159 : vector<16x1xf32> to vector<16x256xf32>
    %161 = arith.mulf %16, %160 : vector<16x256xf32>
    %162 = arith.addf %158, %161 : vector<16x256xf32>
    %163 = vector.extract_strided_slice %4 {offsets = [0, 31], sizes = [16, 1], strides = [1, 1]} : vector<16x49xf32> to vector<16x1xf32>
    %164 = vector.broadcast %163 : vector<16x1xf32> to vector<16x256xf32>
    %165 = arith.mulf %3, %164 : vector<16x256xf32>
    %166 = arith.addf %162, %165 : vector<16x256xf32>
    %167 = vector.extract_strided_slice %4 {offsets = [0, 32], sizes = [16, 1], strides = [1, 1]} : vector<16x49xf32> to vector<16x1xf32>
    %168 = vector.broadcast %167 : vector<16x1xf32> to vector<16x256xf32>
    %169 = arith.mulf %20, %168 : vector<16x256xf32>
    %170 = arith.addf %166, %169 : vector<16x256xf32>
    %171 = vector.extract_strided_slice %4 {offsets = [0, 33], sizes = [16, 1], strides = [1, 1]} : vector<16x49xf32> to vector<16x1xf32>
    %172 = vector.broadcast %171 : vector<16x1xf32> to vector<16x256xf32>
    %173 = arith.mulf %24, %172 : vector<16x256xf32>
    %174 = arith.addf %170, %173 : vector<16x256xf32>
    %175 = vector.extract_strided_slice %4 {offsets = [0, 34], sizes = [16, 1], strides = [1, 1]} : vector<16x49xf32> to vector<16x1xf32>
    %176 = vector.broadcast %175 : vector<16x1xf32> to vector<16x256xf32>
    %177 = arith.mulf %28, %176 : vector<16x256xf32>
    %178 = arith.addf %174, %177 : vector<16x256xf32>
    %c240_i32 = arith.constant 240 : i32
    %179 = tpu.dynamic_rotate %178 by %c240_i32 dim 1 : vector<16x256xf32>, i32 -> vector<16x256xf32>
    %180 = vector.extract_strided_slice %1 {offsets = [4, 0], sizes = [1, 256], strides = [1, 1]} : vector<7x256xf32> to vector<1x256xf32>
    %181 = vector.broadcast %180 : vector<1x256xf32> to vector<16x256xf32>
    %182 = arith.mulf %179, %181 : vector<16x256xf32>
    %183 = arith.addf %151, %182 : vector<16x256xf32>
    %184 = vector.extract_strided_slice %4 {offsets = [0, 35], sizes = [16, 1], strides = [1, 1]} : vector<16x49xf32> to vector<16x1xf32>
    %185 = vector.broadcast %184 : vector<16x1xf32> to vector<16x256xf32>
    %186 = arith.mulf %8, %185 : vector<16x256xf32>
    %187 = vector.extract_strided_slice %4 {offsets = [0, 36], sizes = [16, 1], strides = [1, 1]} : vector<16x49xf32> to vector<16x1xf32>
    %188 = vector.broadcast %187 : vector<16x1xf32> to vector<16x256xf32>
    %189 = arith.mulf %12, %188 : vector<16x256xf32>
    %190 = arith.addf %186, %189 : vector<16x256xf32>
    %191 = vector.extract_strided_slice %4 {offsets = [0, 37], sizes = [16, 1], strides = [1, 1]} : vector<16x49xf32> to vector<16x1xf32>
    %192 = vector.broadcast %191 : vector<16x1xf32> to vector<16x256xf32>
    %193 = arith.mulf %16, %192 : vector<16x256xf32>
    %194 = arith.addf %190, %193 : vector<16x256xf32>
    %195 = vector.extract_strided_slice %4 {offsets = [0, 38], sizes = [16, 1], strides = [1, 1]} : vector<16x49xf32> to vector<16x1xf32>
    %196 = vector.broadcast %195 : vector<16x1xf32> to vector<16x256xf32>
    %197 = arith.mulf %3, %196 : vector<16x256xf32>
    %198 = arith.addf %194, %197 : vector<16x256xf32>
    %199 = vector.extract_strided_slice %4 {offsets = [0, 39], sizes = [16, 1], strides = [1, 1]} : vector<16x49xf32> to vector<16x1xf32>
    %200 = vector.broadcast %199 : vector<16x1xf32> to vector<16x256xf32>
    %201 = arith.mulf %20, %200 : vector<16x256xf32>
    %202 = arith.addf %198, %201 : vector<16x256xf32>
    %203 = vector.extract_strided_slice %4 {offsets = [0, 40], sizes = [16, 1], strides = [1, 1]} : vector<16x49xf32> to vector<16x1xf32>
    %204 = vector.broadcast %203 : vector<16x1xf32> to vector<16x256xf32>
    %205 = arith.mulf %24, %204 : vector<16x256xf32>
    %206 = arith.addf %202, %205 : vector<16x256xf32>
    %207 = vector.extract_strided_slice %4 {offsets = [0, 41], sizes = [16, 1], strides = [1, 1]} : vector<16x49xf32> to vector<16x1xf32>
    %208 = vector.broadcast %207 : vector<16x1xf32> to vector<16x256xf32>
    %209 = arith.mulf %28, %208 : vector<16x256xf32>
    %210 = arith.addf %206, %209 : vector<16x256xf32>
    %c224_i32 = arith.constant 224 : i32
    %211 = tpu.dynamic_rotate %210 by %c224_i32 dim 1 : vector<16x256xf32>, i32 -> vector<16x256xf32>
    %212 = vector.extract_strided_slice %1 {offsets = [5, 0], sizes = [1, 256], strides = [1, 1]} : vector<7x256xf32> to vector<1x256xf32>
    %213 = vector.broadcast %212 : vector<1x256xf32> to vector<16x256xf32>
    %214 = arith.mulf %211, %213 : vector<16x256xf32>
    %215 = arith.addf %183, %214 : vector<16x256xf32>
    %216 = vector.extract_strided_slice %4 {offsets = [0, 42], sizes = [16, 1], strides = [1, 1]} : vector<16x49xf32> to vector<16x1xf32>
    %217 = vector.broadcast %216 : vector<16x1xf32> to vector<16x256xf32>
    %218 = arith.mulf %8, %217 : vector<16x256xf32>
    %219 = vector.extract_strided_slice %4 {offsets = [0, 43], sizes = [16, 1], strides = [1, 1]} : vector<16x49xf32> to vector<16x1xf32>
    %220 = vector.broadcast %219 : vector<16x1xf32> to vector<16x256xf32>
    %221 = arith.mulf %12, %220 : vector<16x256xf32>
    %222 = arith.addf %218, %221 : vector<16x256xf32>
    %223 = vector.extract_strided_slice %4 {offsets = [0, 44], sizes = [16, 1], strides = [1, 1]} : vector<16x49xf32> to vector<16x1xf32>
    %224 = vector.broadcast %223 : vector<16x1xf32> to vector<16x256xf32>
    %225 = arith.mulf %16, %224 : vector<16x256xf32>
    %226 = arith.addf %222, %225 : vector<16x256xf32>
    %227 = vector.extract_strided_slice %4 {offsets = [0, 45], sizes = [16, 1], strides = [1, 1]} : vector<16x49xf32> to vector<16x1xf32>
    %228 = vector.broadcast %227 : vector<16x1xf32> to vector<16x256xf32>
    %229 = arith.mulf %3, %228 : vector<16x256xf32>
    %230 = arith.addf %226, %229 : vector<16x256xf32>
    %231 = vector.extract_strided_slice %4 {offsets = [0, 46], sizes = [16, 1], strides = [1, 1]} : vector<16x49xf32> to vector<16x1xf32>
    %232 = vector.broadcast %231 : vector<16x1xf32> to vector<16x256xf32>
    %233 = arith.mulf %20, %232 : vector<16x256xf32>
    %234 = arith.addf %230, %233 : vector<16x256xf32>
    %235 = vector.extract_strided_slice %4 {offsets = [0, 47], sizes = [16, 1], strides = [1, 1]} : vector<16x49xf32> to vector<16x1xf32>
    %236 = vector.broadcast %235 : vector<16x1xf32> to vector<16x256xf32>
    %237 = arith.mulf %24, %236 : vector<16x256xf32>
    %238 = arith.addf %234, %237 : vector<16x256xf32>
    %239 = vector.extract_strided_slice %4 {offsets = [0, 48], sizes = [16, 1], strides = [1, 1]} : vector<16x49xf32> to vector<16x1xf32>
    %240 = vector.broadcast %239 : vector<16x1xf32> to vector<16x256xf32>
    %241 = arith.mulf %28, %240 : vector<16x256xf32>
    %242 = arith.addf %238, %241 : vector<16x256xf32>
    %c208_i32 = arith.constant 208 : i32
    %243 = tpu.dynamic_rotate %242 by %c208_i32 dim 1 : vector<16x256xf32>, i32 -> vector<16x256xf32>
    %244 = vector.extract_strided_slice %1 {offsets = [6, 0], sizes = [1, 256], strides = [1, 1]} : vector<7x256xf32> to vector<1x256xf32>
    %245 = vector.broadcast %244 : vector<1x256xf32> to vector<16x256xf32>
    %246 = arith.mulf %243, %245 : vector<16x256xf32>
    %247 = arith.addf %215, %246 : vector<16x256xf32>
    %c0_8 = arith.constant 0 : index
    %c0_9 = arith.constant 0 : index
    %248 = vector.load %arg5[%c0_8, %c0_9] : memref<32x1xf32, #tpu.memory_space<vmem>>, vector<16x1xf32>
    %249 = vector.broadcast %248 : vector<16x1xf32> to vector<16x256xf32>
    %250 = arith.addf %247, %249 : vector<16x256xf32>
    %c0_10 = arith.constant 0 : index
    %c0_11 = arith.constant 0 : index
    %251 = vector.load %arg14[%c0_10, %c0_11] : memref<32x256xf32, #tpu.memory_space<vmem>>, vector<16x256xf32>
    tpu.vector_store %arg14[%c0_10, %c0_11], %250 {strides = array<i32>} : memref<32x256xf32, #tpu.memory_space<vmem>>, vector<16x256xf32>,
    %c0_12 = arith.constant 0 : index
    %c16 = arith.constant 16 : index
    %c0_13 = arith.constant 0 : index
    %252 = vector.load %arg1[%c0_12, %c16, %c0_13] : memref<1x32x256xf32, #tpu.memory_space<vmem>>, vector<1x16x256xf32>
    %253 = vector.shape_cast %252 : vector<1x16x256xf32> to vector<16x256xf32>
    %c16_14 = arith.constant 16 : index
    %c0_15 = arith.constant 0 : index
    %254 = vector.load %arg4[%c16_14, %c0_15] : memref<32x49xf32, #tpu.memory_space<vmem>>, vector<16x49xf32>
    %c3_i32_16 = arith.constant 3 : i32
    %255 = tpu.dynamic_rotate %253 by %c3_i32_16 dim 1 : vector<16x256xf32>, i32 -> vector<16x256xf32>
    %256 = vector.extract_strided_slice %0 {offsets = [0, 0], sizes = [1, 256], strides = [1, 1]} : vector<7x256xf32> to vector<1x256xf32>
    %257 = vector.broadcast %256 : vector<1x256xf32> to vector<16x256xf32>
    %258 = arith.mulf %255, %257 : vector<16x256xf32>
    %c2_i32_17 = arith.constant 2 : i32
    %259 = tpu.dynamic_rotate %253 by %c2_i32_17 dim 1 : vector<16x256xf32>, i32 -> vector<16x256xf32>
    %260 = vector.extract_strided_slice %0 {offsets = [1, 0], sizes = [1, 256], strides = [1, 1]} : vector<7x256xf32> to vector<1x256xf32>
    %261 = vector.broadcast %260 : vector<1x256xf32> to vector<16x256xf32>
    %262 = arith.mulf %259, %261 : vector<16x256xf32>
    %c1_i32_18 = arith.constant 1 : i32
    %263 = tpu.dynamic_rotate %253 by %c1_i32_18 dim 1 : vector<16x256xf32>, i32 -> vector<16x256xf32>
    %264 = vector.extract_strided_slice %0 {offsets = [2, 0], sizes = [1, 256], strides = [1, 1]} : vector<7x256xf32> to vector<1x256xf32>
    %265 = vector.broadcast %264 : vector<1x256xf32> to vector<16x256xf32>
    %266 = arith.mulf %263, %265 : vector<16x256xf32>
    %c255_i32_19 = arith.constant 255 : i32
    %267 = tpu.dynamic_rotate %253 by %c255_i32_19 dim 1 : vector<16x256xf32>, i32 -> vector<16x256xf32>
    %268 = vector.extract_strided_slice %0 {offsets = [4, 0], sizes = [1, 256], strides = [1, 1]} : vector<7x256xf32> to vector<1x256xf32>
    %269 = vector.broadcast %268 : vector<1x256xf32> to vector<16x256xf32>
    %270 = arith.mulf %267, %269 : vector<16x256xf32>
    %c254_i32_20 = arith.constant 254 : i32
    %271 = tpu.dynamic_rotate %253 by %c254_i32_20 dim 1 : vector<16x256xf32>, i32 -> vector<16x256xf32>
    %272 = vector.extract_strided_slice %0 {offsets = [5, 0], sizes = [1, 256], strides = [1, 1]} : vector<7x256xf32> to vector<1x256xf32>
    %273 = vector.broadcast %272 : vector<1x256xf32> to vector<16x256xf32>
    %274 = arith.mulf %271, %273 : vector<16x256xf32>
    %c253_i32_21 = arith.constant 253 : i32
    %275 = tpu.dynamic_rotate %253 by %c253_i32_21 dim 1 : vector<16x256xf32>, i32 -> vector<16x256xf32>
    %276 = vector.extract_strided_slice %0 {offsets = [6, 0], sizes = [1, 256], strides = [1, 1]} : vector<7x256xf32> to vector<1x256xf32>
    %277 = vector.broadcast %276 : vector<1x256xf32> to vector<16x256xf32>
    %278 = arith.mulf %275, %277 : vector<16x256xf32>
    %279 = vector.extract_strided_slice %254 {offsets = [0, 0], sizes = [16, 1], strides = [1, 1]} : vector<16x49xf32> to vector<16x1xf32>
    %280 = vector.broadcast %279 : vector<16x1xf32> to vector<16x256xf32>
    %281 = arith.mulf %258, %280 : vector<16x256xf32>
    %282 = vector.extract_strided_slice %254 {offsets = [0, 1], sizes = [16, 1], strides = [1, 1]} : vector<16x49xf32> to vector<16x1xf32>
    %283 = vector.broadcast %282 : vector<16x1xf32> to vector<16x256xf32>
    %284 = arith.mulf %262, %283 : vector<16x256xf32>
    %285 = arith.addf %281, %284 : vector<16x256xf32>
    %286 = vector.extract_strided_slice %254 {offsets = [0, 2], sizes = [16, 1], strides = [1, 1]} : vector<16x49xf32> to vector<16x1xf32>
    %287 = vector.broadcast %286 : vector<16x1xf32> to vector<16x256xf32>
    %288 = arith.mulf %266, %287 : vector<16x256xf32>
    %289 = arith.addf %285, %288 : vector<16x256xf32>
    %290 = vector.extract_strided_slice %254 {offsets = [0, 3], sizes = [16, 1], strides = [1, 1]} : vector<16x49xf32> to vector<16x1xf32>
    %291 = vector.broadcast %290 : vector<16x1xf32> to vector<16x256xf32>
    %292 = arith.mulf %253, %291 : vector<16x256xf32>
    %293 = arith.addf %289, %292 : vector<16x256xf32>
    %294 = vector.extract_strided_slice %254 {offsets = [0, 4], sizes = [16, 1], strides = [1, 1]} : vector<16x49xf32> to vector<16x1xf32>
    %295 = vector.broadcast %294 : vector<16x1xf32> to vector<16x256xf32>
    %296 = arith.mulf %270, %295 : vector<16x256xf32>
    %297 = arith.addf %293, %296 : vector<16x256xf32>
    %298 = vector.extract_strided_slice %254 {offsets = [0, 5], sizes = [16, 1], strides = [1, 1]} : vector<16x49xf32> to vector<16x1xf32>
    %299 = vector.broadcast %298 : vector<16x1xf32> to vector<16x256xf32>
    %300 = arith.mulf %274, %299 : vector<16x256xf32>
    %301 = arith.addf %297, %300 : vector<16x256xf32>
    %302 = vector.extract_strided_slice %254 {offsets = [0, 6], sizes = [16, 1], strides = [1, 1]} : vector<16x49xf32> to vector<16x1xf32>
    %303 = vector.broadcast %302 : vector<16x1xf32> to vector<16x256xf32>
    %304 = arith.mulf %278, %303 : vector<16x256xf32>
    %305 = arith.addf %301, %304 : vector<16x256xf32>
    %c48_i32_22 = arith.constant 48 : i32
    %306 = tpu.dynamic_rotate %305 by %c48_i32_22 dim 1 : vector<16x256xf32>, i32 -> vector<16x256xf32>
    %307 = vector.extract_strided_slice %1 {offsets = [0, 0], sizes = [1, 256], strides = [1, 1]} : vector<7x256xf32> to vector<1x256xf32>
    %308 = vector.broadcast %307 : vector<1x256xf32> to vector<16x256xf32>
    %309 = arith.mulf %306, %308 : vector<16x256xf32>
    %310 = vector.extract_strided_slice %254 {offsets = [0, 7], sizes = [16, 1], strides = [1, 1]} : vector<16x49xf32> to vector<16x1xf32>
    %311 = vector.broadcast %310 : vector<16x1xf32> to vector<16x256xf32>
    %312 = arith.mulf %258, %311 : vector<16x256xf32>
    %313 = vector.extract_strided_slice %254 {offsets = [0, 8], sizes = [16, 1], strides = [1, 1]} : vector<16x49xf32> to vector<16x1xf32>
    %314 = vector.broadcast %313 : vector<16x1xf32> to vector<16x256xf32>
    %315 = arith.mulf %262, %314 : vector<16x256xf32>
    %316 = arith.addf %312, %315 : vector<16x256xf32>
    %317 = vector.extract_strided_slice %254 {offsets = [0, 9], sizes = [16, 1], strides = [1, 1]} : vector<16x49xf32> to vector<16x1xf32>
    %318 = vector.broadcast %317 : vector<16x1xf32> to vector<16x256xf32>
    %319 = arith.mulf %266, %318 : vector<16x256xf32>
    %320 = arith.addf %316, %319 : vector<16x256xf32>
    %321 = vector.extract_strided_slice %254 {offsets = [0, 10], sizes = [16, 1], strides = [1, 1]} : vector<16x49xf32> to vector<16x1xf32>
    %322 = vector.broadcast %321 : vector<16x1xf32> to vector<16x256xf32>
    %323 = arith.mulf %253, %322 : vector<16x256xf32>
    %324 = arith.addf %320, %323 : vector<16x256xf32>
    %325 = vector.extract_strided_slice %254 {offsets = [0, 11], sizes = [16, 1], strides = [1, 1]} : vector<16x49xf32> to vector<16x1xf32>
    %326 = vector.broadcast %325 : vector<16x1xf32> to vector<16x256xf32>
    %327 = arith.mulf %270, %326 : vector<16x256xf32>
    %328 = arith.addf %324, %327 : vector<16x256xf32>
    %329 = vector.extract_strided_slice %254 {offsets = [0, 12], sizes = [16, 1], strides = [1, 1]} : vector<16x49xf32> to vector<16x1xf32>
    %330 = vector.broadcast %329 : vector<16x1xf32> to vector<16x256xf32>
    %331 = arith.mulf %274, %330 : vector<16x256xf32>
    %332 = arith.addf %328, %331 : vector<16x256xf32>
    %333 = vector.extract_strided_slice %254 {offsets = [0, 13], sizes = [16, 1], strides = [1, 1]} : vector<16x49xf32> to vector<16x1xf32>
    %334 = vector.broadcast %333 : vector<16x1xf32> to vector<16x256xf32>
    %335 = arith.mulf %278, %334 : vector<16x256xf32>
    %336 = arith.addf %332, %335 : vector<16x256xf32>
    %c32_i32_23 = arith.constant 32 : i32
    %337 = tpu.dynamic_rotate %336 by %c32_i32_23 dim 1 : vector<16x256xf32>, i32 -> vector<16x256xf32>
    %338 = vector.extract_strided_slice %1 {offsets = [1, 0], sizes = [1, 256], strides = [1, 1]} : vector<7x256xf32> to vector<1x256xf32>
    %339 = vector.broadcast %338 : vector<1x256xf32> to vector<16x256xf32>
    %340 = arith.mulf %337, %339 : vector<16x256xf32>
    %341 = arith.addf %309, %340 : vector<16x256xf32>
    %342 = vector.extract_strided_slice %254 {offsets = [0, 14], sizes = [16, 1], strides = [1, 1]} : vector<16x49xf32> to vector<16x1xf32>
    %343 = vector.broadcast %342 : vector<16x1xf32> to vector<16x256xf32>
    %344 = arith.mulf %258, %343 : vector<16x256xf32>
    %345 = vector.extract_strided_slice %254 {offsets = [0, 15], sizes = [16, 1], strides = [1, 1]} : vector<16x49xf32> to vector<16x1xf32>
    %346 = vector.broadcast %345 : vector<16x1xf32> to vector<16x256xf32>
    %347 = arith.mulf %262, %346 : vector<16x256xf32>
    %348 = arith.addf %344, %347 : vector<16x256xf32>
    %349 = vector.extract_strided_slice %254 {offsets = [0, 16], sizes = [16, 1], strides = [1, 1]} : vector<16x49xf32> to vector<16x1xf32>
    %350 = vector.broadcast %349 : vector<16x1xf32> to vector<16x256xf32>
    %351 = arith.mulf %266, %350 : vector<16x256xf32>
    %352 = arith.addf %348, %351 : vector<16x256xf32>
    %353 = vector.extract_strided_slice %254 {offsets = [0, 17], sizes = [16, 1], strides = [1, 1]} : vector<16x49xf32> to vector<16x1xf32>
    %354 = vector.broadcast %353 : vector<16x1xf32> to vector<16x256xf32>
    %355 = arith.mulf %253, %354 : vector<16x256xf32>
    %356 = arith.addf %352, %355 : vector<16x256xf32>
    %357 = vector.extract_strided_slice %254 {offsets = [0, 18], sizes = [16, 1], strides = [1, 1]} : vector<16x49xf32> to vector<16x1xf32>
    %358 = vector.broadcast %357 : vector<16x1xf32> to vector<16x256xf32>
    %359 = arith.mulf %270, %358 : vector<16x256xf32>
    %360 = arith.addf %356, %359 : vector<16x256xf32>
    %361 = vector.extract_strided_slice %254 {offsets = [0, 19], sizes = [16, 1], strides = [1, 1]} : vector<16x49xf32> to vector<16x1xf32>
    %362 = vector.broadcast %361 : vector<16x1xf32> to vector<16x256xf32>
    %363 = arith.mulf %274, %362 : vector<16x256xf32>
    %364 = arith.addf %360, %363 : vector<16x256xf32>
    %365 = vector.extract_strided_slice %254 {offsets = [0, 20], sizes = [16, 1], strides = [1, 1]} : vector<16x49xf32> to vector<16x1xf32>
    %366 = vector.broadcast %365 : vector<16x1xf32> to vector<16x256xf32>
    %367 = arith.mulf %278, %366 : vector<16x256xf32>
    %368 = arith.addf %364, %367 : vector<16x256xf32>
    %c16_i32_24 = arith.constant 16 : i32
    %369 = tpu.dynamic_rotate %368 by %c16_i32_24 dim 1 : vector<16x256xf32>, i32 -> vector<16x256xf32>
    %370 = vector.extract_strided_slice %1 {offsets = [2, 0], sizes = [1, 256], strides = [1, 1]} : vector<7x256xf32> to vector<1x256xf32>
    %371 = vector.broadcast %370 : vector<1x256xf32> to vector<16x256xf32>
    %372 = arith.mulf %369, %371 : vector<16x256xf32>
    %373 = arith.addf %341, %372 : vector<16x256xf32>
    %374 = vector.extract_strided_slice %254 {offsets = [0, 21], sizes = [16, 1], strides = [1, 1]} : vector<16x49xf32> to vector<16x1xf32>
    %375 = vector.broadcast %374 : vector<16x1xf32> to vector<16x256xf32>
    %376 = arith.mulf %258, %375 : vector<16x256xf32>
    %377 = vector.extract_strided_slice %254 {offsets = [0, 22], sizes = [16, 1], strides = [1, 1]} : vector<16x49xf32> to vector<16x1xf32>
    %378 = vector.broadcast %377 : vector<16x1xf32> to vector<16x256xf32>
    %379 = arith.mulf %262, %378 : vector<16x256xf32>
    %380 = arith.addf %376, %379 : vector<16x256xf32>
    %381 = vector.extract_strided_slice %254 {offsets = [0, 23], sizes = [16, 1], strides = [1, 1]} : vector<16x49xf32> to vector<16x1xf32>
    %382 = vector.broadcast %381 : vector<16x1xf32> to vector<16x256xf32>
    %383 = arith.mulf %266, %382 : vector<16x256xf32>
    %384 = arith.addf %380, %383 : vector<16x256xf32>
    %385 = vector.extract_strided_slice %254 {offsets = [0, 24], sizes = [16, 1], strides = [1, 1]} : vector<16x49xf32> to vector<16x1xf32>
    %386 = vector.broadcast %385 : vector<16x1xf32> to vector<16x256xf32>
    %387 = arith.mulf %253, %386 : vector<16x256xf32>
    %388 = arith.addf %384, %387 : vector<16x256xf32>
    %389 = vector.extract_strided_slice %254 {offsets = [0, 25], sizes = [16, 1], strides = [1, 1]} : vector<16x49xf32> to vector<16x1xf32>
    %390 = vector.broadcast %389 : vector<16x1xf32> to vector<16x256xf32>
    %391 = arith.mulf %270, %390 : vector<16x256xf32>
    %392 = arith.addf %388, %391 : vector<16x256xf32>
    %393 = vector.extract_strided_slice %254 {offsets = [0, 26], sizes = [16, 1], strides = [1, 1]} : vector<16x49xf32> to vector<16x1xf32>
    %394 = vector.broadcast %393 : vector<16x1xf32> to vector<16x256xf32>
    %395 = arith.mulf %274, %394 : vector<16x256xf32>
    %396 = arith.addf %392, %395 : vector<16x256xf32>
    %397 = vector.extract_strided_slice %254 {offsets = [0, 27], sizes = [16, 1], strides = [1, 1]} : vector<16x49xf32> to vector<16x1xf32>
    %398 = vector.broadcast %397 : vector<16x1xf32> to vector<16x256xf32>
    %399 = arith.mulf %278, %398 : vector<16x256xf32>
    %400 = arith.addf %396, %399 : vector<16x256xf32>
    %401 = arith.addf %373, %400 : vector<16x256xf32>
    %402 = vector.extract_strided_slice %254 {offsets = [0, 28], sizes = [16, 1], strides = [1, 1]} : vector<16x49xf32> to vector<16x1xf32>
    %403 = vector.broadcast %402 : vector<16x1xf32> to vector<16x256xf32>
    %404 = arith.mulf %258, %403 : vector<16x256xf32>
    %405 = vector.extract_strided_slice %254 {offsets = [0, 29], sizes = [16, 1], strides = [1, 1]} : vector<16x49xf32> to vector<16x1xf32>
    %406 = vector.broadcast %405 : vector<16x1xf32> to vector<16x256xf32>
    %407 = arith.mulf %262, %406 : vector<16x256xf32>
    %408 = arith.addf %404, %407 : vector<16x256xf32>
    %409 = vector.extract_strided_slice %254 {offsets = [0, 30], sizes = [16, 1], strides = [1, 1]} : vector<16x49xf32> to vector<16x1xf32>
    %410 = vector.broadcast %409 : vector<16x1xf32> to vector<16x256xf32>
    %411 = arith.mulf %266, %410 : vector<16x256xf32>
    %412 = arith.addf %408, %411 : vector<16x256xf32>
    %413 = vector.extract_strided_slice %254 {offsets = [0, 31], sizes = [16, 1], strides = [1, 1]} : vector<16x49xf32> to vector<16x1xf32>
    %414 = vector.broadcast %413 : vector<16x1xf32> to vector<16x256xf32>
    %415 = arith.mulf %253, %414 : vector<16x256xf32>
    %416 = arith.addf %412, %415 : vector<16x256xf32>
    %417 = vector.extract_strided_slice %254 {offsets = [0, 32], sizes = [16, 1], strides = [1, 1]} : vector<16x49xf32> to vector<16x1xf32>
    %418 = vector.broadcast %417 : vector<16x1xf32> to vector<16x256xf32>
    %419 = arith.mulf %270, %418 : vector<16x256xf32>
    %420 = arith.addf %416, %419 : vector<16x256xf32>
    %421 = vector.extract_strided_slice %254 {offsets = [0, 33], sizes = [16, 1], strides = [1, 1]} : vector<16x49xf32> to vector<16x1xf32>
    %422 = vector.broadcast %421 : vector<16x1xf32> to vector<16x256xf32>
    %423 = arith.mulf %274, %422 : vector<16x256xf32>
    %424 = arith.addf %420, %423 : vector<16x256xf32>
    %425 = vector.extract_strided_slice %254 {offsets = [0, 34], sizes = [16, 1], strides = [1, 1]} : vector<16x49xf32> to vector<16x1xf32>
    %426 = vector.broadcast %425 : vector<16x1xf32> to vector<16x256xf32>
    %427 = arith.mulf %278, %426 : vector<16x256xf32>
    %428 = arith.addf %424, %427 : vector<16x256xf32>
    %c240_i32_25 = arith.constant 240 : i32
    %429 = tpu.dynamic_rotate %428 by %c240_i32_25 dim 1 : vector<16x256xf32>, i32 -> vector<16x256xf32>
    %430 = vector.extract_strided_slice %1 {offsets = [4, 0], sizes = [1, 256], strides = [1, 1]} : vector<7x256xf32> to vector<1x256xf32>
    %431 = vector.broadcast %430 : vector<1x256xf32> to vector<16x256xf32>
    %432 = arith.mulf %429, %431 : vector<16x256xf32>
    %433 = arith.addf %401, %432 : vector<16x256xf32>
    %434 = vector.extract_strided_slice %254 {offsets = [0, 35], sizes = [16, 1], strides = [1, 1]} : vector<16x49xf32> to vector<16x1xf32>
    %435 = vector.broadcast %434 : vector<16x1xf32> to vector<16x256xf32>
    %436 = arith.mulf %258, %435 : vector<16x256xf32>
    %437 = vector.extract_strided_slice %254 {offsets = [0, 36], sizes = [16, 1], strides = [1, 1]} : vector<16x49xf32> to vector<16x1xf32>
    %438 = vector.broadcast %437 : vector<16x1xf32> to vector<16x256xf32>
    %439 = arith.mulf %262, %438 : vector<16x256xf32>
    %440 = arith.addf %436, %439 : vector<16x256xf32>
    %441 = vector.extract_strided_slice %254 {offsets = [0, 37], sizes = [16, 1], strides = [1, 1]} : vector<16x49xf32> to vector<16x1xf32>
    %442 = vector.broadcast %441 : vector<16x1xf32> to vector<16x256xf32>
    %443 = arith.mulf %266, %442 : vector<16x256xf32>
    %444 = arith.addf %440, %443 : vector<16x256xf32>
    %445 = vector.extract_strided_slice %254 {offsets = [0, 38], sizes = [16, 1], strides = [1, 1]} : vector<16x49xf32> to vector<16x1xf32>
    %446 = vector.broadcast %445 : vector<16x1xf32> to vector<16x256xf32>
    %447 = arith.mulf %253, %446 : vector<16x256xf32>
    %448 = arith.addf %444, %447 : vector<16x256xf32>
    %449 = vector.extract_strided_slice %254 {offsets = [0, 39], sizes = [16, 1], strides = [1, 1]} : vector<16x49xf32> to vector<16x1xf32>
    %450 = vector.broadcast %449 : vector<16x1xf32> to vector<16x256xf32>
    %451 = arith.mulf %270, %450 : vector<16x256xf32>
    %452 = arith.addf %448, %451 : vector<16x256xf32>
    %453 = vector.extract_strided_slice %254 {offsets = [0, 40], sizes = [16, 1], strides = [1, 1]} : vector<16x49xf32> to vector<16x1xf32>
    %454 = vector.broadcast %453 : vector<16x1xf32> to vector<16x256xf32>
    %455 = arith.mulf %274, %454 : vector<16x256xf32>
    %456 = arith.addf %452, %455 : vector<16x256xf32>
    %457 = vector.extract_strided_slice %254 {offsets = [0, 41], sizes = [16, 1], strides = [1, 1]} : vector<16x49xf32> to vector<16x1xf32>
    %458 = vector.broadcast %457 : vector<16x1xf32> to vector<16x256xf32>
    %459 = arith.mulf %278, %458 : vector<16x256xf32>
    %460 = arith.addf %456, %459 : vector<16x256xf32>
    %c224_i32_26 = arith.constant 224 : i32
    %461 = tpu.dynamic_rotate %460 by %c224_i32_26 dim 1 : vector<16x256xf32>, i32 -> vector<16x256xf32>
    %462 = vector.extract_strided_slice %1 {offsets = [5, 0], sizes = [1, 256], strides = [1, 1]} : vector<7x256xf32> to vector<1x256xf32>
    %463 = vector.broadcast %462 : vector<1x256xf32> to vector<16x256xf32>
    %464 = arith.mulf %461, %463 : vector<16x256xf32>
    %465 = arith.addf %433, %464 : vector<16x256xf32>
    %466 = vector.extract_strided_slice %254 {offsets = [0, 42], sizes = [16, 1], strides = [1, 1]} : vector<16x49xf32> to vector<16x1xf32>
    %467 = vector.broadcast %466 : vector<16x1xf32> to vector<16x256xf32>
    %468 = arith.mulf %258, %467 : vector<16x256xf32>
    %469 = vector.extract_strided_slice %254 {offsets = [0, 43], sizes = [16, 1], strides = [1, 1]} : vector<16x49xf32> to vector<16x1xf32>
    %470 = vector.broadcast %469 : vector<16x1xf32> to vector<16x256xf32>
    %471 = arith.mulf %262, %470 : vector<16x256xf32>
    %472 = arith.addf %468, %471 : vector<16x256xf32>
    %473 = vector.extract_strided_slice %254 {offsets = [0, 44], sizes = [16, 1], strides = [1, 1]} : vector<16x49xf32> to vector<16x1xf32>
    %474 = vector.broadcast %473 : vector<16x1xf32> to vector<16x256xf32>
    %475 = arith.mulf %266, %474 : vector<16x256xf32>
    %476 = arith.addf %472, %475 : vector<16x256xf32>
    %477 = vector.extract_strided_slice %254 {offsets = [0, 45], sizes = [16, 1], strides = [1, 1]} : vector<16x49xf32> to vector<16x1xf32>
    %478 = vector.broadcast %477 : vector<16x1xf32> to vector<16x256xf32>
    %479 = arith.mulf %253, %478 : vector<16x256xf32>
    %480 = arith.addf %476, %479 : vector<16x256xf32>
    %481 = vector.extract_strided_slice %254 {offsets = [0, 46], sizes = [16, 1], strides = [1, 1]} : vector<16x49xf32> to vector<16x1xf32>
    %482 = vector.broadcast %481 : vector<16x1xf32> to vector<16x256xf32>
    %483 = arith.mulf %270, %482 : vector<16x256xf32>
    %484 = arith.addf %480, %483 : vector<16x256xf32>
    %485 = vector.extract_strided_slice %254 {offsets = [0, 47], sizes = [16, 1], strides = [1, 1]} : vector<16x49xf32> to vector<16x1xf32>
    %486 = vector.broadcast %485 : vector<16x1xf32> to vector<16x256xf32>
    %487 = arith.mulf %274, %486 : vector<16x256xf32>
    %488 = arith.addf %484, %487 : vector<16x256xf32>
    %489 = vector.extract_strided_slice %254 {offsets = [0, 48], sizes = [16, 1], strides = [1, 1]} : vector<16x49xf32> to vector<16x1xf32>
    %490 = vector.broadcast %489 : vector<16x1xf32> to vector<16x256xf32>
    %491 = arith.mulf %278, %490 : vector<16x256xf32>
    %492 = arith.addf %488, %491 : vector<16x256xf32>
    %c208_i32_27 = arith.constant 208 : i32
    %493 = tpu.dynamic_rotate %492 by %c208_i32_27 dim 1 : vector<16x256xf32>, i32 -> vector<16x256xf32>
    %494 = vector.extract_strided_slice %1 {offsets = [6, 0], sizes = [1, 256], strides = [1, 1]} : vector<7x256xf32> to vector<1x256xf32>
    %495 = vector.broadcast %494 : vector<1x256xf32> to vector<16x256xf32>
    %496 = arith.mulf %493, %495 : vector<16x256xf32>
    %497 = arith.addf %465, %496 : vector<16x256xf32>
    %c16_28 = arith.constant 16 : index
    %c0_29 = arith.constant 0 : index
    %498 = vector.load %arg5[%c16_28, %c0_29] : memref<32x1xf32, #tpu.memory_space<vmem>>, vector<16x1xf32>
    %499 = vector.broadcast %498 : vector<16x1xf32> to vector<16x256xf32>
    %500 = arith.addf %497, %499 : vector<16x256xf32>
    %c16_30 = arith.constant 16 : index
    %c0_31 = arith.constant 0 : index
    %501 = vector.load %arg14[%c16_30, %c0_31] : memref<32x256xf32, #tpu.memory_space<vmem>>, vector<16x256xf32>
    tpu.vector_store %arg14[%c16_30, %c0_31], %500 {strides = array<i32>} : memref<32x256xf32, #tpu.memory_space<vmem>>, vector<16x256xf32>,
    %c0_32 = arith.constant 0 : index
    %c0_33 = arith.constant 0 : index
    %502 = vector.load %arg14[%c0_32, %c0_33] : memref<32x256xf32, #tpu.memory_space<vmem>>, vector<32x256xf32>
    %cst = arith.constant dense<0.000000e+00> : vector<256xf32>
    %503 = vector.multi_reduction <add>, %502, %cst [0] : vector<32x256xf32> to vector<256xf32>
    %504 = vector.shape_cast %503 : vector<256xf32> to vector<1x256xf32>
    %cst_34 = arith.constant 3.200000e+01 : f32
    %505 = vector.broadcast %cst_34 : f32 to vector<1x256xf32>
    %506 = arith.divf %504, %505 : vector<1x256xf32>
    %507 = vector.broadcast %506 : vector<1x256xf32> to vector<32x256xf32>
    %508 = arith.subf %502, %507 : vector<32x256xf32>
    %509 = arith.mulf %508, %508 : vector<32x256xf32>
    %cst_35 = arith.constant dense<0.000000e+00> : vector<256xf32>
    %510 = vector.multi_reduction <add>, %509, %cst_35 [0] : vector<32x256xf32> to vector<256xf32>
    %511 = vector.shape_cast %510 : vector<256xf32> to vector<1x256xf32>
    %cst_36 = arith.constant 3.200000e+01 : f32
    %512 = vector.broadcast %cst_36 : f32 to vector<1x256xf32>
    %513 = arith.divf %511, %512 : vector<1x256xf32>
    %cst_37 = arith.constant 9.99999997E-7 : f32
    %514 = vector.broadcast %cst_37 : f32 to vector<1x256xf32>
    %515 = arith.addf %513, %514 : vector<1x256xf32>
    %516 = math.rsqrt %515 : vector<1x256xf32>
    %517 = vector.broadcast %516 : vector<1x256xf32> to vector<32x256xf32>
    %518 = arith.mulf %508, %517 : vector<32x256xf32>
    %c0_38 = arith.constant 0 : index
    %c0_39 = arith.constant 0 : index
    %519 = vector.load %arg6[%c0_38, %c0_39] : memref<32x1xf32, #tpu.memory_space<vmem>>, vector<32x1xf32>
    %520 = vector.broadcast %519 : vector<32x1xf32> to vector<32x256xf32>
    %521 = arith.mulf %518, %520 : vector<32x256xf32>
    %c0_40 = arith.constant 0 : index
    %c0_41 = arith.constant 0 : index
    %522 = vector.load %arg7[%c0_40, %c0_41] : memref<32x1xf32, #tpu.memory_space<vmem>>, vector<32x1xf32>
    %523 = vector.broadcast %522 : vector<32x1xf32> to vector<32x256xf32>
    %524 = arith.addf %521, %523 : vector<32x256xf32>
    %c0_42 = arith.constant 0 : index
    %c0_43 = arith.constant 0 : index
    %525 = vector.load %arg8[%c0_42, %c0_43] : memref<128x32xbf16, #tpu.memory_space<vmem>>, vector<128x32xbf16>
    %526 = arith.truncf %524 : vector<32x256xf32> to vector<32x256xbf16>
    %cst_44 = arith.constant dense<0.000000e+00> : vector<128x256xf32>
    %527 = tpu.matmul %525, %526, %cst_44 {dimension_numbers = #tpu.dot_dimension_numbers<[1], [0], [0], [1], [0, 0, 1, 1], [], []>} : vector<128x32xbf16>, vector<32x256xbf16>, vector<128x256xf32> -> vector<128x256xf32>
    %c0_45 = arith.constant 0 : index
    %c0_46 = arith.constant 0 : index
    %528 = vector.load %arg9[%c0_45, %c0_46] : memref<128x1xf32, #tpu.memory_space<vmem>>, vector<128x1xf32>
    %529 = vector.broadcast %528 : vector<128x1xf32> to vector<128x256xf32>
    %530 = arith.addf %527, %529 : vector<128x256xf32>
    %531 = arith.mulf %530, %530 : vector<128x256xf32>
    %532 = arith.mulf %530, %531 : vector<128x256xf32>
    %cst_47 = arith.constant 4.471500e-02 : f32
    %533 = vector.broadcast %cst_47 : f32 to vector<128x256xf32>
    %534 = arith.mulf %533, %532 : vector<128x256xf32>
    %535 = arith.addf %530, %534 : vector<128x256xf32>
    %cst_48 = arith.constant 0.797884583 : f32
    %536 = vector.broadcast %cst_48 : f32 to vector<128x256xf32>
    %537 = arith.mulf %536, %535 : vector<128x256xf32>
    %538 = math.tanh %537 : vector<128x256xf32>
    %cst_49 = arith.constant 1.000000e+00 : f32
    %539 = vector.broadcast %cst_49 : f32 to vector<128x256xf32>
    %540 = arith.addf %539, %538 : vector<128x256xf32>
    %cst_50 = arith.constant 5.000000e-01 : f32
    %541 = vector.broadcast %cst_50 : f32 to vector<128x256xf32>
    %542 = arith.mulf %541, %540 : vector<128x256xf32>
    %543 = arith.mulf %530, %542 : vector<128x256xf32>
    %c0_51 = arith.constant 0 : index
    %c0_52 = arith.constant 0 : index
    %544 = vector.load %arg10[%c0_51, %c0_52] : memref<32x128xbf16, #tpu.memory_space<vmem>>, vector<32x128xbf16>
    %545 = arith.truncf %543 : vector<128x256xf32> to vector<128x256xbf16>
    %cst_53 = arith.constant dense<0.000000e+00> : vector<32x256xf32>
    %546 = tpu.matmul %544, %545, %cst_53 {dimension_numbers = #tpu.dot_dimension_numbers<[1], [0], [0], [1], [0, 0, 1, 1], [], []>} : vector<32x128xbf16>, vector<128x256xbf16>, vector<32x256xf32> -> vector<32x256xf32>
    %c0_54 = arith.constant 0 : index
    %c0_55 = arith.constant 0 : index
    %547 = vector.load %arg11[%c0_54, %c0_55] : memref<32x1xf32, #tpu.memory_space<vmem>>, vector<32x1xf32>
    %548 = vector.broadcast %547 : vector<32x1xf32> to vector<32x256xf32>
    %549 = arith.addf %546, %548 : vector<32x256xf32>
    %c0_56 = arith.constant 0 : index
    %c0_57 = arith.constant 0 : index
    %550 = vector.load %arg12[%c0_56, %c0_57] : memref<32x1xf32, #tpu.memory_space<vmem>>, vector<32x1xf32>
    %551 = vector.broadcast %550 : vector<32x1xf32> to vector<32x256xf32>
    %552 = arith.mulf %549, %551 : vector<32x256xf32>
    %c0_58 = arith.constant 0 : index
    %c0_59 = arith.constant 0 : index
    %c0_60 = arith.constant 0 : index
    %553 = vector.load %arg1[%c0_58, %c0_59, %c0_60] : memref<1x32x256xf32, #tpu.memory_space<vmem>>, vector<1x32x256xf32>
    %554 = vector.shape_cast %553 : vector<1x32x256xf32> to vector<32x256xf32>
    %555 = arith.addf %554, %552 : vector<32x256xf32>
    %c0_61 = arith.constant 0 : index
    %c0_62 = arith.constant 0 : index
    %c0_63 = arith.constant 0 : index
    %556 = vector.load %arg13[%c0_61, %c0_62, %c0_63] : memref<1x32x256xf32, #tpu.memory_space<vmem>>, vector<1x32x256xf32>
    %557 = vector.shape_cast %556 : vector<1x32x256xf32> to vector<32x256xf32>
    %558 = vector.shape_cast %555 : vector<32x256xf32> to vector<1x32x256xf32>
    tpu.vector_store %arg13[%c0_61, %c0_62, %c0_63], %558 {strides = array<i32>} : memref<1x32x256xf32, #tpu.memory_space<vmem>>, vector<1x32x256xf32>,
    return
  }
  func.func @transform_0(%arg0: i32) -> (i32, i32, i32) {
    %c0_i32 = arith.constant 0 : i32
    %c0_i32_0 = arith.constant 0 : i32
    %c0_i32_1 = arith.constant 0 : i32
    return %arg0, %c0_i32, %c0_i32_0 : i32, i32, i32
  }
  func.func @transform_1(%arg0: i32) -> (i32, i32) {
    %c0_i32 = arith.constant 0 : i32
    %c0_i32_0 = arith.constant 0 : i32
    %c0_i32_1 = arith.constant 0 : i32
    return %c0_i32, %c0_i32_0 : i32, i32
  }
  func.func @transform_2(%arg0: i32) -> (i32, i32) {
    %c0_i32 = arith.constant 0 : i32
    %c0_i32_0 = arith.constant 0 : i32
    %c0_i32_1 = arith.constant 0 : i32
    return %c0_i32, %c0_i32_0 : i32, i32
  }
  func.func @transform_3(%arg0: i32) -> (i32, i32) {
    %c0_i32 = arith.constant 0 : i32
    %c0_i32_0 = arith.constant 0 : i32
    %c0_i32_1 = arith.constant 0 : i32
    return %c0_i32, %c0_i32_0 : i32, i32
  }
  func.func @transform_4(%arg0: i32) -> (i32, i32) {
    %c0_i32 = arith.constant 0 : i32
    %c0_i32_0 = arith.constant 0 : i32
    %c0_i32_1 = arith.constant 0 : i32
    return %c0_i32, %c0_i32_0 : i32, i32
  }
  func.func @transform_5(%arg0: i32) -> (i32, i32) {
    %c0_i32 = arith.constant 0 : i32
    %c0_i32_0 = arith.constant 0 : i32
    %c0_i32_1 = arith.constant 0 : i32
    return %c0_i32, %c0_i32_0 : i32, i32
  }
  func.func @transform_6(%arg0: i32) -> (i32, i32) {
    %c0_i32 = arith.constant 0 : i32
    %c0_i32_0 = arith.constant 0 : i32
    %c0_i32_1 = arith.constant 0 : i32
    return %c0_i32, %c0_i32_0 : i32, i32
  }
  func.func @transform_7(%arg0: i32) -> (i32, i32) {
    %c0_i32 = arith.constant 0 : i32
    %c0_i32_0 = arith.constant 0 : i32
    %c0_i32_1 = arith.constant 0 : i32
    return %c0_i32, %c0_i32_0 : i32, i32
  }
  func.func @transform_8(%arg0: i32) -> (i32, i32) {
    %c0_i32 = arith.constant 0 : i32
    %c0_i32_0 = arith.constant 0 : i32
    %c0_i32_1 = arith.constant 0 : i32
    return %c0_i32, %c0_i32_0 : i32, i32
  }
  func.func @transform_9(%arg0: i32) -> (i32, i32) {
    %c0_i32 = arith.constant 0 : i32
    %c0_i32_0 = arith.constant 0 : i32
    %c0_i32_1 = arith.constant 0 : i32
    return %c0_i32, %c0_i32_0 : i32, i32
  }
  func.func @transform_10(%arg0: i32) -> (i32, i32) {
    %c0_i32 = arith.constant 0 : i32
    %c0_i32_0 = arith.constant 0 : i32
    %c0_i32_1 = arith.constant 0 : i32
    return %c0_i32, %c0_i32_0 : i32, i32
  }
  func.func @transform_11(%arg0: i32) -> (i32, i32) {
    %c0_i32 = arith.constant 0 : i32
    %c0_i32_0 = arith.constant 0 : i32
    %c0_i32_1 = arith.constant 0 : i32
    return %c0_i32, %c0_i32_0 : i32, i32
  }
  func.func @transform_12(%arg0: i32) -> (i32, i32, i32) {
    %c0_i32 = arith.constant 0 : i32
    %c0_i32_0 = arith.constant 0 : i32
    %c0_i32_1 = arith.constant 0 : i32
    return %arg0, %c0_i32, %c0_i32_0 : i32, i32, i32
  }
}

</mosaic_0001>

<llo_original>
// kernel: tpu_custom_call.1
$region0: #{tpu_custom_call.1}
  #allocation0 [shape = 'u32[]', space=smem, size = 0x4, offset = 0x4, fixed_abs, tag = 'smem constant byte address 0x4 - core index']
  #allocation1 [shape = 'u32[144,128]{1,0:T(1,128)}', space=vmem, size = 0x12000, scoped, tag = 'internal scratch']
  #allocation2 [shape = 'f32[32,256]{1,0:T(8,128)}', space=vmem, size = 0x8000, scoped, tag = 'scratch operand']
  %s0 = inlined_call_operand.vmem [shape: f32[2,32,256], index: 0, kind: input, shape index: {}]
  %s1 = inlined_call_operand.vmem [shape: f32[7,256], index: 1, kind: input, shape index: {}]
  %s2 = inlined_call_operand.vmem [shape: f32[7,256], index: 2, kind: input, shape index: {}]
  %s3 = inlined_call_operand.vmem [shape: f32[32,49], index: 3, kind: input, shape index: {}]
  %s4 = inlined_call_operand.vmem [shape: f32[32,1], index: 4, kind: input, shape index: {}]
  %s5 = inlined_call_operand.vmem [shape: f32[32,1], index: 5, kind: input, shape index: {}]
  %s6 = inlined_call_operand.vmem [shape: f32[32,1], index: 6, kind: input, shape index: {}]
  %s7 = inlined_call_operand.vmem [shape: bf16[128,32], index: 7, kind: input, shape index: {}]
  %s8 = inlined_call_operand.vmem [shape: f32[128,1], index: 8, kind: input, shape index: {}]
  %s9 = inlined_call_operand.vmem [shape: bf16[32,128], index: 9, kind: input, shape index: {}]
  %s10 = inlined_call_operand.vmem [shape: f32[32,1], index: 10, kind: input, shape index: {}]
  %s11 = inlined_call_operand.vmem [shape: f32[32,1], index: 11, kind: input, shape index: {}]
  %s12 = inlined_call_operand.hbm [shape: f32[2,32,256], index: 12, kind: output, shape index: {}]
  %s13 = sld [smem:[#allocation0]]
  $region81: #{tpu_custom_call.1} parent=0
    _
  %s15 = ssub.s32 1, %s13
  %s16 = scalar_select 0, %s15, %s13
  $region1: #{tpu_custom_call.1} parent=0
    #allocation3 [shape = 'u8[65536]{0}', space=vmem, size = 0x10000, scoped, tag = 'output window, operand 0']
    #allocation4 [shape = 's32[2]{0}', space=sflag, size = 0x8, scoped, tag = 'scoped memory for tpu_custom_call.1']
    %17 = vsyncpa [#allocation4], 0
    %s18 = scalar_lea.sflag [#allocation4], 1
    %19 = vsyncpa %s18, 0
    loop: start=0, step=1, limit=4
    $region2: #{tpu_custom_call.1} parent=1 // loop_pre_header
      _
    $region3: #{tpu_custom_call.1} parent=1 // loop_header
      %s21 = sphi 0, %s25
      %p22 = scmp.ge.s32.totalorder %s21, 4
      %s31 = sphi 0, %s33
      %s34 = sphi 0, %s31
      %s35 = sphi 0, %s34
      %s51 = sphi 0, %s35
      %s55 = sphi 0, %s55
      %s57 = sphi 0, %s55
      %s58 = sphi 0, %s57
      %s72 = sphi 0, %s58
      %s76 = sphi 0, %s76
      %s78 = sphi 0, %s76
      %s79 = sphi 0, %s78
      %s93 = sphi 0, %s79
      %s97 = sphi 0, %s97
      %s99 = sphi 0, %s97
      %s100 = sphi 0, %s99
      %s114 = sphi 0, %s100
      %s118 = sphi 0, %s118
      %s120 = sphi 0, %s118
      %s121 = sphi 0, %s120
      %s135 = sphi 0, %s121
      %s139 = sphi 0, %s139
      %s141 = sphi 0, %s139
      %s142 = sphi 0, %s141
      %s156 = sphi 0, %s142
      %s160 = sphi 0, %s160
      %s162 = sphi 0, %s160
      %s163 = sphi 0, %s162
      %s177 = sphi 0, %s163
      %s181 = sphi 0, %s181
      %s183 = sphi 0, %s181
      %s184 = sphi 0, %s183
      %s198 = sphi 0, %s184
      %s202 = sphi 0, %s202
      %s204 = sphi 0, %s202
      %s205 = sphi 0, %s204
      %s219 = sphi 0, %s205
      %s223 = sphi 0, %s223
      %s225 = sphi 0, %s223
      %s226 = sphi 0, %s225
      %s240 = sphi 0, %s226
      %s244 = sphi 0, %s244
      %s246 = sphi 0, %s244
      %s247 = sphi 0, %s246
      %s261 = sphi 0, %s247
      %s265 = sphi 0, %s265
      %s267 = sphi 0, %s265
      %s268 = sphi 0, %s267
      %s282 = sphi 0, %s268
      %s288 = sphi 0, %s290
      %s291 = sphi 0, %s288
      %s292 = sphi 0, %s291
      %s308 = sphi 0, %s292
    $region4: #{tpu_custom_call.1} parent=1 // loop_header_branch
      %24 = sbr.rel (%p22) target = $region8
    $region5: #{tpu_custom_call.1} parent=1 // loop_body
      %s26 = ssub.s32 %s21, 1
      %s27 = ssub.s32 %s21, 2
      %s28 = sadd.s32 %s21, 1
      %s29 = ssub.s32 %s21, %s28
      %p30 = scmp.eq.s32.totalorder %s29, 0
      %s32 = sadd.s32 %s31, 1
      %s33 = scalar_select %p30, %s31, %s32
      %p36 = pneg %p30
      %p37 = scmp.eq.s32.totalorder %s21, 1
      %p38 = por %p36, %p37
      %p39 = scmp.ne.s32.totalorder %s31, %s34
      %p40 = scmp.eq.s32.totalorder %s21, 0
      %p41 = por %p39, %p40
      %p42 = scmp.ne.s32.totalorder %s31, %s34
      %p43 = scmp.eq.s32.totalorder %s26, 1
      %p44 = por %p42, %p43
      %p45 = scmp.ne.s32.totalorder %s34, %s35
      %p46 = scmp.eq.s32.totalorder %s26, 0
      %p47 = por %p45, %p46
      %p48 = scmp.ne.s32.totalorder %s34, %s35
      %p49 = scmp.eq.s32.totalorder %s27, 1
      %p50 = por %p48, %p49
      %p52 = scmp.ne.s32.totalorder %s35, %s51
      %p53 = scmp.eq.s32.totalorder %s27, 0
      %p54 = por %p52, %p53
      %s56 = sadd.s32 %s55, 1
      %p59 = scmp.eq.s32.totalorder %s21, 1
      %p60 = scmp.ne.s32.totalorder %s55, %s57
      %p61 = scmp.eq.s32.totalorder %s21, 0
      %p62 = por %p60, %p61
      %p63 = scmp.ne.s32.totalorder %s55, %s57
      %p64 = scmp.eq.s32.totalorder %s26, 1
      %p65 = por %p63, %p64
      %p66 = scmp.ne.s32.totalorder %s57, %s58
      %p67 = scmp.eq.s32.totalorder %s26, 0
      %p68 = por %p66, %p67
      %p69 = scmp.ne.s32.totalorder %s57, %s58
      %p70 = scmp.eq.s32.totalorder %s27, 1
      %p71 = por %p69, %p70
      %p73 = scmp.ne.s32.totalorder %s58, %s72
      %p74 = scmp.eq.s32.totalorder %s27, 0
      %p75 = por %p73, %p74
      %s77 = sadd.s32 %s76, 1
      %p80 = scmp.eq.s32.totalorder %s21, 1
      %p81 = scmp.ne.s32.totalorder %s76, %s78
      %p82 = scmp.eq.s32.totalorder %s21, 0
      %p83 = por %p81, %p82
      %p84 = scmp.ne.s32.totalorder %s76, %s78
      %p85 = scmp.eq.s32.totalorder %s26, 1
      %p86 = por %p84, %p85
      %p87 = scmp.ne.s32.totalorder %s78, %s79
      %p88 = scmp.eq.s32.totalorder %s26, 0
      %p89 = por %p87, %p88
      %p90 = scmp.ne.s32.totalorder %s78, %s79
      %p91 = scmp.eq.s32.totalorder %s27, 1
      %p92 = por %p90, %p91
      %p94 = scmp.ne.s32.totalorder %s79, %s93
      %p95 = scmp.eq.s32.totalorder %s27, 0
      %p96 = por %p94, %p95
      %s98 = sadd.s32 %s97, 1
      %p101 = scmp.eq.s32.totalorder %s21, 1
      %p102 = scmp.ne.s32.totalorder %s97, %s99
      %p103 = scmp.eq.s32.totalorder %s21, 0
      %p104 = por %p102, %p103
      %p105 = scmp.ne.s32.totalorder %s97, %s99
      %p106 = scmp.eq.s32.totalorder %s26, 1
      %p107 = por %p105, %p106
      %p108 = scmp.ne.s32.totalorder %s99, %s100
      %p109 = scmp.eq.s32.totalorder %s26, 0
      %p110 = por %p108, %p109
      %p111 = scmp.ne.s32.totalorder %s99, %s100
      %p112 = scmp.eq.s32.totalorder %s27, 1
      %p113 = por %p111, %p112
      %p115 = scmp.ne.s32.totalorder %s100, %s114
      %p116 = scmp.eq.s32.totalorder %s27, 0
      %p117 = por %p115, %p116
      %s119 = sadd.s32 %s118, 1
      %p122 = scmp.eq.s32.totalorder %s21, 1
      %p123 = scmp.ne.s32.totalorder %s118, %s120
      %p124 = scmp.eq.s32.totalorder %s21, 0
      %p125 = por %p123, %p124
      %p126 = scmp.ne.s32.totalorder %s118, %s120
      %p127 = scmp.eq.s32.totalorder %s26, 1
      %p128 = por %p126, %p127
      %p129 = scmp.ne.s32.totalorder %s120, %s121
      %p130 = scmp.eq.s32.totalorder %s26, 0
      %p131 = por %p129, %p130
      %p132 = scmp.ne.s32.totalorder %s120, %s121
      %p133 = scmp.eq.s32.totalorder %s27, 1
      %p134 = por %p132, %p133
      %p136 = scmp.ne.s32.totalorder %s121, %s135
      %p137 = scmp.eq.s32.totalorder %s27, 0
      %p138 = por %p136, %p137
      %s140 = sadd.s32 %s139, 1
      %p143 = scmp.eq.s32.totalorder %s21, 1
      %p144 = scmp.ne.s32.totalorder %s139, %s141
      %p145 = scmp.eq.s32.totalorder %s21, 0
      %p146 = por %p144, %p145
      %p147 = scmp.ne.s32.totalorder %s139, %s141
      %p148 = scmp.eq.s32.totalorder %s26, 1
      %p149 = por %p147, %p148
      %p150 = scmp.ne.s32.totalorder %s141, %s142
      %p151 = scmp.eq.s32.totalorder %s26, 0
      %p152 = por %p150, %p151
      %p153 = scmp.ne.s32.totalorder %s141, %s142
      %p154 = scmp.eq.s32.totalorder %s27, 1
      %p155 = por %p153, %p154
      %p157 = scmp.ne.s32.totalorder %s142, %s156
      %p158 = scmp.eq.s32.totalorder %s27, 0
      %p159 = por %p157, %p158
      %s161 = sadd.s32 %s160, 1
      %p164 = scmp.eq.s32.totalorder %s21, 1
      %p165 = scmp.ne.s32.totalorder %s160, %s162
      %p166 = scmp.eq.s32.totalorder %s21, 0
      %p167 = por %p165, %p166
      %p168 = scmp.ne.s32.totalorder %s160, %s162
      %p169 = scmp.eq.s32.totalorder %s26, 1
      %p170 = por %p168, %p169
      %p171 = scmp.ne.s32.totalorder %s162, %s163
      %p172 = scmp.eq.s32.totalorder %s26, 0
      %p173 = por %p171, %p172
      %p174 = scmp.ne.s32.totalorder %s162, %s163
      %p175 = scmp.eq.s32.totalorder %s27, 1
      %p176 = por %p174, %p175
      %p178 = scmp.ne.s32.totalorder %s163, %s177
      %p179 = scmp.eq.s32.totalorder %s27, 0
      %p180 = por %p178, %p179
      %s182 = sadd.s32 %s181, 1
      %p185 = scmp.eq.s32.totalorder %s21, 1
      %p186 = scmp.ne.s32.totalorder %s181, %s183
      %p187 = scmp.eq.s32.totalorder %s21, 0
      %p188 = por %p186, %p187
      %p189 = scmp.ne.s32.totalorder %s181, %s183
      %p190 = scmp.eq.s32.totalorder %s26, 1
      %p191 = por %p189, %p190
      %p192 = scmp.ne.s32.totalorder %s183, %s184
      %p193 = scmp.eq.s32.totalorder %s26, 0
      %p194 = por %p192, %p193
      %p195 = scmp.ne.s32.totalorder %s183, %s184
      %p196 = scmp.eq.s32.totalorder %s27, 1
      %p197 = por %p195, %p196
      %p199 = scmp.ne.s32.totalorder %s184, %s198
      %p200 = scmp.eq.s32.totalorder %s27, 0
      %p201 = por %p199, %p200
      %s203 = sadd.s32 %s202, 1
      %p206 = scmp.eq.s32.totalorder %s21, 1
      %p207 = scmp.ne.s32.totalorder %s202, %s204
      %p208 = scmp.eq.s32.totalorder %s21, 0
      %p209 = por %p207, %p208
      %p210 = scmp.ne.s32.totalorder %s202, %s204
      %p211 = scmp.eq.s32.totalorder %s26, 1
      %p212 = por %p210, %p211
      %p213 = scmp.ne.s32.totalorder %s204, %s205
      %p214 = scmp.eq.s32.totalorder %s26, 0
      %p215 = por %p213, %p214
      %p216 = scmp.ne.s32.totalorder %s204, %s205
      %p217 = scmp.eq.s32.totalorder %s27, 1
      %p218 = por %p216, %p217
      %p220 = scmp.ne.s32.totalorder %s205, %s219
      %p221 = scmp.eq.s32.totalorder %s27, 0
      %p222 = por %p220, %p221
      %s224 = sadd.s32 %s223, 1
      %p227 = scmp.eq.s32.totalorder %s21, 1
      %p228 = scmp.ne.s32.totalorder %s223, %s225
      %p229 = scmp.eq.s32.totalorder %s21, 0
      %p230 = por %p228, %p229
      %p231 = scmp.ne.s32.totalorder %s223, %s225
      %p232 = scmp.eq.s32.totalorder %s26, 1
      %p233 = por %p231, %p232
      %p234 = scmp.ne.s32.totalorder %s225, %s226
      %p235 = scmp.eq.s32.totalorder %s26, 0
      %p236 = por %p234, %p235
      %p237 = scmp.ne.s32.totalorder %s225, %s226
      %p238 = scmp.eq.s32.totalorder %s27, 1
      %p239 = por %p237, %p238
      %p241 = scmp.ne.s32.totalorder %s226, %s240
      %p242 = scmp.eq.s32.totalorder %s27, 0
      %p243 = por %p241, %p242
      %s245 = sadd.s32 %s244, 1
      %p248 = scmp.eq.s32.totalorder %s21, 1
      %p249 = scmp.ne.s32.totalorder %s244, %s246
      %p250 = scmp.eq.s32.totalorder %s21, 0
      %p251 = por %p249, %p250
      %p252 = scmp.ne.s32.totalorder %s244, %s246
      %p253 = scmp.eq.s32.totalorder %s26, 1
      %p254 = por %p252, %p253
      %p255 = scmp.ne.s32.totalorder %s246, %s247
      %p256 = scmp.eq.s32.totalorder %s26, 0
      %p257 = por %p255, %p256
      %p258 = scmp.ne.s32.totalorder %s246, %s247
      %p259 = scmp.eq.s32.totalorder %s27, 1
      %p260 = por %p258, %p259
      %p262 = scmp.ne.s32.totalorder %s247, %s261
      %p263 = scmp.eq.s32.totalorder %s27, 0
      %p264 = por %p262, %p263
      %s266 = sadd.s32 %s265, 1
      %p269 = scmp.eq.s32.totalorder %s21, 1
      %p270 = scmp.ne.s32.totalorder %s265, %s267
      %p271 = scmp.eq.s32.totalorder %s21, 0
      %p272 = por %p270, %p271
      %p273 = scmp.ne.s32.totalorder %s265, %s267
      %p274 = scmp.eq.s32.totalorder %s26, 1
      %p275 = por %p273, %p274
      %p276 = scmp.ne.s32.totalorder %s267, %s268
      %p277 = scmp.eq.s32.totalorder %s26, 0
      %p278 = por %p276, %p277
      %p279 = scmp.ne.s32.totalorder %s267, %s268
      %p280 = scmp.eq.s32.totalorder %s27, 1
      %p281 = por %p279, %p280
      %p283 = scmp.ne.s32.totalorder %s268, %s282
      %p284 = scmp.eq.s32.totalorder %s27, 0
      %p285 = por %p283, %p284
      %s286 = ssub.s32 %s21, %s28
      %p287 = scmp.eq.s32.totalorder %s286, 0
      %s289 = sadd.s32 %s288, 1
      %s290 = scalar_select %p287, %s288, %s289
      %p293 = pneg %p287
      %p294 = scmp.eq.s32.totalorder %s21, 1
      %p295 = por %p293, %p294
      %p296 = scmp.ne.s32.totalorder %s288, %s291
      %p297 = scmp.eq.s32.totalorder %s21, 0
      %p298 = por %p296, %p297
      %p299 = scmp.ne.s32.totalorder %s288, %s291
      %p300 = scmp.eq.s32.totalorder %s26, 1
      %p301 = por %p299, %p300
      %p302 = scmp.ne.s32.totalorder %s291, %s292
      %p303 = scmp.eq.s32.totalorder %s26, 0
      %p304 = por %p302, %p303
      %p305 = scmp.ne.s32.totalorder %s291, %s292
      %p306 = scmp.eq.s32.totalorder %s27, 1
      %p307 = por %p305, %p306
      %p309 = scmp.ne.s32.totalorder %s292, %s308
      %p310 = scmp.eq.s32.totalorder %s27, 0
      %p311 = por %p309, %p310
      %p312 = scmp.le.s32.totalorder 1, %s21
      %p313 = scmp.lt.s32.totalorder %s21, 3
      %p314 = pnand %p312, %p313
      %p315 = pneg %p314
      // Predicated region
      $region9: #{tpu_custom_call.1} parent=5 // pred_check
        _
      $region10: #{tpu_custom_call.1} parent=5 // pred_check_branch
        %317 = sbr.rel (%p314) target = $region12
      $region11: #{tpu_custom_call.1} parent=5 // pred_region
        %s318 = ssub.s32 %s21, 1
        // Predicated region
        $region13: #{tpu_custom_call.1} parent=11 // pred_check
          %p319 = pneg %p68
        $region14: #{tpu_custom_call.1} parent=11 // pred_check_branch
          %321 = sbr.rel (%p319) target = $region16
        $region15: #{tpu_custom_call.1} parent=11 // pred_region
          _
        $region16: #{tpu_custom_call.1} parent=11 // pred_fallthru
          _
        // Predicated region
        $region17: #{tpu_custom_call.1} parent=11 // pred_check
          %p322 = pneg %p89
        $region18: #{tpu_custom_call.1} parent=11 // pred_check_branch
          %324 = sbr.rel (%p322) target = $region20
        $region19: #{tpu_custom_call.1} parent=11 // pred_region
          _
        $region20: #{tpu_custom_call.1} parent=11 // pred_fallthru
          _
        // Predicated region
        $region21: #{tpu_custom_call.1} parent=11 // pred_check
          %p325 = pneg %p110
        $region22: #{tpu_custom_call.1} parent=11 // pred_check_branch
          %327 = sbr.rel (%p325) target = $region24
        $region23: #{tpu_custom_call.1} parent=11 // pred_region
          _
        $region24: #{tpu_custom_call.1} parent=11 // pred_fallthru
          _
        // Predicated region
        $region25: #{tpu_custom_call.1} parent=11 // pred_check
          %p328 = pneg %p131
        $region26: #{tpu_custom_call.1} parent=11 // pred_check_branch
          %330 = sbr.rel (%p328) target = $region28
        $region27: #{tpu_custom_call.1} parent=11 // pred_region
          _
        $region28: #{tpu_custom_call.1} parent=11 // pred_fallthru
          _
        // Predicated region
        $region29: #{tpu_custom_call.1} parent=11 // pred_check
          %p331 = pneg %p152
        $region30: #{tpu_custom_call.1} parent=11 // pred_check_branch
          %333 = sbr.rel (%p331) target = $region32
        $region31: #{tpu_custom_call.1} parent=11 // pred_region
          _
        $region32: #{tpu_custom_call.1} parent=11 // pred_fallthru
          _
        // Predicated region
        $region33: #{tpu_custom_call.1} parent=11 // pred_check
          %p334 = pneg %p173
        $region34: #{tpu_custom_call.1} parent=11 // pred_check_branch
          %336 = sbr.rel (%p334) target = $region36
        $region35: #{tpu_custom_call.1} parent=11 // pred_region
          _
        $region36: #{tpu_custom_call.1} parent=11 // pred_fallthru
          _
        // Predicated region
        $region37: #{tpu_custom_call.1} parent=11 // pred_check
          %p337 = pneg %p194
        $region38: #{tpu_custom_call.1} parent=11 // pred_check_branch
          %339 = sbr.rel (%p337) target = $region40
        $region39: #{tpu_custom_call.1} parent=11 // pred_region
          _
        $region40: #{tpu_custom_call.1} parent=11 // pred_fallthru
          _
        // Predicated region
        $region41: #{tpu_custom_call.1} parent=11 // pred_check
          %p340 = pneg %p215
        $region42: #{tpu_custom_call.1} parent=11 // pred_check_branch
          %342 = sbr.rel (%p340) target = $region44
        $region43: #{tpu_custom_call.1} parent=11 // pred_region
          _
        $region44: #{tpu_custom_call.1} parent=11 // pred_fallthru
          _
        // Predicated region
        $region45: #{tpu_custom_call.1} parent=11 // pred_check
          %p343 = pneg %p236
        $region46: #{tpu_custom_call.1} parent=11 // pred_check_branch
          %345 = sbr.rel (%p343) target = $region48
        $region47: #{tpu_custom_call.1} parent=11 // pred_region
          _
        $region48: #{tpu_custom_call.1} parent=11 // pred_fallthru
          _
        // Predicated region
        $region49: #{tpu_custom_call.1} parent=11 // pred_check
          %p346 = pneg %p257
        $region50: #{tpu_custom_call.1} parent=11 // pred_check_branch
          %348 = sbr.rel (%p346) target = $region52
        $region51: #{tpu_custom_call.1} parent=11 // pred_region
          _
        $region52: #{tpu_custom_call.1} parent=11 // pred_fallthru
          _
        // Predicated region
        $region53: #{tpu_custom_call.1} parent=11 // pred_check
          %p349 = pneg %p278
        $region54: #{tpu_custom_call.1} parent=11 // pred_check_branch
          %351 = sbr.rel (%p349) target = $region56
        $region55: #{tpu_custom_call.1} parent=11 // pred_region
          _
        $region56: #{tpu_custom_call.1} parent=11 // pred_fallthru
          _
      $region12: #{tpu_custom_call.1} parent=5 // pred_fallthru
        _
      %p352 = scmp.lt.s32.totalorder %s21, 2
      // Predicated region
      $region57: #{tpu_custom_call.1} parent=5 // pred_check
        %p353 = pneg %p352
      $region58: #{tpu_custom_call.1} parent=5 // pred_check_branch
        %355 = sbr.rel (%p353) target = $region60
      $region59: #{tpu_custom_call.1} parent=5 // pred_region
        // Predicated region
        $region61: #{tpu_custom_call.1} parent=59 // pred_check
          %p356 = pneg %p41
        $region62: #{tpu_custom_call.1} parent=59 // pred_check_branch
          %358 = sbr.rel (%p356) target = $region64
        $region63: #{tpu_custom_call.1} parent=59 // pred_region
          %p359 = scmp.lt.s32.totalorder %s21, 1
          %s360 = scalar_select %p359, %s21, 1
          %s361 = smul.addr %s360, 8
          %s362 = smul.addr %s361, 8
          %s363 = scalar_lea.vmem %s0, %s362
        $region64: #{tpu_custom_call.1} parent=59 // pred_fallthru
          _
      $region60: #{tpu_custom_call.1} parent=5 // pred_fallthru
        _
      %p364 = scmp.le.s32.totalorder 1, %s21
      %p365 = scmp.lt.s32.totalorder %s21, 3
      %p366 = pnand %p364, %p365
      %p367 = pneg %p366
      // Predicated region
      $region65: #{tpu_custom_call.1} parent=5 // pred_check
        _
      $region66: #{tpu_custom_call.1} parent=5 // pred_check_branch
        %369 = sbr.rel (%p366) target = $region68
      $region67: #{tpu_custom_call.1} parent=5 // pred_region
        %s370 = ssub.s32 %s21, 1
        %p371 = scmp.lt.s32.totalorder %s26, 1
        %s372 = scalar_select %p371, %s26, 1
        %s373 = smul.addr %s372, 8
        %s374 = smul.addr %s373, 8
        %s375 = scalar_lea.vmem %s0, %s374
        %p376 = pneg %p47
        %p377 = pneg %p44
        %p378 = pneg %p68
        %p379 = pneg %p65
        %p380 = pneg %p89
        %p381 = pneg %p86
        %p382 = pneg %p110
        %p383 = pneg %p107
        %p384 = pneg %p131
        %p385 = pneg %p128
        %p386 = pneg %p152
        %p387 = pneg %p149
        %p388 = pneg %p173
        %p389 = pneg %p170
        %p390 = pneg %p194
        %p391 = pneg %p191
        %p392 = pneg %p215
        %p393 = pneg %p212
        %p394 = pneg %p236
        %p395 = pneg %p233
        %p396 = pneg %p257
        %p397 = pneg %p254
        %p398 = pneg %p278
        %p399 = pneg %p275
        %p400 = pneg %p304
        %p401 = pneg %p301
        %s402 = sand.u32 %s291, 1
        %s403 = scalar_lea.sflag [#allocation4], %s402
        %s404 = sand.u32 %s291, 1
        %s405 = smul.addr %s404, 64
        %s406 = scalar_lea.vmem [#allocation3], %s405
        %p407 = scmp.lt.s32.totalorder %s26, 1
        %s408 = scalar_select %p407, %s26, 1
        %s409 = smul.addr %s408, 8
        %s410 = smul.addr %s409, 8
        %s411 = scalar_lea.vmem %s0, %s410
        %v413 = vld [vmem:[%s1] sm:$0x7f]
        %v414 = vld [vmem:[%s1 + $0x8] sm:$0x7f]
        %v415 = vld [vmem:[%s2] sm:$0x7f]
        %v416 = vld [vmem:[%s2 + $0x8] sm:$0x7f]
        %v417 = vld [vmem:[%s411] sm:$0xff]
        %v418 = vld [vmem:[%s411 + $0x8] sm:$0xff]
        %v419 = vld [vmem:[%s411 + $0x10] sm:$0xff]
        %v420 = vld [vmem:[%s411 + $0x18] sm:$0xff]
        %v421 = vld [vmem:[%s3] sm:$0xff]
        %v422 = vld [vmem:[%s3 + $0x8] sm:$0xff]
        %423 = vrot.lane.b32.xlu0 %v417, 3
        %v424 = vpop.permute.xlu0 %423
        %425 = vrot.lane.b32.xlu0 %v419, 3
        %v426 = vpop.permute.xlu0 %425
        %427 = vrot.lane.b32.xlu0 %v418, 3
        %v428 = vpop.permute.xlu0 %427
        %429 = vrot.lane.b32.xlu0 %v420, 3
        %v430 = vpop.permute.xlu0 %429
        %v431 = vlaneseq
        %v432 = vand.u32 %v431, 127
        %vm433 = vcmp.lt.s32.totalorder %v432, 3
        %v434 = vsel %vm433, %v424, %v428
        %v435 = vsel %vm433, %v426, %v430
        %v436 = vsel %vm433, %v428, %v424
        %v437 = vsel %vm433, %v430, %v426
        %v438 = vlaneseq
        %v439 = vshrl.u32 %v438, 7
        %v440 = vsub.s32 0, %v439
        %v441 = vrot.slane %v413, %v440
        %v442 = vlaneseq
        %v443 = vshrl.u32 %v442, 7
        %v444 = vsub.s32 0, %v443
        %v445 = vrot.slane %v414, %v444
        %v446 = vmul.f32 %v436, %v441
        %v447 = vmul.f32 %v434, %v445
        %v448 = vmul.f32 %v437, %v441
        %v449 = vmul.f32 %v435, %v445
        %450 = vrot.lane.b32.xlu0 %v417, 2
        %v451 = vpop.permute.xlu0 %450
        %452 = vrot.lane.b32.xlu0 %v419, 2
        %v453 = vpop.permute.xlu0 %452
        %454 = vrot.lane.b32.xlu0 %v418, 2
        %v455 = vpop.permute.xlu0 %454
        %456 = vrot.lane.b32.xlu0 %v420, 2
        %v457 = vpop.permute.xlu0 %456
        %vm458 = vcmp.lt.s32.totalorder %v432, 2
        %v459 = vsel %vm458, %v451, %v455
        %v460 = vsel %vm458, %v453, %v457
        %v461 = vsel %vm458, %v455, %v451
        %v462 = vsel %vm458, %v457, %v453
        %v463 = vlaneseq
        %v464 = vshrl.u32 %v463, 7
        %v465 = vsub.s32 1, %v464
        %v466 = vrot.slane %v413, %v465
        %v467 = vlaneseq
        %v468 = vshrl.u32 %v467, 7
        %v469 = vsub.s32 1, %v468
        %v470 = vrot.slane %v414, %v469
        %v471 = vmul.f32 %v461, %v466
        %v472 = vmul.f32 %v459, %v470
        %v473 = vmul.f32 %v462, %v466
        %v474 = vmul.f32 %v460, %v470
        %475 = vrot.lane.b32.xlu0 %v417, 1
        %v476 = vpop.permute.xlu0 %475
        %477 = vrot.lane.b32.xlu0 %v419, 1
        %v478 = vpop.permute.xlu0 %477
        %479 = vrot.lane.b32.xlu0 %v418, 1
        %v480 = vpop.permute.xlu0 %479
        %481 = vrot.lane.b32.xlu0 %v420, 1
        %v482 = vpop.permute.xlu0 %481
        %vm483 = vcmp.lt.s32.totalorder %v432, 1
        %v484 = vsel %vm483, %v476, %v480
        %v485 = vsel %vm483, %v478, %v482
        %v486 = vsel %vm483, %v480, %v476
        %v487 = vsel %vm483, %v482, %v478
        %v488 = vlaneseq
        %v489 = vshrl.u32 %v488, 7
        %v490 = vsub.s32 2, %v489
        %v491 = vrot.slane %v413, %v490
        %v492 = vlaneseq
        %v493 = vshrl.u32 %v492, 7
        %v494 = vsub.s32 2, %v493
        %v495 = vrot.slane %v414, %v494
        %v496 = vmul.f32 %v486, %v491
        %v497 = vmul.f32 %v484, %v495
        %v498 = vmul.f32 %v487, %v491
        %v499 = vmul.f32 %v485, %v495
        %500 = vrot.lane.b32.xlu0 %v417, 127
        %v501 = vpop.permute.xlu0 %500
        %502 = vrot.lane.b32.xlu0 %v419, 127
        %v503 = vpop.permute.xlu0 %502
        %504 = vrot.lane.b32.xlu0 %v418, 127
        %v505 = vpop.permute.xlu0 %504
        %506 = vrot.lane.b32.xlu0 %v420, 127
        %v507 = vpop.permute.xlu0 %506
        %vm508 = vcmp.lt.s32.totalorder %v432, 127
        %v509 = vsel %vm508, %v501, %v505
        %v510 = vsel %vm508, %v503, %v507
        %v511 = vsel %vm508, %v505, %v501
        %v512 = vsel %vm508, %v507, %v503
        %v513 = vlaneseq
        %v514 = vshrl.u32 %v513, 7
        %v515 = vsub.s32 4, %v514
        %v516 = vrot.slane %v413, %v515
        %v517 = vlaneseq
        %v518 = vshrl.u32 %v517, 7
        %v519 = vsub.s32 4, %v518
        %v520 = vrot.slane %v414, %v519
        %v521 = vmul.f32 %v509, %v516
        %v522 = vmul.f32 %v511, %v520
        %v523 = vmul.f32 %v510, %v516
        %v524 = vmul.f32 %v512, %v520
        %525 = vrot.lane.b32.xlu0 %v417, 126
        %v526 = vpop.permute.xlu0 %525
        %527 = vrot.lane.b32.xlu0 %v419, 126
        %v528 = vpop.permute.xlu0 %527
        %529 = vrot.lane.b32.xlu0 %v418, 126
        %v530 = vpop.permute.xlu0 %529
        %531 = vrot.lane.b32.xlu0 %v420, 126
        %v532 = vpop.permute.xlu0 %531
        %vm533 = vcmp.lt.s32.totalorder %v432, 126
        %v534 = vsel %vm533, %v526, %v530
        %v535 = vsel %vm533, %v528, %v532
        %v536 = vsel %vm533, %v530, %v526
        %v537 = vsel %vm533, %v532, %v528
        %v538 = vlaneseq
        %v539 = vshrl.u32 %v538, 7
        %v540 = vsub.s32 5, %v539
        %v541 = vrot.slane %v413, %v540
        %v542 = vlaneseq
        %v543 = vshrl.u32 %v542, 7
        %v544 = vsub.s32 5, %v543
        %v545 = vrot.slane %v414, %v544
        %v546 = vmul.f32 %v534, %v541
        %v547 = vmul.f32 %v536, %v545
        %v548 = vmul.f32 %v535, %v541
        %v549 = vmul.f32 %v537, %v545
        %550 = vrot.lane.b32.xlu0 %v417, 125
        %v551 = vpop.permute.xlu0 %550
        %552 = vrot.lane.b32.xlu0 %v419, 125
        %v553 = vpop.permute.xlu0 %552
        %554 = vrot.lane.b32.xlu0 %v418, 125
        %v555 = vpop.permute.xlu0 %554
        %556 = vrot.lane.b32.xlu0 %v420, 125
        %v557 = vpop.permute.xlu0 %556
        %vm558 = vcmp.lt.s32.totalorder %v432, 125
        %v559 = vsel %vm558, %v551, %v555
        %v560 = vsel %vm558, %v553, %v557
        %v561 = vsel %vm558, %v555, %v551
        %v562 = vsel %vm558, %v557, %v553
        %v563 = vlaneseq
        %v564 = vshrl.u32 %v563, 7
        %v565 = vsub.s32 6, %v564
        %v566 = vrot.slane %v413, %v565
        %v567 = vlaneseq
        %v568 = vshrl.u32 %v567, 7
        %v569 = vsub.s32 6, %v568
        %v570 = vrot.slane %v414, %v569
        %v571 = vmul.f32 %v559, %v566
        %v572 = vmul.f32 %v561, %v570
        %v573 = vmul.f32 %v560, %v566
        %v574 = vmul.f32 %v562, %v570
        %576 = vset.pattern.permute.xlu0 0
        %577 = vperm.xlu0 %576, %v421
        %v578 = vpop.permute.xlu0 %577
        %581 = vset.pattern.permute.xlu0 0
        %582 = vperm.xlu0 %581, %v422
        %v583 = vpop.permute.xlu0 %582
        %v585 = vmul.f32 %v446, %v578
        %v586 = vmul.f32 %v447, %v578
        %v587 = vmul.f32 %v448, %v583
        %v588 = vmul.f32 %v449, %v583
        %589 = vset.pattern.permute.xlu0 1
        %590 = vperm.xlu0 %589, %v421
        %v591 = vpop.permute.xlu0 %590
        %593 = vset.pattern.permute.xlu0 1
        %594 = vperm.xlu0 %593, %v422
        %v595 = vpop.permute.xlu0 %594
        %v597 = vmul.f32 %v471, %v591
        %v598 = vmul.f32 %v472, %v591
        %v599 = vmul.f32 %v473, %v595
        %v600 = vmul.f32 %v474, %v595
        %v601 = vadd.f32 %v585, %v597
        %v602 = vadd.f32 %v586, %v598
        %v603 = vadd.f32 %v587, %v599
        %v604 = vadd.f32 %v588, %v600
        %605 = vset.pattern.permute.xlu0 2
        %606 = vperm.xlu0 %605, %v421
        %v607 = vpop.permute.xlu0 %606
        %609 = vset.pattern.permute.xlu0 2
        %610 = vperm.xlu0 %609, %v422
        %v611 = vpop.permute.xlu0 %610
        %v613 = vmul.f32 %v496, %v607
        %v614 = vmul.f32 %v497, %v607
        %v615 = vmul.f32 %v498, %v611
        %v616 = vmul.f32 %v499, %v611
        %v617 = vadd.f32 %v601, %v613
        %v618 = vadd.f32 %v602, %v614
        %v619 = vadd.f32 %v603, %v615
        %v620 = vadd.f32 %v604, %v616
        %621 = vset.pattern.permute.xlu0 3
        %622 = vperm.xlu0 %621, %v421
        %v623 = vpop.permute.xlu0 %622
        %625 = vset.pattern.permute.xlu0 3
        %626 = vperm.xlu0 %625, %v422
        %v627 = vpop.permute.xlu0 %626
        %v629 = vmul.f32 %v417, %v623
        %v630 = vmul.f32 %v418, %v623
        %v631 = vmul.f32 %v419, %v627
        %v632 = vmul.f32 %v420, %v627
        %v633 = vadd.f32 %v617, %v629
        %v634 = vadd.f32 %v618, %v630
        %v635 = vadd.f32 %v619, %v631
        %v636 = vadd.f32 %v620, %v632
        %637 = vset.pattern.permute.xlu0 4
        %638 = vperm.xlu0 %637, %v421
        %v639 = vpop.permute.xlu0 %638
        %641 = vset.pattern.permute.xlu0 4
        %642 = vperm.xlu0 %641, %v422
        %v643 = vpop.permute.xlu0 %642
        %v645 = vmul.f32 %v521, %v639
        %v646 = vmul.f32 %v522, %v639
        %v647 = vmul.f32 %v523, %v643
        %v648 = vmul.f32 %v524, %v643
        %v649 = vadd.f32 %v633, %v645
        %v650 = vadd.f32 %v634, %v646
        %v651 = vadd.f32 %v635, %v647
        %v652 = vadd.f32 %v636, %v648
        %653 = vset.pattern.permute.xlu0 5
        %654 = vperm.xlu0 %653, %v421
        %v655 = vpop.permute.xlu0 %654
        %657 = vset.pattern.permute.xlu0 5
        %658 = vperm.xlu0 %657, %v422
        %v659 = vpop.permute.xlu0 %658
        %v661 = vmul.f32 %v546, %v655
        %v662 = vmul.f32 %v547, %v655
        %v663 = vmul.f32 %v548, %v659
        %v664 = vmul.f32 %v549, %v659
        %v665 = vadd.f32 %v649, %v661
        %v666 = vadd.f32 %v650, %v662
        %v667 = vadd.f32 %v651, %v663
        %v668 = vadd.f32 %v652, %v664
        %669 = vset.pattern.permute.xlu0 6
        %670 = vperm.xlu0 %669, %v421
        %v671 = vpop.permute.xlu0 %670
        %673 = vset.pattern.permute.xlu0 6
        %674 = vperm.xlu0 %673, %v422
        %v675 = vpop.permute.xlu0 %674
        %v677 = vmul.f32 %v571, %v671
        %v678 = vmul.f32 %v572, %v671
        %v679 = vmul.f32 %v573, %v675
        %v680 = vmul.f32 %v574, %v675
        %v681 = vadd.f32 %v665, %v677
        %v682 = vadd.f32 %v666, %v678
        %v683 = vadd.f32 %v667, %v679
        %v684 = vadd.f32 %v668, %v680
        %685 = vrot.lane.b32.xlu0 %v681, 48
        %v686 = vpop.permute.xlu0 %685
        %687 = vrot.lane.b32.xlu0 %v683, 48
        %v688 = vpop.permute.xlu0 %687
        %689 = vrot.lane.b32.xlu0 %v682, 48
        %v690 = vpop.permute.xlu0 %689
        %691 = vrot.lane.b32.xlu0 %v684, 48
        %v692 = vpop.permute.xlu0 %691
        %vm693 = vcmp.lt.s32.totalorder %v432, 48
        %v694 = vsel %vm693, %v686, %v690
        %v695 = vsel %vm693, %v688, %v692
        %v696 = vsel %vm693, %v690, %v686
        %v697 = vsel %vm693, %v692, %v688
        %v698 = vlaneseq
        %v699 = vshrl.u32 %v698, 7
        %v700 = vsub.s32 0, %v699
        %v701 = vrot.slane %v415, %v700
        %v702 = vlaneseq
        %v703 = vshrl.u32 %v702, 7
        %v704 = vsub.s32 0, %v703
        %v705 = vrot.slane %v416, %v704
        %v706 = vmul.f32 %v696, %v701
        %v707 = vmul.f32 %v694, %v705
        %v708 = vmul.f32 %v697, %v701
        %v709 = vmul.f32 %v695, %v705
        %710 = vset.pattern.permute.xlu0 7
        %711 = vperm.xlu0 %710, %v421
        %v712 = vpop.permute.xlu0 %711
        %714 = vset.pattern.permute.xlu0 7
        %715 = vperm.xlu0 %714, %v422
        %v716 = vpop.permute.xlu0 %715
        %v718 = vmul.f32 %v446, %v712
        %v719 = vmul.f32 %v447, %v712
        %v720 = vmul.f32 %v448, %v716
        %v721 = vmul.f32 %v449, %v716
        %722 = vset.pattern.permute.xlu0 8
        %723 = vperm.xlu0 %722, %v421
        %v724 = vpop.permute.xlu0 %723
        %726 = vset.pattern.permute.xlu0 8
        %727 = vperm.xlu0 %726, %v422
        %v728 = vpop.permute.xlu0 %727
        %v730 = vmul.f32 %v471, %v724
        %v731 = vmul.f32 %v472, %v724
        %v732 = vmul.f32 %v473, %v728
        %v733 = vmul.f32 %v474, %v728
        %v734 = vadd.f32 %v718, %v730
        %v735 = vadd.f32 %v719, %v731
        %v736 = vadd.f32 %v720, %v732
        %v737 = vadd.f32 %v721, %v733
        %738 = vset.pattern.permute.xlu0 9
        %739 = vperm.xlu0 %738, %v421
        %v740 = vpop.permute.xlu0 %739
        %742 = vset.pattern.permute.xlu0 9
        %743 = vperm.xlu0 %742, %v422
        %v744 = vpop.permute.xlu0 %743
        %v746 = vmul.f32 %v496, %v740
        %v747 = vmul.f32 %v497, %v740
        %v748 = vmul.f32 %v498, %v744
        %v749 = vmul.f32 %v499, %v744
        %v750 = vadd.f32 %v734, %v746
        %v751 = vadd.f32 %v735, %v747
        %v752 = vadd.f32 %v736, %v748
        %v753 = vadd.f32 %v737, %v749
        %754 = vset.pattern.permute.xlu0 10
        %755 = vperm.xlu0 %754, %v421
        %v756 = vpop.permute.xlu0 %755
        %758 = vset.pattern.permute.xlu0 10
        %759 = vperm.xlu0 %758, %v422
        %v760 = vpop.permute.xlu0 %759
        %v762 = vmul.f32 %v417, %v756
        %v763 = vmul.f32 %v418, %v756
        %v764 = vmul.f32 %v419, %v760
        %v765 = vmul.f32 %v420, %v760
        %v766 = vadd.f32 %v750, %v762
        %v767 = vadd.f32 %v751, %v763
        %v768 = vadd.f32 %v752, %v764
        %v769 = vadd.f32 %v753, %v765
        %770 = vset.pattern.permute.xlu0 11
        %771 = vperm.xlu0 %770, %v421
        %v772 = vpop.permute.xlu0 %771
        %774 = vset.pattern.permute.xlu0 11
        %775 = vperm.xlu0 %774, %v422
        %v776 = vpop.permute.xlu0 %775
        %v778 = vmul.f32 %v521, %v772
        %v779 = vmul.f32 %v522, %v772
        %v780 = vmul.f32 %v523, %v776
        %v781 = vmul.f32 %v524, %v776
        %v782 = vadd.f32 %v766, %v778
        %v783 = vadd.f32 %v767, %v779
        %v784 = vadd.f32 %v768, %v780
        %v785 = vadd.f32 %v769, %v781
        %786 = vset.pattern.permute.xlu0 12
        %787 = vperm.xlu0 %786, %v421
        %v788 = vpop.permute.xlu0 %787
        %790 = vset.pattern.permute.xlu0 12
        %791 = vperm.xlu0 %790, %v422
        %v792 = vpop.permute.xlu0 %791
        %v794 = vmul.f32 %v546, %v788
        %v795 = vmul.f32 %v547, %v788
        %v796 = vmul.f32 %v548, %v792
        %v797 = vmul.f32 %v549, %v792
        %v798 = vadd.f32 %v782, %v794
        %v799 = vadd.f32 %v783, %v795
        %v800 = vadd.f32 %v784, %v796
        %v801 = vadd.f32 %v785, %v797
        %802 = vset.pattern.permute.xlu0 13
        %803 = vperm.xlu0 %802, %v421
        %v804 = vpop.permute.xlu0 %803
        %806 = vset.pattern.permute.xlu0 13
        %807 = vperm.xlu0 %806, %v422
        %v808 = vpop.permute.xlu0 %807
        %v810 = vmul.f32 %v571, %v804
        %v811 = vmul.f32 %v572, %v804
        %v812 = vmul.f32 %v573, %v808
        %v813 = vmul.f32 %v574, %v808
        %v814 = vadd.f32 %v798, %v810
        %v815 = vadd.f32 %v799, %v811
        %v816 = vadd.f32 %v800, %v812
        %v817 = vadd.f32 %v801, %v813
        %818 = vrot.lane.b32.xlu0 %v814, 32
        %v819 = vpop.permute.xlu0 %818
        %820 = vrot.lane.b32.xlu0 %v816, 32
        %v821 = vpop.permute.xlu0 %820
        %822 = vrot.lane.b32.xlu0 %v815, 32
        %v823 = vpop.permute.xlu0 %822
        %824 = vrot.lane.b32.xlu0 %v817, 32
        %v825 = vpop.permute.xlu0 %824
        %vm826 = vcmp.lt.s32.totalorder %v432, 32
        %v827 = vsel %vm826, %v819, %v823
        %v828 = vsel %vm826, %v821, %v825
        %v829 = vsel %vm826, %v823, %v819
        %v830 = vsel %vm826, %v825, %v821
        %v831 = vlaneseq
        %v832 = vshrl.u32 %v831, 7
        %v833 = vsub.s32 1, %v832
        %v834 = vrot.slane %v415, %v833
        %v835 = vlaneseq
        %v836 = vshrl.u32 %v835, 7
        %v837 = vsub.s32 1, %v836
        %v838 = vrot.slane %v416, %v837
        %v839 = vmul.f32 %v829, %v834
        %v840 = vmul.f32 %v827, %v838
        %v841 = vmul.f32 %v830, %v834
        %v842 = vmul.f32 %v828, %v838
        %v843 = vadd.f32 %v706, %v839
        %v844 = vadd.f32 %v707, %v840
        %v845 = vadd.f32 %v708, %v841
        %v846 = vadd.f32 %v709, %v842
        %847 = vset.pattern.permute.xlu0 14
        %848 = vperm.xlu0 %847, %v421
        %v849 = vpop.permute.xlu0 %848
        %851 = vset.pattern.permute.xlu0 14
        %852 = vperm.xlu0 %851, %v422
        %v853 = vpop.permute.xlu0 %852
        %v855 = vmul.f32 %v446, %v849
        %v856 = vmul.f32 %v447, %v849
        %v857 = vmul.f32 %v448, %v853
        %v858 = vmul.f32 %v449, %v853
        %859 = vset.pattern.permute.xlu0 15
        %860 = vperm.xlu0 %859, %v421
        %v861 = vpop.permute.xlu0 %860
        %863 = vset.pattern.permute.xlu0 15
        %864 = vperm.xlu0 %863, %v422
        %v865 = vpop.permute.xlu0 %864
        %v867 = vmul.f32 %v471, %v861
        %v868 = vmul.f32 %v472, %v861
        %v869 = vmul.f32 %v473, %v865
        %v870 = vmul.f32 %v474, %v865
        %v871 = vadd.f32 %v855, %v867
        %v872 = vadd.f32 %v856, %v868
        %v873 = vadd.f32 %v857, %v869
        %v874 = vadd.f32 %v858, %v870
        %875 = vset.pattern.permute.xlu0 16
        %876 = vperm.xlu0 %875, %v421
        %v877 = vpop.permute.xlu0 %876
        %879 = vset.pattern.permute.xlu0 16
        %880 = vperm.xlu0 %879, %v422
        %v881 = vpop.permute.xlu0 %880
        %v883 = vmul.f32 %v496, %v877
        %v884 = vmul.f32 %v497, %v877
        %v885 = vmul.f32 %v498, %v881
        %v886 = vmul.f32 %v499, %v881
        %v887 = vadd.f32 %v871, %v883
        %v888 = vadd.f32 %v872, %v884
        %v889 = vadd.f32 %v873, %v885
        %v890 = vadd.f32 %v874, %v886
        %891 = vset.pattern.permute.xlu0 17
        %892 = vperm.xlu0 %891, %v421
        %v893 = vpop.permute.xlu0 %892
        %895 = vset.pattern.permute.xlu0 17
        %896 = vperm.xlu0 %895, %v422
        %v897 = vpop.permute.xlu0 %896
        %v899 = vmul.f32 %v417, %v893
        %v900 = vmul.f32 %v418, %v893
        %v901 = vmul.f32 %v419, %v897
        %v902 = vmul.f32 %v420, %v897
        %v903 = vadd.f32 %v887, %v899
        %v904 = vadd.f32 %v888, %v900
        %v905 = vadd.f32 %v889, %v901
        %v906 = vadd.f32 %v890, %v902
        %907 = vset.pattern.permute.xlu0 18
        %908 = vperm.xlu0 %907, %v421
        %v909 = vpop.permute.xlu0 %908
        %911 = vset.pattern.permute.xlu0 18
        %912 = vperm.xlu0 %911, %v422
        %v913 = vpop.permute.xlu0 %912
        %v915 = vmul.f32 %v521, %v909
        %v916 = vmul.f32 %v522, %v909
        %v917 = vmul.f32 %v523, %v913
        %v918 = vmul.f32 %v524, %v913
        %v919 = vadd.f32 %v903, %v915
        %v920 = vadd.f32 %v904, %v916
        %v921 = vadd.f32 %v905, %v917
        %v922 = vadd.f32 %v906, %v918
        %923 = vset.pattern.permute.xlu0 19
        %924 = vperm.xlu0 %923, %v421
        %v925 = vpop.permute.xlu0 %924
        %927 = vset.pattern.permute.xlu0 19
        %928 = vperm.xlu0 %927, %v422
        %v929 = vpop.permute.xlu0 %928
        %v931 = vmul.f32 %v546, %v925
        %v932 = vmul.f32 %v547, %v925
        %v933 = vmul.f32 %v548, %v929
        %v934 = vmul.f32 %v549, %v929
        %v935 = vadd.f32 %v919, %v931
        %v936 = vadd.f32 %v920, %v932
        %v937 = vadd.f32 %v921, %v933
        %v938 = vadd.f32 %v922, %v934
        %939 = vset.pattern.permute.xlu0 20
        %940 = vperm.xlu0 %939, %v421
        %v941 = vpop.permute.xlu0 %940
        %943 = vset.pattern.permute.xlu0 20
        %944 = vperm.xlu0 %943, %v422
        %v945 = vpop.permute.xlu0 %944
        %v947 = vmul.f32 %v571, %v941
        %v948 = vmul.f32 %v572, %v941
        %v949 = vmul.f32 %v573, %v945
        %v950 = vmul.f32 %v574, %v945
        %v951 = vadd.f32 %v935, %v947
        %v952 = vadd.f32 %v936, %v948
        %v953 = vadd.f32 %v937, %v949
        %v954 = vadd.f32 %v938, %v950
        %955 = vrot.lane.b32.xlu0 %v951, 16
        %v956 = vpop.permute.xlu0 %955
        %957 = vrot.lane.b32.xlu0 %v953, 16
        %v958 = vpop.permute.xlu0 %957
        %959 = vrot.lane.b32.xlu0 %v952, 16
        %v960 = vpop.permute.xlu0 %959
        %961 = vrot.lane.b32.xlu0 %v954, 16
        %v962 = vpop.permute.xlu0 %961
        %vm963 = vcmp.lt.s32.totalorder %v432, 16
        %v964 = vsel %vm963, %v956, %v960
        %v965 = vsel %vm963, %v958, %v962
        %v966 = vsel %vm963, %v960, %v956
        %v967 = vsel %vm963, %v962, %v958
        %v968 = vlaneseq
        %v969 = vshrl.u32 %v968, 7
        %v970 = vsub.s32 2, %v969
        %v971 = vrot.slane %v415, %v970
        %v972 = vlaneseq
        %v973 = vshrl.u32 %v972, 7
        %v974 = vsub.s32 2, %v973
        %v975 = vrot.slane %v416, %v974
        %v976 = vmul.f32 %v966, %v971
        %v977 = vmul.f32 %v964, %v975
        %v978 = vmul.f32 %v967, %v971
        %v979 = vmul.f32 %v965, %v975
        %v980 = vadd.f32 %v843, %v976
        %v981 = vadd.f32 %v844, %v977
        %v982 = vadd.f32 %v845, %v978
        %v983 = vadd.f32 %v846, %v979
        %984 = vset.pattern.permute.xlu0 21
        %985 = vperm.xlu0 %984, %v421
        %v986 = vpop.permute.xlu0 %985
        %988 = vset.pattern.permute.xlu0 21
        %989 = vperm.xlu0 %988, %v422
        %v990 = vpop.permute.xlu0 %989
        %v992 = vmul.f32 %v446, %v986
        %v993 = vmul.f32 %v447, %v986
        %v994 = vmul.f32 %v448, %v990
        %v995 = vmul.f32 %v449, %v990
        %996 = vset.pattern.permute.xlu0 22
        %997 = vperm.xlu0 %996, %v421
        %v998 = vpop.permute.xlu0 %997
        %1000 = vset.pattern.permute.xlu0 22
        %1001 = vperm.xlu0 %1000, %v422
        %v1002 = vpop.permute.xlu0 %1001
        %v1004 = vmul.f32 %v471, %v998
        %v1005 = vmul.f32 %v472, %v998
        %v1006 = vmul.f32 %v473, %v1002
        %v1007 = vmul.f32 %v474, %v1002
        %v1008 = vadd.f32 %v992, %v1004
        %v1009 = vadd.f32 %v993, %v1005
        %v1010 = vadd.f32 %v994, %v1006
        %v1011 = vadd.f32 %v995, %v1007
        %1012 = vset.pattern.permute.xlu0 23
        %1013 = vperm.xlu0 %1012, %v421
        %v1014 = vpop.permute.xlu0 %1013
        %1016 = vset.pattern.permute.xlu0 23
        %1017 = vperm.xlu0 %1016, %v422
        %v1018 = vpop.permute.xlu0 %1017
        %v1020 = vmul.f32 %v496, %v1014
        %v1021 = vmul.f32 %v497, %v1014
        %v1022 = vmul.f32 %v498, %v1018
        %v1023 = vmul.f32 %v499, %v1018
        %v1024 = vadd.f32 %v1008, %v1020
        %v1025 = vadd.f32 %v1009, %v1021
        %v1026 = vadd.f32 %v1010, %v1022
        %v1027 = vadd.f32 %v1011, %v1023
        %1028 = vset.pattern.permute.xlu0 24
        %1029 = vperm.xlu0 %1028, %v421
        %v1030 = vpop.permute.xlu0 %1029
        %1032 = vset.pattern.permute.xlu0 24
        %1033 = vperm.xlu0 %1032, %v422
        %v1034 = vpop.permute.xlu0 %1033
        %v1036 = vmul.f32 %v417, %v1030
        %v1037 = vmul.f32 %v418, %v1030
        %v1038 = vmul.f32 %v419, %v1034
        %v1039 = vmul.f32 %v420, %v1034
        %v1040 = vadd.f32 %v1024, %v1036
        %v1041 = vadd.f32 %v1025, %v1037
        %v1042 = vadd.f32 %v1026, %v1038
        %v1043 = vadd.f32 %v1027, %v1039
        %1044 = vset.pattern.permute.xlu0 25
        %1045 = vperm.xlu0 %1044, %v421
        %v1046 = vpop.permute.xlu0 %1045
        %1048 = vset.pattern.permute.xlu0 25
        %1049 = vperm.xlu0 %1048, %v422
        %v1050 = vpop.permute.xlu0 %1049
        %v1052 = vmul.f32 %v521, %v1046
        %v1053 = vmul.f32 %v522, %v1046
        %v1054 = vmul.f32 %v523, %v1050
        %v1055 = vmul.f32 %v524, %v1050
        %v1056 = vadd.f32 %v1040, %v1052
        %v1057 = vadd.f32 %v1041, %v1053
        %v1058 = vadd.f32 %v1042, %v1054
        %v1059 = vadd.f32 %v1043, %v1055
        %1060 = vset.pattern.permute.xlu0 26
        %1061 = vperm.xlu0 %1060, %v421
        %v1062 = vpop.permute.xlu0 %1061
        %1064 = vset.pattern.permute.xlu0 26
        %1065 = vperm.xlu0 %1064, %v422
        %v1066 = vpop.permute.xlu0 %1065
        %v1068 = vmul.f32 %v546, %v1062
        %v1069 = vmul.f32 %v547, %v1062
        %v1070 = vmul.f32 %v548, %v1066
        %v1071 = vmul.f32 %v549, %v1066
        %v1072 = vadd.f32 %v1056, %v1068
        %v1073 = vadd.f32 %v1057, %v1069
        %v1074 = vadd.f32 %v1058, %v1070
        %v1075 = vadd.f32 %v1059, %v1071
        %1076 = vset.pattern.permute.xlu0 27
        %1077 = vperm.xlu0 %1076, %v421
        %v1078 = vpop.permute.xlu0 %1077
        %1080 = vset.pattern.permute.xlu0 27
        %1081 = vperm.xlu0 %1080, %v422
        %v1082 = vpop.permute.xlu0 %1081
        %v1084 = vmul.f32 %v571, %v1078
        %v1085 = vmul.f32 %v572, %v1078
        %v1086 = vmul.f32 %v573, %v1082
        %v1087 = vmul.f32 %v574, %v1082
        %v1088 = vadd.f32 %v1072, %v1084
        %v1089 = vadd.f32 %v1073, %v1085
        %v1090 = vadd.f32 %v1074, %v1086
        %v1091 = vadd.f32 %v1075, %v1087
        %v1092 = vadd.f32 %v980, %v1088
        %v1093 = vadd.f32 %v981, %v1089
        %v1094 = vadd.f32 %v982, %v1090
        %v1095 = vadd.f32 %v983, %v1091
        %1096 = vset.pattern.permute.xlu0 28
        %1097 = vperm.xlu0 %1096, %v421
        %v1098 = vpop.permute.xlu0 %1097
        %1100 = vset.pattern.permute.xlu0 28
        %1101 = vperm.xlu0 %1100, %v422
        %v1102 = vpop.permute.xlu0 %1101
        %v1104 = vmul.f32 %v446, %v1098
        %v1105 = vmul.f32 %v447, %v1098
        %v1106 = vmul.f32 %v448, %v1102
        %v1107 = vmul.f32 %v449, %v1102
        %1108 = vset.pattern.permute.xlu0 29
        %1109 = vperm.xlu0 %1108, %v421
        %v1110 = vpop.permute.xlu0 %1109
        %1112 = vset.pattern.permute.xlu0 29
        %1113 = vperm.xlu0 %1112, %v422
        %v1114 = vpop.permute.xlu0 %1113
        %v1116 = vmul.f32 %v471, %v1110
        %v1117 = vmul.f32 %v472, %v1110
        %v1118 = vmul.f32 %v473, %v1114
        %v1119 = vmul.f32 %v474, %v1114
        %v1120 = vadd.f32 %v1104, %v1116
        %v1121 = vadd.f32 %v1105, %v1117
        %v1122 = vadd.f32 %v1106, %v1118
        %v1123 = vadd.f32 %v1107, %v1119
        %1124 = vset.pattern.permute.xlu0 30
        %1125 = vperm.xlu0 %1124, %v421
        %v1126 = vpop.permute.xlu0 %1125
        %1128 = vset.pattern.permute.xlu0 30
        %1129 = vperm.xlu0 %1128, %v422
        %v1130 = vpop.permute.xlu0 %1129
        %v1132 = vmul.f32 %v496, %v1126
        %v1133 = vmul.f32 %v497, %v1126
        %v1134 = vmul.f32 %v498, %v1130
        %v1135 = vmul.f32 %v499, %v1130
        %v1136 = vadd.f32 %v1120, %v1132
        %v1137 = vadd.f32 %v1121, %v1133
        %v1138 = vadd.f32 %v1122, %v1134
        %v1139 = vadd.f32 %v1123, %v1135
        %1140 = vset.pattern.permute.xlu0 31
        %1141 = vperm.xlu0 %1140, %v421
        %v1142 = vpop.permute.xlu0 %1141
        %1144 = vset.pattern.permute.xlu0 31
        %1145 = vperm.xlu0 %1144, %v422
        %v1146 = vpop.permute.xlu0 %1145
        %v1148 = vmul.f32 %v417, %v1142
        %v1149 = vmul.f32 %v418, %v1142
        %v1150 = vmul.f32 %v419, %v1146
        %v1151 = vmul.f32 %v420, %v1146
        %v1152 = vadd.f32 %v1136, %v1148
        %v1153 = vadd.f32 %v1137, %v1149
        %v1154 = vadd.f32 %v1138, %v1150
        %v1155 = vadd.f32 %v1139, %v1151
        %1156 = vset.pattern.permute.xlu0 32
        %1157 = vperm.xlu0 %1156, %v421
        %v1158 = vpop.permute.xlu0 %1157
        %1160 = vset.pattern.permute.xlu0 32
        %1161 = vperm.xlu0 %1160, %v422
        %v1162 = vpop.permute.xlu0 %1161
        %v1164 = vmul.f32 %v521, %v1158
        %v1165 = vmul.f32 %v522, %v1158
        %v1166 = vmul.f32 %v523, %v1162
        %v1167 = vmul.f32 %v524, %v1162
        %v1168 = vadd.f32 %v1152, %v1164
        %v1169 = vadd.f32 %v1153, %v1165
        %v1170 = vadd.f32 %v1154, %v1166
        %v1171 = vadd.f32 %v1155, %v1167
        %1172 = vset.pattern.permute.xlu0 33
        %1173 = vperm.xlu0 %1172, %v421
        %v1174 = vpop.permute.xlu0 %1173
        %1176 = vset.pattern.permute.xlu0 33
        %1177 = vperm.xlu0 %1176, %v422
        %v1178 = vpop.permute.xlu0 %1177
        %v1180 = vmul.f32 %v546, %v1174
        %v1181 = vmul.f32 %v547, %v1174
        %v1182 = vmul.f32 %v548, %v1178
        %v1183 = vmul.f32 %v549, %v1178
        %v1184 = vadd.f32 %v1168, %v1180
        %v1185 = vadd.f32 %v1169, %v1181
        %v1186 = vadd.f32 %v1170, %v1182
        %v1187 = vadd.f32 %v1171, %v1183
        %1188 = vset.pattern.permute.xlu0 34
        %1189 = vperm.xlu0 %1188, %v421
        %v1190 = vpop.permute.xlu0 %1189
        %1192 = vset.pattern.permute.xlu0 34
        %1193 = vperm.xlu0 %1192, %v422
        %v1194 = vpop.permute.xlu0 %1193
        %v1196 = vmul.f32 %v571, %v1190
        %v1197 = vmul.f32 %v572, %v1190
        %v1198 = vmul.f32 %v573, %v1194
        %v1199 = vmul.f32 %v574, %v1194
        %v1200 = vadd.f32 %v1184, %v1196
        %v1201 = vadd.f32 %v1185, %v1197
        %v1202 = vadd.f32 %v1186, %v1198
        %v1203 = vadd.f32 %v1187, %v1199
        %1204 = vrot.lane.b32.xlu0 %v1200, 112
        %v1205 = vpop.permute.xlu0 %1204
        %1206 = vrot.lane.b32.xlu0 %v1202, 112
        %v1207 = vpop.permute.xlu0 %1206
        %1208 = vrot.lane.b32.xlu0 %v1201, 112
        %v1209 = vpop.permute.xlu0 %1208
        %1210 = vrot.lane.b32.xlu0 %v1203, 112
        %v1211 = vpop.permute.xlu0 %1210
        %vm1212 = vcmp.lt.s32.totalorder %v432, 112
        %v1213 = vsel %vm1212, %v1205, %v1209
        %v1214 = vsel %vm1212, %v1207, %v1211
        %v1215 = vsel %vm1212, %v1209, %v1205
        %v1216 = vsel %vm1212, %v1211, %v1207
        %v1217 = vlaneseq
        %v1218 = vshrl.u32 %v1217, 7
        %v1219 = vsub.s32 4, %v1218
        %v1220 = vrot.slane %v415, %v1219
        %v1221 = vlaneseq
        %v1222 = vshrl.u32 %v1221, 7
        %v1223 = vsub.s32 4, %v1222
        %v1224 = vrot.slane %v416, %v1223
        %v1225 = vmul.f32 %v1213, %v1220
        %v1226 = vmul.f32 %v1215, %v1224
        %v1227 = vmul.f32 %v1214, %v1220
        %v1228 = vmul.f32 %v1216, %v1224
        %v1229 = vadd.f32 %v1092, %v1225
        %v1230 = vadd.f32 %v1093, %v1226
        %v1231 = vadd.f32 %v1094, %v1227
        %v1232 = vadd.f32 %v1095, %v1228
        %1233 = vset.pattern.permute.xlu0 35
        %1234 = vperm.xlu0 %1233, %v421
        %v1235 = vpop.permute.xlu0 %1234
        %1237 = vset.pattern.permute.xlu0 35
        %1238 = vperm.xlu0 %1237, %v422
        %v1239 = vpop.permute.xlu0 %1238
        %v1241 = vmul.f32 %v446, %v1235
        %v1242 = vmul.f32 %v447, %v1235
        %v1243 = vmul.f32 %v448, %v1239
        %v1244 = vmul.f32 %v449, %v1239
        %1245 = vset.pattern.permute.xlu0 36
        %1246 = vperm.xlu0 %1245, %v421
        %v1247 = vpop.permute.xlu0 %1246
        %1249 = vset.pattern.permute.xlu0 36
        %1250 = vperm.xlu0 %1249, %v422
        %v1251 = vpop.permute.xlu0 %1250
        %v1253 = vmul.f32 %v471, %v1247
        %v1254 = vmul.f32 %v472, %v1247
        %v1255 = vmul.f32 %v473, %v1251
        %v1256 = vmul.f32 %v474, %v1251
        %v1257 = vadd.f32 %v1241, %v1253
        %v1258 = vadd.f32 %v1242, %v1254
        %v1259 = vadd.f32 %v1243, %v1255
        %v1260 = vadd.f32 %v1244, %v1256
        %1261 = vset.pattern.permute.xlu0 37
        %1262 = vperm.xlu0 %1261, %v421
        %v1263 = vpop.permute.xlu0 %1262
        %1265 = vset.pattern.permute.xlu0 37
        %1266 = vperm.xlu0 %1265, %v422
        %v1267 = vpop.permute.xlu0 %1266
        %v1269 = vmul.f32 %v496, %v1263
        %v1270 = vmul.f32 %v497, %v1263
        %v1271 = vmul.f32 %v498, %v1267
        %v1272 = vmul.f32 %v499, %v1267
        %v1273 = vadd.f32 %v1257, %v1269
        %v1274 = vadd.f32 %v1258, %v1270
        %v1275 = vadd.f32 %v1259, %v1271
        %v1276 = vadd.f32 %v1260, %v1272
        %1277 = vset.pattern.permute.xlu0 38
        %1278 = vperm.xlu0 %1277, %v421
        %v1279 = vpop.permute.xlu0 %1278
        %1281 = vset.pattern.permute.xlu0 38
        %1282 = vperm.xlu0 %1281, %v422
        %v1283 = vpop.permute.xlu0 %1282
        %v1285 = vmul.f32 %v417, %v1279
        %v1286 = vmul.f32 %v418, %v1279
        %v1287 = vmul.f32 %v419, %v1283
        %v1288 = vmul.f32 %v420, %v1283
        %v1289 = vadd.f32 %v1273, %v1285
        %v1290 = vadd.f32 %v1274, %v1286
        %v1291 = vadd.f32 %v1275, %v1287
        %v1292 = vadd.f32 %v1276, %v1288
        %1293 = vset.pattern.permute.xlu0 39
        %1294 = vperm.xlu0 %1293, %v421
        %v1295 = vpop.permute.xlu0 %1294
        %1297 = vset.pattern.permute.xlu0 39
        %1298 = vperm.xlu0 %1297, %v422
        %v1299 = vpop.permute.xlu0 %1298
        %v1301 = vmul.f32 %v521, %v1295
        %v1302 = vmul.f32 %v522, %v1295
        %v1303 = vmul.f32 %v523, %v1299
        %v1304 = vmul.f32 %v524, %v1299
        %v1305 = vadd.f32 %v1289, %v1301
        %v1306 = vadd.f32 %v1290, %v1302
        %v1307 = vadd.f32 %v1291, %v1303
        %v1308 = vadd.f32 %v1292, %v1304
        %1309 = vset.pattern.permute.xlu0 40
        %1310 = vperm.xlu0 %1309, %v421
        %v1311 = vpop.permute.xlu0 %1310
        %1313 = vset.pattern.permute.xlu0 40
        %1314 = vperm.xlu0 %1313, %v422
        %v1315 = vpop.permute.xlu0 %1314
        %v1317 = vmul.f32 %v546, %v1311
        %v1318 = vmul.f32 %v547, %v1311
        %v1319 = vmul.f32 %v548, %v1315
        %v1320 = vmul.f32 %v549, %v1315
        %v1321 = vadd.f32 %v1305, %v1317
        %v1322 = vadd.f32 %v1306, %v1318
        %v1323 = vadd.f32 %v1307, %v1319
        %v1324 = vadd.f32 %v1308, %v1320
        %1325 = vset.pattern.permute.xlu0 41
        %1326 = vperm.xlu0 %1325, %v421
        %v1327 = vpop.permute.xlu0 %1326
        %1329 = vset.pattern.permute.xlu0 41
        %1330 = vperm.xlu0 %1329, %v422
        %v1331 = vpop.permute.xlu0 %1330
        %v1333 = vmul.f32 %v571, %v1327
        %v1334 = vmul.f32 %v572, %v1327
        %v1335 = vmul.f32 %v573, %v1331
        %v1336 = vmul.f32 %v574, %v1331
        %v1337 = vadd.f32 %v1321, %v1333
        %v1338 = vadd.f32 %v1322, %v1334
        %v1339 = vadd.f32 %v1323, %v1335
        %v1340 = vadd.f32 %v1324, %v1336
        %1341 = vrot.lane.b32.xlu0 %v1337, 96
        %v1342 = vpop.permute.xlu0 %1341
        %1343 = vrot.lane.b32.xlu0 %v1339, 96
        %v1344 = vpop.permute.xlu0 %1343
        %1345 = vrot.lane.b32.xlu0 %v1338, 96
        %v1346 = vpop.permute.xlu0 %1345
        %1347 = vrot.lane.b32.xlu0 %v1340, 96
        %v1348 = vpop.permute.xlu0 %1347
        %vm1349 = vcmp.lt.s32.totalorder %v432, 96
        %v1350 = vsel %vm1349, %v1342, %v1346
        %v1351 = vsel %vm1349, %v1344, %v1348
        %v1352 = vsel %vm1349, %v1346, %v1342
        %v1353 = vsel %vm1349, %v1348, %v1344
        %v1354 = vlaneseq
        %v1355 = vshrl.u32 %v1354, 7
        %v1356 = vsub.s32 5, %v1355
        %v1357 = vrot.slane %v415, %v1356
        %v1358 = vlaneseq
        %v1359 = vshrl.u32 %v1358, 7
        %v1360 = vsub.s32 5, %v1359
        %v1361 = vrot.slane %v416, %v1360
        %v1362 = vmul.f32 %v1350, %v1357
        %v1363 = vmul.f32 %v1352, %v1361
        %v1364 = vmul.f32 %v1351, %v1357
        %v1365 = vmul.f32 %v1353, %v1361
        %v1366 = vadd.f32 %v1229, %v1362
        %v1367 = vadd.f32 %v1230, %v1363
        %v1368 = vadd.f32 %v1231, %v1364
        %v1369 = vadd.f32 %v1232, %v1365
        %1370 = vset.pattern.permute.xlu0 42
        %1371 = vperm.xlu0 %1370, %v421
        %v1372 = vpop.permute.xlu0 %1371
        %1374 = vset.pattern.permute.xlu0 42
        %1375 = vperm.xlu0 %1374, %v422
        %v1376 = vpop.permute.xlu0 %1375
        %v1378 = vmul.f32 %v446, %v1372
        %v1379 = vmul.f32 %v447, %v1372
        %v1380 = vmul.f32 %v448, %v1376
        %v1381 = vmul.f32 %v449, %v1376
        %1382 = vset.pattern.permute.xlu0 43
        %1383 = vperm.xlu0 %1382, %v421
        %v1384 = vpop.permute.xlu0 %1383
        %1386 = vset.pattern.permute.xlu0 43
        %1387 = vperm.xlu0 %1386, %v422
        %v1388 = vpop.permute.xlu0 %1387
        %v1390 = vmul.f32 %v471, %v1384
        %v1391 = vmul.f32 %v472, %v1384
        %v1392 = vmul.f32 %v473, %v1388
        %v1393 = vmul.f32 %v474, %v1388
        %v1394 = vadd.f32 %v1378, %v1390
        %v1395 = vadd.f32 %v1379, %v1391
        %v1396 = vadd.f32 %v1380, %v1392
        %v1397 = vadd.f32 %v1381, %v1393
        %1398 = vset.pattern.permute.xlu0 44
        %1399 = vperm.xlu0 %1398, %v421
        %v1400 = vpop.permute.xlu0 %1399
        %1402 = vset.pattern.permute.xlu0 44
        %1403 = vperm.xlu0 %1402, %v422
        %v1404 = vpop.permute.xlu0 %1403
        %v1406 = vmul.f32 %v496, %v1400
        %v1407 = vmul.f32 %v497, %v1400
        %v1408 = vmul.f32 %v498, %v1404
        %v1409 = vmul.f32 %v499, %v1404
        %v1410 = vadd.f32 %v1394, %v1406
        %v1411 = vadd.f32 %v1395, %v1407
        %v1412 = vadd.f32 %v1396, %v1408
        %v1413 = vadd.f32 %v1397, %v1409
        %1414 = vset.pattern.permute.xlu0 45
        %1415 = vperm.xlu0 %1414, %v421
        %v1416 = vpop.permute.xlu0 %1415
        %1418 = vset.pattern.permute.xlu0 45
        %1419 = vperm.xlu0 %1418, %v422
        %v1420 = vpop.permute.xlu0 %1419
        %v1422 = vmul.f32 %v417, %v1416
        %v1423 = vmul.f32 %v418, %v1416
        %v1424 = vmul.f32 %v419, %v1420
        %v1425 = vmul.f32 %v420, %v1420
        %v1426 = vadd.f32 %v1410, %v1422
        %v1427 = vadd.f32 %v1411, %v1423
        %v1428 = vadd.f32 %v1412, %v1424
        %v1429 = vadd.f32 %v1413, %v1425
        %1430 = vset.pattern.permute.xlu0 46
        %1431 = vperm.xlu0 %1430, %v421
        %v1432 = vpop.permute.xlu0 %1431
        %1434 = vset.pattern.permute.xlu0 46
        %1435 = vperm.xlu0 %1434, %v422
        %v1436 = vpop.permute.xlu0 %1435
        %v1438 = vmul.f32 %v521, %v1432
        %v1439 = vmul.f32 %v522, %v1432
        %v1440 = vmul.f32 %v523, %v1436
        %v1441 = vmul.f32 %v524, %v1436
        %v1442 = vadd.f32 %v1426, %v1438
        %v1443 = vadd.f32 %v1427, %v1439
        %v1444 = vadd.f32 %v1428, %v1440
        %v1445 = vadd.f32 %v1429, %v1441
        %1446 = vset.pattern.permute.xlu0 47
        %1447 = vperm.xlu0 %1446, %v421
        %v1448 = vpop.permute.xlu0 %1447
        %1450 = vset.pattern.permute.xlu0 47
        %1451 = vperm.xlu0 %1450, %v422
        %v1452 = vpop.permute.xlu0 %1451
        %v1454 = vmul.f32 %v546, %v1448
        %v1455 = vmul.f32 %v547, %v1448
        %v1456 = vmul.f32 %v548, %v1452
        %v1457 = vmul.f32 %v549, %v1452
        %v1458 = vadd.f32 %v1442, %v1454
        %v1459 = vadd.f32 %v1443, %v1455
        %v1460 = vadd.f32 %v1444, %v1456
        %v1461 = vadd.f32 %v1445, %v1457
        %1462 = vset.pattern.permute.xlu0 48
        %1463 = vperm.xlu0 %1462, %v421
        %v1464 = vpop.permute.xlu0 %1463
        %1466 = vset.pattern.permute.xlu0 48
        %1467 = vperm.xlu0 %1466, %v422
        %v1468 = vpop.permute.xlu0 %1467
        %v1470 = vmul.f32 %v571, %v1464
        %v1471 = vmul.f32 %v572, %v1464
        %v1472 = vmul.f32 %v573, %v1468
        %v1473 = vmul.f32 %v574, %v1468
        %v1474 = vadd.f32 %v1458, %v1470
        %v1475 = vadd.f32 %v1459, %v1471
        %v1476 = vadd.f32 %v1460, %v1472
        %v1477 = vadd.f32 %v1461, %v1473
        %1478 = vrot.lane.b32.xlu0 %v1474, 80
        %v1479 = vpop.permute.xlu0 %1478
        %1480 = vrot.lane.b32.xlu0 %v1476, 80
        %v1481 = vpop.permute.xlu0 %1480
        %1482 = vrot.lane.b32.xlu0 %v1475, 80
        %v1483 = vpop.permute.xlu0 %1482
        %1484 = vrot.lane.b32.xlu0 %v1477, 80
        %v1485 = vpop.permute.xlu0 %1484
        %vm1486 = vcmp.lt.s32.totalorder %v432, 80
        %v1487 = vsel %vm1486, %v1479, %v1483
        %v1488 = vsel %vm1486, %v1481, %v1485
        %v1489 = vsel %vm1486, %v1483, %v1479
        %v1490 = vsel %vm1486, %v1485, %v1481
        %v1491 = vlaneseq
        %v1492 = vshrl.u32 %v1491, 7
        %v1493 = vsub.s32 6, %v1492
        %v1494 = vrot.slane %v415, %v1493
        %v1495 = vlaneseq
        %v1496 = vshrl.u32 %v1495, 7
        %v1497 = vsub.s32 6, %v1496
        %v1498 = vrot.slane %v416, %v1497
        %v1499 = vmul.f32 %v1487, %v1494
        %v1500 = vmul.f32 %v1489, %v1498
        %v1501 = vmul.f32 %v1488, %v1494
        %v1502 = vmul.f32 %v1490, %v1498
        %v1503 = vadd.f32 %v1366, %v1499
        %v1504 = vadd.f32 %v1367, %v1500
        %v1505 = vadd.f32 %v1368, %v1501
        %v1506 = vadd.f32 %v1369, %v1502
        %v1507 = vld [vmem:[%s4] sm:$0xff]
        %v1508 = vld [vmem:[%s4 + $0x8] sm:$0xff]
        %1510 = vset.pattern.permute.xlu0 0
        %1511 = vperm.xlu0 %1510, %v1507
        %v1512 = vpop.permute.xlu0 %1511
        %1515 = vset.pattern.permute.xlu0 0
        %1516 = vperm.xlu0 %1515, %v1508
        %v1517 = vpop.permute.xlu0 %1516
        %v1519 = vadd.f32 %v1503, %v1512
        %v1520 = vadd.f32 %v1504, %v1512
        %v1521 = vadd.f32 %v1505, %v1517
        %v1522 = vadd.f32 %v1506, %v1517
        %1523 = vst [vmem:[#allocation2] sm:$0xff] %v1519
        %1524 = vst [vmem:[#allocation2 + $0x8] sm:$0xff] %v1520
        %1525 = vst [vmem:[#allocation2 + $0x10] sm:$0xff] %v1521
        %1526 = vst [vmem:[#allocation2 + $0x18] sm:$0xff] %v1522
        %v1527 = vld [vmem:[%s411 + $0x20] sm:$0xff]
        %v1528 = vld [vmem:[%s411 + $0x28] sm:$0xff]
        %v1529 = vld [vmem:[%s411 + $0x30] sm:$0xff]
        %v1530 = vld [vmem:[%s411 + $0x38] sm:$0xff]
        %v1531 = vld [vmem:[%s3 + $0x10] sm:$0xff]
        %v1532 = vld [vmem:[%s3 + $0x18] sm:$0xff]
        %1533 = vrot.lane.b32.xlu0 %v1527, 3
        %v1534 = vpop.permute.xlu0 %1533
        %1535 = vrot.lane.b32.xlu0 %v1529, 3
        %v1536 = vpop.permute.xlu0 %1535
        %1537 = vrot.lane.b32.xlu0 %v1528, 3
        %v1538 = vpop.permute.xlu0 %1537
        %1539 = vrot.lane.b32.xlu0 %v1530, 3
        %v1540 = vpop.permute.xlu0 %1539
        %v1541 = vsel %vm433, %v1534, %v1538
        %v1542 = vsel %vm433, %v1536, %v1540
        %v1543 = vsel %vm433, %v1538, %v1534
        %v1544 = vsel %vm433, %v1540, %v1536
        %v1545 = vmul.f32 %v1543, %v441
        %v1546 = vmul.f32 %v1541, %v445
        %v1547 = vmul.f32 %v1544, %v441
        %v1548 = vmul.f32 %v1542, %v445
        %1549 = vrot.lane.b32.xlu0 %v1527, 2
        %v1550 = vpop.permute.xlu0 %1549
        %1551 = vrot.lane.b32.xlu0 %v1529, 2
        %v1552 = vpop.permute.xlu0 %1551
        %1553 = vrot.lane.b32.xlu0 %v1528, 2
        %v1554 = vpop.permute.xlu0 %1553
        %1555 = vrot.lane.b32.xlu0 %v1530, 2
        %v1556 = vpop.permute.xlu0 %1555
        %v1557 = vsel %vm458, %v1550, %v1554
        %v1558 = vsel %vm458, %v1552, %v1556
        %v1559 = vsel %vm458, %v1554, %v1550
        %v1560 = vsel %vm458, %v1556, %v1552
        %v1561 = vmul.f32 %v1559, %v466
        %v1562 = vmul.f32 %v1557, %v470
        %v1563 = vmul.f32 %v1560, %v466
        %v1564 = vmul.f32 %v1558, %v470
        %1565 = vrot.lane.b32.xlu0 %v1527, 1
        %v1566 = vpop.permute.xlu0 %1565
        %1567 = vrot.lane.b32.xlu0 %v1529, 1
        %v1568 = vpop.permute.xlu0 %1567
        %1569 = vrot.lane.b32.xlu0 %v1528, 1
        %v1570 = vpop.permute.xlu0 %1569
        %1571 = vrot.lane.b32.xlu0 %v1530, 1
        %v1572 = vpop.permute.xlu0 %1571
        %v1573 = vsel %vm483, %v1566, %v1570
        %v1574 = vsel %vm483, %v1568, %v1572
        %v1575 = vsel %vm483, %v1570, %v1566
        %v1576 = vsel %vm483, %v1572, %v1568
        %v1577 = vmul.f32 %v1575, %v491
        %v1578 = vmul.f32 %v1573, %v495
        %v1579 = vmul.f32 %v1576, %v491
        %v1580 = vmul.f32 %v1574, %v495
        %1581 = vrot.lane.b32.xlu0 %v1527, 127
        %v1582 = vpop.permute.xlu0 %1581
        %1583 = vrot.lane.b32.xlu0 %v1529, 127
        %v1584 = vpop.permute.xlu0 %1583
        %1585 = vrot.lane.b32.xlu0 %v1528, 127
        %v1586 = vpop.permute.xlu0 %1585
        %1587 = vrot.lane.b32.xlu0 %v1530, 127
        %v1588 = vpop.permute.xlu0 %1587
        %v1589 = vsel %vm508, %v1582, %v1586
        %v1590 = vsel %vm508, %v1584, %v1588
        %v1591 = vsel %vm508, %v1586, %v1582
        %v1592 = vsel %vm508, %v1588, %v1584
        %v1593 = vmul.f32 %v1589, %v516
        %v1594 = vmul.f32 %v1591, %v520
        %v1595 = vmul.f32 %v1590, %v516
        %v1596 = vmul.f32 %v1592, %v520
        %1597 = vrot.lane.b32.xlu0 %v1527, 126
        %v1598 = vpop.permute.xlu0 %1597
        %1599 = vrot.lane.b32.xlu0 %v1529, 126
        %v1600 = vpop.permute.xlu0 %1599
        %1601 = vrot.lane.b32.xlu0 %v1528, 126
        %v1602 = vpop.permute.xlu0 %1601
        %1603 = vrot.lane.b32.xlu0 %v1530, 126
        %v1604 = vpop.permute.xlu0 %1603
        %v1605 = vsel %vm533, %v1598, %v1602
        %v1606 = vsel %vm533, %v1600, %v1604
        %v1607 = vsel %vm533, %v1602, %v1598
        %v1608 = vsel %vm533, %v1604, %v1600
        %v1609 = vmul.f32 %v1605, %v541
        %v1610 = vmul.f32 %v1607, %v545
        %v1611 = vmul.f32 %v1606, %v541
        %v1612 = vmul.f32 %v1608, %v545
        %1613 = vrot.lane.b32.xlu0 %v1527, 125
        %v1614 = vpop.permute.xlu0 %1613
        %1615 = vrot.lane.b32.xlu0 %v1529, 125
        %v1616 = vpop.permute.xlu0 %1615
        %1617 = vrot.lane.b32.xlu0 %v1528, 125
        %v1618 = vpop.permute.xlu0 %1617
        %1619 = vrot.lane.b32.xlu0 %v1530, 125
        %v1620 = vpop.permute.xlu0 %1619
        %v1621 = vsel %vm558, %v1614, %v1618
        %v1622 = vsel %vm558, %v1616, %v1620
        %v1623 = vsel %vm558, %v1618, %v1614
        %v1624 = vsel %vm558, %v1620, %v1616
        %v1625 = vmul.f32 %v1621, %v566
        %v1626 = vmul.f32 %v1623, %v570
        %v1627 = vmul.f32 %v1622, %v566
        %v1628 = vmul.f32 %v1624, %v570
        %1630 = vset.pattern.permute.xlu0 0
        %1631 = vperm.xlu0 %1630, %v1531
        %v1632 = vpop.permute.xlu0 %1631
        %1635 = vset.pattern.permute.xlu0 0
        %1636 = vperm.xlu0 %1635, %v1532
        %v1637 = vpop.permute.xlu0 %1636
        %v1639 = vmul.f32 %v1545, %v1632
        %v1640 = vmul.f32 %v1546, %v1632
        %v1641 = vmul.f32 %v1547, %v1637
        %v1642 = vmul.f32 %v1548, %v1637
        %1643 = vset.pattern.permute.xlu0 1
        %1644 = vperm.xlu0 %1643, %v1531
        %v1645 = vpop.permute.xlu0 %1644
        %1647 = vset.pattern.permute.xlu0 1
        %1648 = vperm.xlu0 %1647, %v1532
        %v1649 = vpop.permute.xlu0 %1648
        %v1651 = vmul.f32 %v1561, %v1645
        %v1652 = vmul.f32 %v1562, %v1645
        %v1653 = vmul.f32 %v1563, %v1649
        %v1654 = vmul.f32 %v1564, %v1649
        %v1655 = vadd.f32 %v1639, %v1651
        %v1656 = vadd.f32 %v1640, %v1652
        %v1657 = vadd.f32 %v1641, %v1653
        %v1658 = vadd.f32 %v1642, %v1654
        %1659 = vset.pattern.permute.xlu0 2
        %1660 = vperm.xlu0 %1659, %v1531
        %v1661 = vpop.permute.xlu0 %1660
        %1663 = vset.pattern.permute.xlu0 2
        %1664 = vperm.xlu0 %1663, %v1532
        %v1665 = vpop.permute.xlu0 %1664
        %v1667 = vmul.f32 %v1577, %v1661
        %v1668 = vmul.f32 %v1578, %v1661
        %v1669 = vmul.f32 %v1579, %v1665
        %v1670 = vmul.f32 %v1580, %v1665
        %v1671 = vadd.f32 %v1655, %v1667
        %v1672 = vadd.f32 %v1656, %v1668
        %v1673 = vadd.f32 %v1657, %v1669
        %v1674 = vadd.f32 %v1658, %v1670
        %1675 = vset.pattern.permute.xlu0 3
        %1676 = vperm.xlu0 %1675, %v1531
        %v1677 = vpop.permute.xlu0 %1676
        %1679 = vset.pattern.permute.xlu0 3
        %1680 = vperm.xlu0 %1679, %v1532
        %v1681 = vpop.permute.xlu0 %1680
        %v1683 = vmul.f32 %v1527, %v1677
        %v1684 = vmul.f32 %v1528, %v1677
        %v1685 = vmul.f32 %v1529, %v1681
        %v1686 = vmul.f32 %v1530, %v1681
        %v1687 = vadd.f32 %v1671, %v1683
        %v1688 = vadd.f32 %v1672, %v1684
        %v1689 = vadd.f32 %v1673, %v1685
        %v1690 = vadd.f32 %v1674, %v1686
        %1691 = vset.pattern.permute.xlu0 4
        %1692 = vperm.xlu0 %1691, %v1531
        %v1693 = vpop.permute.xlu0 %1692
        %1695 = vset.pattern.permute.xlu0 4
        %1696 = vperm.xlu0 %1695, %v1532
        %v1697 = vpop.permute.xlu0 %1696
        %v1699 = vmul.f32 %v1593, %v1693
        %v1700 = vmul.f32 %v1594, %v1693
        %v1701 = vmul.f32 %v1595, %v1697
        %v1702 = vmul.f32 %v1596, %v1697
        %v1703 = vadd.f32 %v1687, %v1699
        %v1704 = vadd.f32 %v1688, %v1700
        %v1705 = vadd.f32 %v1689, %v1701
        %v1706 = vadd.f32 %v1690, %v1702
        %1707 = vset.pattern.permute.xlu0 5
        %1708 = vperm.xlu0 %1707, %v1531
        %v1709 = vpop.permute.xlu0 %1708
        %1711 = vset.pattern.permute.xlu0 5
        %1712 = vperm.xlu0 %1711, %v1532
        %v1713 = vpop.permute.xlu0 %1712
        %v1715 = vmul.f32 %v1609, %v1709
        %v1716 = vmul.f32 %v1610, %v1709
        %v1717 = vmul.f32 %v1611, %v1713
        %v1718 = vmul.f32 %v1612, %v1713
        %v1719 = vadd.f32 %v1703, %v1715
        %v1720 = vadd.f32 %v1704, %v1716
        %v1721 = vadd.f32 %v1705, %v1717
        %v1722 = vadd.f32 %v1706, %v1718
        %1723 = vset.pattern.permute.xlu0 6
        %1724 = vperm.xlu0 %1723, %v1531
        %v1725 = vpop.permute.xlu0 %1724
        %1727 = vset.pattern.permute.xlu0 6
        %1728 = vperm.xlu0 %1727, %v1532
        %v1729 = vpop.permute.xlu0 %1728
        %v1731 = vmul.f32 %v1625, %v1725
        %v1732 = vmul.f32 %v1626, %v1725
        %v1733 = vmul.f32 %v1627, %v1729
        %v1734 = vmul.f32 %v1628, %v1729
        %v1735 = vadd.f32 %v1719, %v1731
        %v1736 = vadd.f32 %v1720, %v1732
        %v1737 = vadd.f32 %v1721, %v1733
        %v1738 = vadd.f32 %v1722, %v1734
        %1739 = vrot.lane.b32.xlu0 %v1735, 48
        %v1740 = vpop.permute.xlu0 %1739
        %1741 = vrot.lane.b32.xlu0 %v1737, 48
        %v1742 = vpop.permute.xlu0 %1741
        %1743 = vrot.lane.b32.xlu0 %v1736, 48
        %v1744 = vpop.permute.xlu0 %1743
        %1745 = vrot.lane.b32.xlu0 %v1738, 48
        %v1746 = vpop.permute.xlu0 %1745
        %v1747 = vsel %vm693, %v1740, %v1744
        %v1748 = vsel %vm693, %v1742, %v1746
        %v1749 = vsel %vm693, %v1744, %v1740
        %v1750 = vsel %vm693, %v1746, %v1742
        %v1751 = vmul.f32 %v1749, %v701
        %v1752 = vmul.f32 %v1747, %v705
        %v1753 = vmul.f32 %v1750, %v701
        %v1754 = vmul.f32 %v1748, %v705
        %1755 = vset.pattern.permute.xlu0 7
        %1756 = vperm.xlu0 %1755, %v1531
        %v1757 = vpop.permute.xlu0 %1756
        %1759 = vset.pattern.permute.xlu0 7
        %1760 = vperm.xlu0 %1759, %v1532
        %v1761 = vpop.permute.xlu0 %1760
        %v1763 = vmul.f32 %v1545, %v1757
        %v1764 = vmul.f32 %v1546, %v1757
        %v1765 = vmul.f32 %v1547, %v1761
        %v1766 = vmul.f32 %v1548, %v1761
        %1767 = vset.pattern.permute.xlu0 8
        %1768 = vperm.xlu0 %1767, %v1531
        %v1769 = vpop.permute.xlu0 %1768
        %1771 = vset.pattern.permute.xlu0 8
        %1772 = vperm.xlu0 %1771, %v1532
        %v1773 = vpop.permute.xlu0 %1772
        %v1775 = vmul.f32 %v1561, %v1769
        %v1776 = vmul.f32 %v1562, %v1769
        %v1777 = vmul.f32 %v1563, %v1773
        %v1778 = vmul.f32 %v1564, %v1773
        %v1779 = vadd.f32 %v1763, %v1775
        %v1780 = vadd.f32 %v1764, %v1776
        %v1781 = vadd.f32 %v1765, %v1777
        %v1782 = vadd.f32 %v1766, %v1778
        %1783 = vset.pattern.permute.xlu0 9
        %1784 = vperm.xlu0 %1783, %v1531
        %v1785 = vpop.permute.xlu0 %1784
        %1787 = vset.pattern.permute.xlu0 9
        %1788 = vperm.xlu0 %1787, %v1532
        %v1789 = vpop.permute.xlu0 %1788
        %v1791 = vmul.f32 %v1577, %v1785
        %v1792 = vmul.f32 %v1578, %v1785
        %v1793 = vmul.f32 %v1579, %v1789
        %v1794 = vmul.f32 %v1580, %v1789
        %v1795 = vadd.f32 %v1779, %v1791
        %v1796 = vadd.f32 %v1780, %v1792
        %v1797 = vadd.f32 %v1781, %v1793
        %v1798 = vadd.f32 %v1782, %v1794
        %1799 = vset.pattern.permute.xlu0 10
        %1800 = vperm.xlu0 %1799, %v1531
        %v1801 = vpop.permute.xlu0 %1800
        %1803 = vset.pattern.permute.xlu0 10
        %1804 = vperm.xlu0 %1803, %v1532
        %v1805 = vpop.permute.xlu0 %1804
        %v1807 = vmul.f32 %v1527, %v1801
        %v1808 = vmul.f32 %v1528, %v1801
        %v1809 = vmul.f32 %v1529, %v1805
        %v1810 = vmul.f32 %v1530, %v1805
        %v1811 = vadd.f32 %v1795, %v1807
        %v1812 = vadd.f32 %v1796, %v1808
        %v1813 = vadd.f32 %v1797, %v1809
        %v1814 = vadd.f32 %v1798, %v1810
        %1815 = vset.pattern.permute.xlu0 11
        %1816 = vperm.xlu0 %1815, %v1531
        %v1817 = vpop.permute.xlu0 %1816
        %1819 = vset.pattern.permute.xlu0 11
        %1820 = vperm.xlu0 %1819, %v1532
        %v1821 = vpop.permute.xlu0 %1820
        %v1823 = vmul.f32 %v1593, %v1817
        %v1824 = vmul.f32 %v1594, %v1817
        %v1825 = vmul.f32 %v1595, %v1821
        %v1826 = vmul.f32 %v1596, %v1821
        %v1827 = vadd.f32 %v1811, %v1823
        %v1828 = vadd.f32 %v1812, %v1824
        %v1829 = vadd.f32 %v1813, %v1825
        %v1830 = vadd.f32 %v1814, %v1826
        %1831 = vset.pattern.permute.xlu0 12
        %1832 = vperm.xlu0 %1831, %v1531
        %v1833 = vpop.permute.xlu0 %1832
        %1835 = vset.pattern.permute.xlu0 12
        %1836 = vperm.xlu0 %1835, %v1532
        %v1837 = vpop.permute.xlu0 %1836
        %v1839 = vmul.f32 %v1609, %v1833
        %v1840 = vmul.f32 %v1610, %v1833
        %v1841 = vmul.f32 %v1611, %v1837
        %v1842 = vmul.f32 %v1612, %v1837
        %v1843 = vadd.f32 %v1827, %v1839
        %v1844 = vadd.f32 %v1828, %v1840
        %v1845 = vadd.f32 %v1829, %v1841
        %v1846 = vadd.f32 %v1830, %v1842
        %1847 = vset.pattern.permute.xlu0 13
        %1848 = vperm.xlu0 %1847, %v1531
        %v1849 = vpop.permute.xlu0 %1848
        %1851 = vset.pattern.permute.xlu0 13
        %1852 = vperm.xlu0 %1851, %v1532
        %v1853 = vpop.permute.xlu0 %1852
        %v1855 = vmul.f32 %v1625, %v1849
        %v1856 = vmul.f32 %v1626, %v1849
        %v1857 = vmul.f32 %v1627, %v1853
        %v1858 = vmul.f32 %v1628, %v1853
        %v1859 = vadd.f32 %v1843, %v1855
        %v1860 = vadd.f32 %v1844, %v1856
        %v1861 = vadd.f32 %v1845, %v1857
        %v1862 = vadd.f32 %v1846, %v1858
        %1863 = vrot.lane.b32.xlu0 %v1859, 32
        %v1864 = vpop.permute.xlu0 %1863
        %1865 = vrot.lane.b32.xlu0 %v1861, 32
        %v1866 = vpop.permute.xlu0 %1865
        %1867 = vrot.lane.b32.xlu0 %v1860, 32
        %v1868 = vpop.permute.xlu0 %1867
        %1869 = vrot.lane.b32.xlu0 %v1862, 32
        %v1870 = vpop.permute.xlu0 %1869
        %v1871 = vsel %vm826, %v1864, %v1868
        %v1872 = vsel %vm826, %v1866, %v1870
        %v1873 = vsel %vm826, %v1868, %v1864
        %v1874 = vsel %vm826, %v1870, %v1866
        %v1875 = vmul.f32 %v1873, %v834
        %v1876 = vmul.f32 %v1871, %v838
        %v1877 = vmul.f32 %v1874, %v834
        %v1878 = vmul.f32 %v1872, %v838
        %v1879 = vadd.f32 %v1751, %v1875
        %v1880 = vadd.f32 %v1752, %v1876
        %v1881 = vadd.f32 %v1753, %v1877
        %v1882 = vadd.f32 %v1754, %v1878
        %1883 = vset.pattern.permute.xlu0 14
        %1884 = vperm.xlu0 %1883, %v1531
        %v1885 = vpop.permute.xlu0 %1884
        %1887 = vset.pattern.permute.xlu0 14
        %1888 = vperm.xlu0 %1887, %v1532
        %v1889 = vpop.permute.xlu0 %1888
        %v1891 = vmul.f32 %v1545, %v1885
        %v1892 = vmul.f32 %v1546, %v1885
        %v1893 = vmul.f32 %v1547, %v1889
        %v1894 = vmul.f32 %v1548, %v1889
        %1895 = vset.pattern.permute.xlu0 15
        %1896 = vperm.xlu0 %1895, %v1531
        %v1897 = vpop.permute.xlu0 %1896
        %1899 = vset.pattern.permute.xlu0 15
        %1900 = vperm.xlu0 %1899, %v1532
        %v1901 = vpop.permute.xlu0 %1900
        %v1903 = vmul.f32 %v1561, %v1897
        %v1904 = vmul.f32 %v1562, %v1897
        %v1905 = vmul.f32 %v1563, %v1901
        %v1906 = vmul.f32 %v1564, %v1901
        %v1907 = vadd.f32 %v1891, %v1903
        %v1908 = vadd.f32 %v1892, %v1904
        %v1909 = vadd.f32 %v1893, %v1905
        %v1910 = vadd.f32 %v1894, %v1906
        %1911 = vset.pattern.permute.xlu0 16
        %1912 = vperm.xlu0 %1911, %v1531
        %v1913 = vpop.permute.xlu0 %1912
        %1915 = vset.pattern.permute.xlu0 16
        %1916 = vperm.xlu0 %1915, %v1532
        %v1917 = vpop.permute.xlu0 %1916
        %v1919 = vmul.f32 %v1577, %v1913
        %v1920 = vmul.f32 %v1578, %v1913
        %v1921 = vmul.f32 %v1579, %v1917
        %v1922 = vmul.f32 %v1580, %v1917
        %v1923 = vadd.f32 %v1907, %v1919
        %v1924 = vadd.f32 %v1908, %v1920
        %v1925 = vadd.f32 %v1909, %v1921
        %v1926 = vadd.f32 %v1910, %v1922
        %1927 = vset.pattern.permute.xlu0 17
        %1928 = vperm.xlu0 %1927, %v1531
        %v1929 = vpop.permute.xlu0 %1928
        %1931 = vset.pattern.permute.xlu0 17
        %1932 = vperm.xlu0 %1931, %v1532
        %v1933 = vpop.permute.xlu0 %1932
        %v1935 = vmul.f32 %v1527, %v1929
        %v1936 = vmul.f32 %v1528, %v1929
        %v1937 = vmul.f32 %v1529, %v1933
        %v1938 = vmul.f32 %v1530, %v1933
        %v1939 = vadd.f32 %v1923, %v1935
        %v1940 = vadd.f32 %v1924, %v1936
        %v1941 = vadd.f32 %v1925, %v1937
        %v1942 = vadd.f32 %v1926, %v1938
        %1943 = vset.pattern.permute.xlu0 18
        %1944 = vperm.xlu0 %1943, %v1531
        %v1945 = vpop.permute.xlu0 %1944
        %1947 = vset.pattern.permute.xlu0 18
        %1948 = vperm.xlu0 %1947, %v1532
        %v1949 = vpop.permute.xlu0 %1948
        %v1951 = vmul.f32 %v1593, %v1945
        %v1952 = vmul.f32 %v1594, %v1945
        %v1953 = vmul.f32 %v1595, %v1949
        %v1954 = vmul.f32 %v1596, %v1949
        %v1955 = vadd.f32 %v1939, %v1951
        %v1956 = vadd.f32 %v1940, %v1952
        %v1957 = vadd.f32 %v1941, %v1953
        %v1958 = vadd.f32 %v1942, %v1954
        %1959 = vset.pattern.permute.xlu0 19
        %1960 = vperm.xlu0 %1959, %v1531
        %v1961 = vpop.permute.xlu0 %1960
        %1963 = vset.pattern.permute.xlu0 19
        %1964 = vperm.xlu0 %1963, %v1532
        %v1965 = vpop.permute.xlu0 %1964
        %v1967 = vmul.f32 %v1609, %v1961
        %v1968 = vmul.f32 %v1610, %v1961
        %v1969 = vmul.f32 %v1611, %v1965
        %v1970 = vmul.f32 %v1612, %v1965
        %v1971 = vadd.f32 %v1955, %v1967
        %v1972 = vadd.f32 %v1956, %v1968
        %v1973 = vadd.f32 %v1957, %v1969
        %v1974 = vadd.f32 %v1958, %v1970
        %1975 = vset.pattern.permute.xlu0 20
        %1976 = vperm.xlu0 %1975, %v1531
        %v1977 = vpop.permute.xlu0 %1976
        %1979 = vset.pattern.permute.xlu0 20
        %1980 = vperm.xlu0 %1979, %v1532
        %v1981 = vpop.permute.xlu0 %1980
        %v1983 = vmul.f32 %v1625, %v1977
        %v1984 = vmul.f32 %v1626, %v1977
        %v1985 = vmul.f32 %v1627, %v1981
        %v1986 = vmul.f32 %v1628, %v1981
        %v1987 = vadd.f32 %v1971, %v1983
        %v1988 = vadd.f32 %v1972, %v1984
        %v1989 = vadd.f32 %v1973, %v1985
        %v1990 = vadd.f32 %v1974, %v1986
        %1991 = vrot.lane.b32.xlu0 %v1987, 16
        %v1992 = vpop.permute.xlu0 %1991
        %1993 = vrot.lane.b32.xlu0 %v1989, 16
        %v1994 = vpop.permute.xlu0 %1993
        %1995 = vrot.lane.b32.xlu0 %v1988, 16
        %v1996 = vpop.permute.xlu0 %1995
        %1997 = vrot.lane.b32.xlu0 %v1990, 16
        %v1998 = vpop.permute.xlu0 %1997
        %v1999 = vsel %vm963, %v1992, %v1996
        %v2000 = vsel %vm963, %v1994, %v1998
        %v2001 = vsel %vm963, %v1996, %v1992
        %v2002 = vsel %vm963, %v1998, %v1994
        %v2003 = vmul.f32 %v2001, %v971
        %v2004 = vmul.f32 %v1999, %v975
        %v2005 = vmul.f32 %v2002, %v971
        %v2006 = vmul.f32 %v2000, %v975
        %v2007 = vadd.f32 %v1879, %v2003
        %v2008 = vadd.f32 %v1880, %v2004
        %v2009 = vadd.f32 %v1881, %v2005
        %v2010 = vadd.f32 %v1882, %v2006
        %2011 = vset.pattern.permute.xlu0 21
        %2012 = vperm.xlu0 %2011, %v1531
        %v2013 = vpop.permute.xlu0 %2012
        %2015 = vset.pattern.permute.xlu0 21
        %2016 = vperm.xlu0 %2015, %v1532
        %v2017 = vpop.permute.xlu0 %2016
        %v2019 = vmul.f32 %v1545, %v2013
        %v2020 = vmul.f32 %v1546, %v2013
        %v2021 = vmul.f32 %v1547, %v2017
        %v2022 = vmul.f32 %v1548, %v2017
        %2023 = vset.pattern.permute.xlu0 22
        %2024 = vperm.xlu0 %2023, %v1531
        %v2025 = vpop.permute.xlu0 %2024
        %2027 = vset.pattern.permute.xlu0 22
        %2028 = vperm.xlu0 %2027, %v1532
        %v2029 = vpop.permute.xlu0 %2028
        %v2031 = vmul.f32 %v1561, %v2025
        %v2032 = vmul.f32 %v1562, %v2025
        %v2033 = vmul.f32 %v1563, %v2029
        %v2034 = vmul.f32 %v1564, %v2029
        %v2035 = vadd.f32 %v2019, %v2031
        %v2036 = vadd.f32 %v2020, %v2032
        %v2037 = vadd.f32 %v2021, %v2033
        %v2038 = vadd.f32 %v2022, %v2034
        %2039 = vset.pattern.permute.xlu0 23
        %2040 = vperm.xlu0 %2039, %v1531
        %v2041 = vpop.permute.xlu0 %2040
        %2043 = vset.pattern.permute.xlu0 23
        %2044 = vperm.xlu0 %2043, %v1532
        %v2045 = vpop.permute.xlu0 %2044
        %v2047 = vmul.f32 %v1577, %v2041
        %v2048 = vmul.f32 %v1578, %v2041
        %v2049 = vmul.f32 %v1579, %v2045
        %v2050 = vmul.f32 %v1580, %v2045
        %v2051 = vadd.f32 %v2035, %v2047
        %v2052 = vadd.f32 %v2036, %v2048
        %v2053 = vadd.f32 %v2037, %v2049
        %v2054 = vadd.f32 %v2038, %v2050
        %2055 = vset.pattern.permute.xlu0 24
        %2056 = vperm.xlu0 %2055, %v1531
        %v2057 = vpop.permute.xlu0 %2056
        %2059 = vset.pattern.permute.xlu0 24
        %2060 = vperm.xlu0 %2059, %v1532
        %v2061 = vpop.permute.xlu0 %2060
        %v2063 = vmul.f32 %v1527, %v2057
        %v2064 = vmul.f32 %v1528, %v2057
        %v2065 = vmul.f32 %v1529, %v2061
        %v2066 = vmul.f32 %v1530, %v2061
        %v2067 = vadd.f32 %v2051, %v2063
        %v2068 = vadd.f32 %v2052, %v2064
        %v2069 = vadd.f32 %v2053, %v2065
        %v2070 = vadd.f32 %v2054, %v2066
        %2071 = vset.pattern.permute.xlu0 25
        %2072 = vperm.xlu0 %2071, %v1531
        %v2073 = vpop.permute.xlu0 %2072
        %2075 = vset.pattern.permute.xlu0 25
        %2076 = vperm.xlu0 %2075, %v1532
        %v2077 = vpop.permute.xlu0 %2076
        %v2079 = vmul.f32 %v1593, %v2073
        %v2080 = vmul.f32 %v1594, %v2073
        %v2081 = vmul.f32 %v1595, %v2077
        %v2082 = vmul.f32 %v1596, %v2077
        %v2083 = vadd.f32 %v2067, %v2079
        %v2084 = vadd.f32 %v2068, %v2080
        %v2085 = vadd.f32 %v2069, %v2081
        %v2086 = vadd.f32 %v2070, %v2082
        %2087 = vset.pattern.permute.xlu0 26
        %2088 = vperm.xlu0 %2087, %v1531
        %v2089 = vpop.permute.xlu0 %2088
        %2091 = vset.pattern.permute.xlu0 26
        %2092 = vperm.xlu0 %2091, %v1532
        %v2093 = vpop.permute.xlu0 %2092
        %v2095 = vmul.f32 %v1609, %v2089
        %v2096 = vmul.f32 %v1610, %v2089
        %v2097 = vmul.f32 %v1611, %v2093
        %v2098 = vmul.f32 %v1612, %v2093
        %v2099 = vadd.f32 %v2083, %v2095
        %v2100 = vadd.f32 %v2084, %v2096
        %v2101 = vadd.f32 %v2085, %v2097
        %v2102 = vadd.f32 %v2086, %v2098
        %2103 = vset.pattern.permute.xlu0 27
        %2104 = vperm.xlu0 %2103, %v1531
        %v2105 = vpop.permute.xlu0 %2104
        %2107 = vset.pattern.permute.xlu0 27
        %2108 = vperm.xlu0 %2107, %v1532
        %v2109 = vpop.permute.xlu0 %2108
        %v2111 = vmul.f32 %v1625, %v2105
        %v2112 = vmul.f32 %v1626, %v2105
        %v2113 = vmul.f32 %v1627, %v2109
        %v2114 = vmul.f32 %v1628, %v2109
        %v2115 = vadd.f32 %v2099, %v2111
        %v2116 = vadd.f32 %v2100, %v2112
        %v2117 = vadd.f32 %v2101, %v2113
        %v2118 = vadd.f32 %v2102, %v2114
        %v2119 = vadd.f32 %v2007, %v2115
        %v2120 = vadd.f32 %v2008, %v2116
        %v2121 = vadd.f32 %v2009, %v2117
        %v2122 = vadd.f32 %v2010, %v2118
        %2123 = vset.pattern.permute.xlu0 28
        %2124 = vperm.xlu0 %2123, %v1531
        %v2125 = vpop.permute.xlu0 %2124
        %2127 = vset.pattern.permute.xlu0 28
        %2128 = vperm.xlu0 %2127, %v1532
        %v2129 = vpop.permute.xlu0 %2128
        %v2131 = vmul.f32 %v1545, %v2125
        %v2132 = vmul.f32 %v1546, %v2125
        %v2133 = vmul.f32 %v1547, %v2129
        %v2134 = vmul.f32 %v1548, %v2129
        %2135 = vset.pattern.permute.xlu0 29
        %2136 = vperm.xlu0 %2135, %v1531
        %v2137 = vpop.permute.xlu0 %2136
        %2139 = vset.pattern.permute.xlu0 29
        %2140 = vperm.xlu0 %2139, %v1532
        %v2141 = vpop.permute.xlu0 %2140
        %v2143 = vmul.f32 %v1561, %v2137
        %v2144 = vmul.f32 %v1562, %v2137
        %v2145 = vmul.f32 %v1563, %v2141
        %v2146 = vmul.f32 %v1564, %v2141
        %v2147 = vadd.f32 %v2131, %v2143
        %v2148 = vadd.f32 %v2132, %v2144
        %v2149 = vadd.f32 %v2133, %v2145
        %v2150 = vadd.f32 %v2134, %v2146
        %2151 = vset.pattern.permute.xlu0 30
        %2152 = vperm.xlu0 %2151, %v1531
        %v2153 = vpop.permute.xlu0 %2152
        %2155 = vset.pattern.permute.xlu0 30
        %2156 = vperm.xlu0 %2155, %v1532
        %v2157 = vpop.permute.xlu0 %2156
        %v2159 = vmul.f32 %v1577, %v2153
        %v2160 = vmul.f32 %v1578, %v2153
        %v2161 = vmul.f32 %v1579, %v2157
        %v2162 = vmul.f32 %v1580, %v2157
        %v2163 = vadd.f32 %v2147, %v2159
        %v2164 = vadd.f32 %v2148, %v2160
        %v2165 = vadd.f32 %v2149, %v2161
        %v2166 = vadd.f32 %v2150, %v2162
        %2167 = vset.pattern.permute.xlu0 31
        %2168 = vperm.xlu0 %2167, %v1531
        %v2169 = vpop.permute.xlu0 %2168
        %2171 = vset.pattern.permute.xlu0 31
        %2172 = vperm.xlu0 %2171, %v1532
        %v2173 = vpop.permute.xlu0 %2172
        %v2175 = vmul.f32 %v1527, %v2169
        %v2176 = vmul.f32 %v1528, %v2169
        %v2177 = vmul.f32 %v1529, %v2173
        %v2178 = vmul.f32 %v1530, %v2173
        %v2179 = vadd.f32 %v2163, %v2175
        %v2180 = vadd.f32 %v2164, %v2176
        %v2181 = vadd.f32 %v2165, %v2177
        %v2182 = vadd.f32 %v2166, %v2178
        %2183 = vset.pattern.permute.xlu0 32
        %2184 = vperm.xlu0 %2183, %v1531
        %v2185 = vpop.permute.xlu0 %2184
        %2187 = vset.pattern.permute.xlu0 32
        %2188 = vperm.xlu0 %2187, %v1532
        %v2189 = vpop.permute.xlu0 %2188
        %v2191 = vmul.f32 %v1593, %v2185
        %v2192 = vmul.f32 %v1594, %v2185
        %v2193 = vmul.f32 %v1595, %v2189
        %v2194 = vmul.f32 %v1596, %v2189
        %v2195 = vadd.f32 %v2179, %v2191
        %v2196 = vadd.f32 %v2180, %v2192
        %v2197 = vadd.f32 %v2181, %v2193
        %v2198 = vadd.f32 %v2182, %v2194
        %2199 = vset.pattern.permute.xlu0 33
        %2200 = vperm.xlu0 %2199, %v1531
        %v2201 = vpop.permute.xlu0 %2200
        %2203 = vset.pattern.permute.xlu0 33
        %2204 = vperm.xlu0 %2203, %v1532
        %v2205 = vpop.permute.xlu0 %2204
        %v2207 = vmul.f32 %v1609, %v2201
        %v2208 = vmul.f32 %v1610, %v2201
        %v2209 = vmul.f32 %v1611, %v2205
        %v2210 = vmul.f32 %v1612, %v2205
        %v2211 = vadd.f32 %v2195, %v2207
        %v2212 = vadd.f32 %v2196, %v2208
        %v2213 = vadd.f32 %v2197, %v2209
        %v2214 = vadd.f32 %v2198, %v2210
        %2215 = vset.pattern.permute.xlu0 34
        %2216 = vperm.xlu0 %2215, %v1531
        %v2217 = vpop.permute.xlu0 %2216
        %2219 = vset.pattern.permute.xlu0 34
        %2220 = vperm.xlu0 %2219, %v1532
        %v2221 = vpop.permute.xlu0 %2220
        %v2223 = vmul.f32 %v1625, %v2217
        %v2224 = vmul.f32 %v1626, %v2217
        %v2225 = vmul.f32 %v1627, %v2221
        %v2226 = vmul.f32 %v1628, %v2221
        %v2227 = vadd.f32 %v2211, %v2223
        %v2228 = vadd.f32 %v2212, %v2224
        %v2229 = vadd.f32 %v2213, %v2225
        %v2230 = vadd.f32 %v2214, %v2226
        %2231 = vrot.lane.b32.xlu0 %v2227, 112
        %v2232 = vpop.permute.xlu0 %2231
        %2233 = vrot.lane.b32.xlu0 %v2229, 112
        %v2234 = vpop.permute.xlu0 %2233
        %2235 = vrot.lane.b32.xlu0 %v2228, 112
        %v2236 = vpop.permute.xlu0 %2235
        %2237 = vrot.lane.b32.xlu0 %v2230, 112
        %v2238 = vpop.permute.xlu0 %2237
        %v2239 = vsel %vm1212, %v2232, %v2236
        %v2240 = vsel %vm1212, %v2234, %v2238
        %v2241 = vsel %vm1212, %v2236, %v2232
        %v2242 = vsel %vm1212, %v2238, %v2234
        %v2243 = vmul.f32 %v2239, %v1220
        %v2244 = vmul.f32 %v2241, %v1224
        %v2245 = vmul.f32 %v2240, %v1220
        %v2246 = vmul.f32 %v2242, %v1224
        %v2247 = vadd.f32 %v2119, %v2243
        %v2248 = vadd.f32 %v2120, %v2244
        %v2249 = vadd.f32 %v2121, %v2245
        %v2250 = vadd.f32 %v2122, %v2246
        %2251 = vset.pattern.permute.xlu0 35
        %2252 = vperm.xlu0 %2251, %v1531
        %v2253 = vpop.permute.xlu0 %2252
        %2255 = vset.pattern.permute.xlu0 35
        %2256 = vperm.xlu0 %2255, %v1532
        %v2257 = vpop.permute.xlu0 %2256
        %v2259 = vmul.f32 %v1545, %v2253
        %v2260 = vmul.f32 %v1546, %v2253
        %v2261 = vmul.f32 %v1547, %v2257
        %v2262 = vmul.f32 %v1548, %v2257
        %2263 = vset.pattern.permute.xlu0 36
        %2264 = vperm.xlu0 %2263, %v1531
        %v2265 = vpop.permute.xlu0 %2264
        %2267 = vset.pattern.permute.xlu0 36
        %2268 = vperm.xlu0 %2267, %v1532
        %v2269 = vpop.permute.xlu0 %2268
        %v2271 = vmul.f32 %v1561, %v2265
        %v2272 = vmul.f32 %v1562, %v2265
        %v2273 = vmul.f32 %v1563, %v2269
        %v2274 = vmul.f32 %v1564, %v2269
        %v2275 = vadd.f32 %v2259, %v2271
        %v2276 = vadd.f32 %v2260, %v2272
        %v2277 = vadd.f32 %v2261, %v2273
        %v2278 = vadd.f32 %v2262, %v2274
        %2279 = vset.pattern.permute.xlu0 37
        %2280 = vperm.xlu0 %2279, %v1531
        %v2281 = vpop.permute.xlu0 %2280
        %2283 = vset.pattern.permute.xlu0 37
        %2284 = vperm.xlu0 %2283, %v1532
        %v2285 = vpop.permute.xlu0 %2284
        %v2287 = vmul.f32 %v1577, %v2281
        %v2288 = vmul.f32 %v1578, %v2281
        %v2289 = vmul.f32 %v1579, %v2285
        %v2290 = vmul.f32 %v1580, %v2285
        %v2291 = vadd.f32 %v2275, %v2287
        %v2292 = vadd.f32 %v2276, %v2288
        %v2293 = vadd.f32 %v2277, %v2289
        %v2294 = vadd.f32 %v2278, %v2290
        %2295 = vset.pattern.permute.xlu0 38
        %2296 = vperm.xlu0 %2295, %v1531
        %v2297 = vpop.permute.xlu0 %2296
        %2299 = vset.pattern.permute.xlu0 38
        %2300 = vperm.xlu0 %2299, %v1532
        %v2301 = vpop.permute.xlu0 %2300
        %v2303 = vmul.f32 %v1527, %v2297
        %v2304 = vmul.f32 %v1528, %v2297
        %v2305 = vmul.f32 %v1529, %v2301
        %v2306 = vmul.f32 %v1530, %v2301
        %v2307 = vadd.f32 %v2291, %v2303
        %v2308 = vadd.f32 %v2292, %v2304
        %v2309 = vadd.f32 %v2293, %v2305
        %v2310 = vadd.f32 %v2294, %v2306
        %2311 = vset.pattern.permute.xlu0 39
        %2312 = vperm.xlu0 %2311, %v1531
        %v2313 = vpop.permute.xlu0 %2312
        %2315 = vset.pattern.permute.xlu0 39
        %2316 = vperm.xlu0 %2315, %v1532
        %v2317 = vpop.permute.xlu0 %2316
        %v2319 = vmul.f32 %v1593, %v2313
        %v2320 = vmul.f32 %v1594, %v2313
        %v2321 = vmul.f32 %v1595, %v2317
        %v2322 = vmul.f32 %v1596, %v2317
        %v2323 = vadd.f32 %v2307, %v2319
        %v2324 = vadd.f32 %v2308, %v2320
        %v2325 = vadd.f32 %v2309, %v2321
        %v2326 = vadd.f32 %v2310, %v2322
        %2327 = vset.pattern.permute.xlu0 40
        %2328 = vperm.xlu0 %2327, %v1531
        %v2329 = vpop.permute.xlu0 %2328
        %2331 = vset.pattern.permute.xlu0 40
        %2332 = vperm.xlu0 %2331, %v1532
        %v2333 = vpop.permute.xlu0 %2332
        %v2335 = vmul.f32 %v1609, %v2329
        %v2336 = vmul.f32 %v1610, %v2329
        %v2337 = vmul.f32 %v1611, %v2333
        %v2338 = vmul.f32 %v1612, %v2333
        %v2339 = vadd.f32 %v2323, %v2335
        %v2340 = vadd.f32 %v2324, %v2336
        %v2341 = vadd.f32 %v2325, %v2337
        %v2342 = vadd.f32 %v2326, %v2338
        %2343 = vset.pattern.permute.xlu0 41
        %2344 = vperm.xlu0 %2343, %v1531
        %v2345 = vpop.permute.xlu0 %2344
        %2347 = vset.pattern.permute.xlu0 41
        %2348 = vperm.xlu0 %2347, %v1532
        %v2349 = vpop.permute.xlu0 %2348
        %v2351 = vmul.f32 %v1625, %v2345
        %v2352 = vmul.f32 %v1626, %v2345
        %v2353 = vmul.f32 %v1627, %v2349
        %v2354 = vmul.f32 %v1628, %v2349
        %v2355 = vadd.f32 %v2339, %v2351
        %v2356 = vadd.f32 %v2340, %v2352
        %v2357 = vadd.f32 %v2341, %v2353
        %v2358 = vadd.f32 %v2342, %v2354
        %2359 = vrot.lane.b32.xlu0 %v2355, 96
        %v2360 = vpop.permute.xlu0 %2359
        %2361 = vrot.lane.b32.xlu0 %v2357, 96
        %v2362 = vpop.permute.xlu0 %2361
        %2363 = vrot.lane.b32.xlu0 %v2356, 96
        %v2364 = vpop.permute.xlu0 %2363
        %2365 = vrot.lane.b32.xlu0 %v2358, 96
        %v2366 = vpop.permute.xlu0 %2365
        %v2367 = vsel %vm1349, %v2360, %v2364
        %v2368 = vsel %vm1349, %v2362, %v2366
        %v2369 = vsel %vm1349, %v2364, %v2360
        %v2370 = vsel %vm1349, %v2366, %v2362
        %v2371 = vmul.f32 %v2367, %v1357
        %v2372 = vmul.f32 %v2369, %v1361
        %v2373 = vmul.f32 %v2368, %v1357
        %v2374 = vmul.f32 %v2370, %v1361
        %v2375 = vadd.f32 %v2247, %v2371
        %v2376 = vadd.f32 %v2248, %v2372
        %v2377 = vadd.f32 %v2249, %v2373
        %v2378 = vadd.f32 %v2250, %v2374
        %2379 = vset.pattern.permute.xlu0 42
        %2380 = vperm.xlu0 %2379, %v1531
        %v2381 = vpop.permute.xlu0 %2380
        %2383 = vset.pattern.permute.xlu0 42
        %2384 = vperm.xlu0 %2383, %v1532
        %v2385 = vpop.permute.xlu0 %2384
        %v2387 = vmul.f32 %v1545, %v2381
        %v2388 = vmul.f32 %v1546, %v2381
        %v2389 = vmul.f32 %v1547, %v2385
        %v2390 = vmul.f32 %v1548, %v2385
        %2391 = vset.pattern.permute.xlu0 43
        %2392 = vperm.xlu0 %2391, %v1531
        %v2393 = vpop.permute.xlu0 %2392
        %2395 = vset.pattern.permute.xlu0 43
        %2396 = vperm.xlu0 %2395, %v1532
        %v2397 = vpop.permute.xlu0 %2396
        %v2399 = vmul.f32 %v1561, %v2393
        %v2400 = vmul.f32 %v1562, %v2393
        %v2401 = vmul.f32 %v1563, %v2397
        %v2402 = vmul.f32 %v1564, %v2397
        %v2403 = vadd.f32 %v2387, %v2399
        %v2404 = vadd.f32 %v2388, %v2400
        %v2405 = vadd.f32 %v2389, %v2401
        %v2406 = vadd.f32 %v2390, %v2402
        %2407 = vset.pattern.permute.xlu0 44
        %2408 = vperm.xlu0 %2407, %v1531
        %v2409 = vpop.permute.xlu0 %2408
        %2411 = vset.pattern.permute.xlu0 44
        %2412 = vperm.xlu0 %2411, %v1532
        %v2413 = vpop.permute.xlu0 %2412
        %v2415 = vmul.f32 %v1577, %v2409
        %v2416 = vmul.f32 %v1578, %v2409
        %v2417 = vmul.f32 %v1579, %v2413
        %v2418 = vmul.f32 %v1580, %v2413
        %v2419 = vadd.f32 %v2403, %v2415
        %v2420 = vadd.f32 %v2404, %v2416
        %v2421 = vadd.f32 %v2405, %v2417
        %v2422 = vadd.f32 %v2406, %v2418
        %2423 = vset.pattern.permute.xlu0 45
        %2424 = vperm.xlu0 %2423, %v1531
        %v2425 = vpop.permute.xlu0 %2424
        %2427 = vset.pattern.permute.xlu0 45
        %2428 = vperm.xlu0 %2427, %v1532
        %v2429 = vpop.permute.xlu0 %2428
        %v2431 = vmul.f32 %v1527, %v2425
        %v2432 = vmul.f32 %v1528, %v2425
        %v2433 = vmul.f32 %v1529, %v2429
        %v2434 = vmul.f32 %v1530, %v2429
        %v2435 = vadd.f32 %v2419, %v2431
        %v2436 = vadd.f32 %v2420, %v2432
        %v2437 = vadd.f32 %v2421, %v2433
        %v2438 = vadd.f32 %v2422, %v2434
        %2439 = vset.pattern.permute.xlu0 46
        %2440 = vperm.xlu0 %2439, %v1531
        %v2441 = vpop.permute.xlu0 %2440
        %2443 = vset.pattern.permute.xlu0 46
        %2444 = vperm.xlu0 %2443, %v1532
        %v2445 = vpop.permute.xlu0 %2444
        %v2447 = vmul.f32 %v1593, %v2441
        %v2448 = vmul.f32 %v1594, %v2441
        %v2449 = vmul.f32 %v1595, %v2445
        %v2450 = vmul.f32 %v1596, %v2445
        %v2451 = vadd.f32 %v2435, %v2447
        %v2452 = vadd.f32 %v2436, %v2448
        %v2453 = vadd.f32 %v2437, %v2449
        %v2454 = vadd.f32 %v2438, %v2450
        %2455 = vset.pattern.permute.xlu0 47
        %2456 = vperm.xlu0 %2455, %v1531
        %v2457 = vpop.permute.xlu0 %2456
        %2459 = vset.pattern.permute.xlu0 47
        %2460 = vperm.xlu0 %2459, %v1532
        %v2461 = vpop.permute.xlu0 %2460
        %v2463 = vmul.f32 %v1609, %v2457
        %v2464 = vmul.f32 %v1610, %v2457
        %v2465 = vmul.f32 %v1611, %v2461
        %v2466 = vmul.f32 %v1612, %v2461
        %v2467 = vadd.f32 %v2451, %v2463
        %v2468 = vadd.f32 %v2452, %v2464
        %v2469 = vadd.f32 %v2453, %v2465
        %v2470 = vadd.f32 %v2454, %v2466
        %2471 = vset.pattern.permute.xlu0 48
        %2472 = vperm.xlu0 %2471, %v1531
        %v2473 = vpop.permute.xlu0 %2472
        %2475 = vset.pattern.permute.xlu0 48
        %2476 = vperm.xlu0 %2475, %v1532
        %v2477 = vpop.permute.xlu0 %2476
        %v2479 = vmul.f32 %v1625, %v2473
        %v2480 = vmul.f32 %v1626, %v2473
        %v2481 = vmul.f32 %v1627, %v2477
        %v2482 = vmul.f32 %v1628, %v2477
        %v2483 = vadd.f32 %v2467, %v2479
        %v2484 = vadd.f32 %v2468, %v2480
        %v2485 = vadd.f32 %v2469, %v2481
        %v2486 = vadd.f32 %v2470, %v2482
        %2487 = vrot.lane.b32.xlu0 %v2483, 80
        %v2488 = vpop.permute.xlu0 %2487
        %2489 = vrot.lane.b32.xlu0 %v2485, 80
        %v2490 = vpop.permute.xlu0 %2489
        %2491 = vrot.lane.b32.xlu0 %v2484, 80
        %v2492 = vpop.permute.xlu0 %2491
        %2493 = vrot.lane.b32.xlu0 %v2486, 80
        %v2494 = vpop.permute.xlu0 %2493
        %v2495 = vsel %vm1486, %v2488, %v2492
        %v2496 = vsel %vm1486, %v2490, %v2494
        %v2497 = vsel %vm1486, %v2492, %v2488
        %v2498 = vsel %vm1486, %v2494, %v2490
        %v2499 = vmul.f32 %v2495, %v1494
        %v2500 = vmul.f32 %v2497, %v1498
        %v2501 = vmul.f32 %v2496, %v1494
        %v2502 = vmul.f32 %v2498, %v1498
        %v2503 = vadd.f32 %v2375, %v2499
        %v2504 = vadd.f32 %v2376, %v2500
        %v2505 = vadd.f32 %v2377, %v2501
        %v2506 = vadd.f32 %v2378, %v2502
        %v2507 = vld [vmem:[%s4 + $0x10] sm:$0xff]
        %v2508 = vld [vmem:[%s4 + $0x18] sm:$0xff]
        %2510 = vset.pattern.permute.xlu0 0
        %2511 = vperm.xlu0 %2510, %v2507
        %v2512 = vpop.permute.xlu0 %2511
        %2515 = vset.pattern.permute.xlu0 0
        %2516 = vperm.xlu0 %2515, %v2508
        %v2517 = vpop.permute.xlu0 %2516
        %v2519 = vadd.f32 %v2503, %v2512
        %v2520 = vadd.f32 %v2504, %v2512
        %v2521 = vadd.f32 %v2505, %v2517
        %v2522 = vadd.f32 %v2506, %v2517
        %2523 = vst [vmem:[#allocation2 + $0x20] sm:$0xff] %v2519
        %2524 = vst [vmem:[#allocation2 + $0x28] sm:$0xff] %v2520
        %2525 = vst [vmem:[#allocation2 + $0x30] sm:$0xff] %v2521
        %2526 = vst [vmem:[#allocation2 + $0x38] sm:$0xff] %v2522
        %v2527 = vld [vmem:[#allocation2] sm:$0xff]
        %v2528 = vld [vmem:[#allocation2 + $0x8] sm:$0xff]
        %v2529 = vld [vmem:[#allocation2 + $0x10] sm:$0xff]
        %v2530 = vld [vmem:[#allocation2 + $0x18] sm:$0xff]
        %v2531 = vld [vmem:[#allocation2 + $0x20] sm:$0xff]
        %v2532 = vld [vmem:[#allocation2 + $0x28] sm:$0xff]
        %v2533 = vld [vmem:[#allocation2 + $0x30] sm:$0xff]
        %v2534 = vld [vmem:[#allocation2 + $0x38] sm:$0xff]
        %v2535 = vadd.f32 %v2527, %v2529
        %v2536 = vadd.f32 %v2535, %v2531
        %v2537 = vadd.f32 %v2536, %v2533
        %v2538 = vrot.slane %v2537, 4
        %v2539 = vadd.f32 %v2537, %v2538
        %v2540 = vrot.slane %v2539, 2
        %v2541 = vadd.f32 %v2539, %v2540
        %v2542 = vrot.slane %v2541, 1
        %v2543 = vadd.f32 %v2541, %v2542
        %v2544 = vadd.f32 %v2528, %v2530
        %v2545 = vadd.f32 %v2544, %v2532
        %v2546 = vadd.f32 %v2545, %v2534
        %v2547 = vrot.slane %v2546, 4
        %v2548 = vadd.f32 %v2546, %v2547
        %v2549 = vrot.slane %v2548, 2
        %v2550 = vadd.f32 %v2548, %v2549
        %v2551 = vrot.slane %v2550, 1
        %v2552 = vadd.f32 %v2550, %v2551
        %v2553 = vrcp.pop 32.0
        %v2554 = vmul.f32 %v2543, %v2553
        %v2555 = vmul.f32 %v2552, %v2553
        %v2556 = vsub.f32 %v2527, %v2554
        %v2557 = vsub.f32 %v2528, %v2555
        %v2558 = vsub.f32 %v2529, %v2554
        %v2559 = vsub.f32 %v2530, %v2555
        %v2560 = vsub.f32 %v2531, %v2554
        %v2561 = vsub.f32 %v2532, %v2555
        %v2562 = vsub.f32 %v2533, %v2554
        %v2563 = vsub.f32 %v2534, %v2555
        %v2564 = vmul.f32 %v2556, %v2556
        %v2565 = vmul.f32 %v2557, %v2557
        %v2566 = vmul.f32 %v2558, %v2558
        %v2567 = vmul.f32 %v2559, %v2559
        %v2568 = vmul.f32 %v2560, %v2560
        %v2569 = vmul.f32 %v2561, %v2561
        %v2570 = vmul.f32 %v2562, %v2562
        %v2571 = vmul.f32 %v2563, %v2563
        %v2572 = vadd.f32 %v2564, %v2566
        %v2573 = vadd.f32 %v2572, %v2568
        %v2574 = vadd.f32 %v2573, %v2570
        %v2575 = vrot.slane %v2574, 4
        %v2576 = vadd.f32 %v2574, %v2575
        %v2577 = vrot.slane %v2576, 2
        %v2578 = vadd.f32 %v2576, %v2577
        %v2579 = vrot.slane %v2578, 1
        %v2580 = vadd.f32 %v2578, %v2579
        %v2581 = vadd.f32 %v2565, %v2567
        %v2582 = vadd.f32 %v2581, %v2569
        %v2583 = vadd.f32 %v2582, %v2571
        %v2584 = vrot.slane %v2583, 4
        %v2585 = vadd.f32 %v2583, %v2584
        %v2586 = vrot.slane %v2585, 2
        %v2587 = vadd.f32 %v2585, %v2586
        %v2588 = vrot.slane %v2587, 1
        %v2589 = vadd.f32 %v2587, %v2588
        %v2590 = vmul.f32 %v2580, %v2553
        %v2591 = vmul.f32 %v2589, %v2553
        %v2592 = vadd.f32 %v2590, 1e-06
        %v2593 = vadd.f32 %v2591, 1e-06
        %v2594 = vrsqrt.pop %v2592
        %v2595 = vrsqrt.pop %v2593
        %v2596 = vmul.f32 %v2556, %v2594
        %v2597 = vmul.f32 %v2557, %v2595
        %v2598 = vmul.f32 %v2558, %v2594
        %v2599 = vmul.f32 %v2559, %v2595
        %v2600 = vmul.f32 %v2560, %v2594
        %v2601 = vmul.f32 %v2561, %v2595
        %v2602 = vmul.f32 %v2562, %v2594
        %v2603 = vmul.f32 %v2563, %v2595
        %v2604 = vld [vmem:[%s5] sm:$0xff]
        %v2605 = vld [vmem:[%s5 + $0x8] sm:$0xff]
        %v2606 = vld [vmem:[%s5 + $0x10] sm:$0xff]
        %v2607 = vld [vmem:[%s5 + $0x18] sm:$0xff]
        %2609 = vset.pattern.permute.xlu0 0
        %2610 = vperm.xlu0 %2609, %v2604
        %v2611 = vpop.permute.xlu0 %2610
        %2614 = vset.pattern.permute.xlu0 0
        %2615 = vperm.xlu0 %2614, %v2605
        %v2616 = vpop.permute.xlu0 %2615
        %2619 = vset.pattern.permute.xlu0 0
        %2620 = vperm.xlu0 %2619, %v2606
        %v2621 = vpop.permute.xlu0 %2620
        %2624 = vset.pattern.permute.xlu0 0
        %2625 = vperm.xlu0 %2624, %v2607
        %v2626 = vpop.permute.xlu0 %2625
        %v2628 = vmul.f32 %v2596, %v2611
        %v2629 = vmul.f32 %v2597, %v2611
        %v2630 = vmul.f32 %v2598, %v2616
        %v2631 = vmul.f32 %v2599, %v2616
        %v2632 = vmul.f32 %v2600, %v2621
        %v2633 = vmul.f32 %v2601, %v2621
        %v2634 = vmul.f32 %v2602, %v2626
        %v2635 = vmul.f32 %v2603, %v2626
        %v2636 = vld [vmem:[%s6] sm:$0xff]
        %v2637 = vld [vmem:[%s6 + $0x8] sm:$0xff]
        %v2638 = vld [vmem:[%s6 + $0x10] sm:$0xff]
        %v2639 = vld [vmem:[%s6 + $0x18] sm:$0xff]
        %2641 = vset.pattern.permute.xlu0 0
        %2642 = vperm.xlu0 %2641, %v2636
        %v2643 = vpop.permute.xlu0 %2642
        %2646 = vset.pattern.permute.xlu0 0
        %2647 = vperm.xlu0 %2646, %v2637
        %v2648 = vpop.permute.xlu0 %2647
        %2651 = vset.pattern.permute.xlu0 0
        %2652 = vperm.xlu0 %2651, %v2638
        %v2653 = vpop.permute.xlu0 %2652
        %2656 = vset.pattern.permute.xlu0 0
        %2657 = vperm.xlu0 %2656, %v2639
        %v2658 = vpop.permute.xlu0 %2657
        %v2660 = vadd.f32 %v2628, %v2643
        %v2661 = vadd.f32 %v2629, %v2643
        %v2662 = vadd.f32 %v2630, %v2648
        %v2663 = vadd.f32 %v2631, %v2648
        %v2664 = vadd.f32 %v2632, %v2653
        %v2665 = vadd.f32 %v2633, %v2653
        %v2666 = vadd.f32 %v2634, %v2658
        %v2667 = vadd.f32 %v2635, %v2658
        %v2668 = vld [vmem:[%s7] sm:$0xf]
        %v2669 = vld [vmem:[%s7 + $0x4] sm:$0xf]
        %v2670 = vld [vmem:[%s7 + $0x8] sm:$0xf]
        %v2671 = vld [vmem:[%s7 + $0xc] sm:$0xf]
        %v2672 = vld [vmem:[%s7 + $0x10] sm:$0xf]
        %v2673 = vld [vmem:[%s7 + $0x14] sm:$0xf]
        %v2674 = vld [vmem:[%s7 + $0x18] sm:$0xf]
        %v2675 = vld [vmem:[%s7 + $0x1c] sm:$0xf]
        %v2676 = vld [vmem:[%s7 + $0x20] sm:$0xf]
        %v2677 = vld [vmem:[%s7 + $0x24] sm:$0xf]
        %v2678 = vld [vmem:[%s7 + $0x28] sm:$0xf]
        %v2679 = vld [vmem:[%s7 + $0x2c] sm:$0xf]
        %v2680 = vld [vmem:[%s7 + $0x30] sm:$0xf]
        %v2681 = vld [vmem:[%s7 + $0x34] sm:$0xf]
        %v2682 = vld [vmem:[%s7 + $0x38] sm:$0xf]
        %v2683 = vld [vmem:[%s7 + $0x3c] sm:$0xf]
        %v2684 = vpack.c.bf16 %v2662, %v2660
        %v2685 = vpack.c.bf16 %v2663, %v2661
        %v2686 = vpack.c.bf16 %v2666, %v2664
        %v2687 = vpack.c.bf16 %v2667, %v2665
        %v2688 = vld [vmem:[%s8] sm:$0xff]
        %v2689 = vld [vmem:[%s8 + $0x8] sm:$0xff]
        %v2690 = vld [vmem:[%s8 + $0x10] sm:$0xff]
        %v2691 = vld [vmem:[%s8 + $0x18] sm:$0xff]
        %v2692 = vld [vmem:[%s8 + $0x20] sm:$0xff]
        %v2693 = vld [vmem:[%s8 + $0x28] sm:$0xff]
        %v2694 = vld [vmem:[%s8 + $0x30] sm:$0xff]
        %v2695 = vld [vmem:[%s8 + $0x38] sm:$0xff]
        %v2696 = vld [vmem:[%s8 + $0x40] sm:$0xff]
        %v2697 = vld [vmem:[%s8 + $0x48] sm:$0xff]
        %v2698 = vld [vmem:[%s8 + $0x50] sm:$0xff]
        %v2699 = vld [vmem:[%s8 + $0x58] sm:$0xff]
        %v2700 = vld [vmem:[%s8 + $0x60] sm:$0xff]
        %v2701 = vld [vmem:[%s8 + $0x68] sm:$0xff]
        %v2702 = vld [vmem:[%s8 + $0x70] sm:$0xff]
        %v2703 = vld [vmem:[%s8 + $0x78] sm:$0xff]
        %2705 = vset.pattern.permute.xlu0 0
        %2706 = vperm.xlu0 %2705, %v2688
        %v2707 = vpop.permute.xlu0 %2706
        %2710 = vset.pattern.permute.xlu0 0
        %2711 = vperm.xlu0 %2710, %v2689
        %v2712 = vpop.permute.xlu0 %2711
        %2715 = vset.pattern.permute.xlu0 0
        %2716 = vperm.xlu0 %2715, %v2690
        %v2717 = vpop.permute.xlu0 %2716
        %2720 = vset.pattern.permute.xlu0 0
        %2721 = vperm.xlu0 %2720, %v2691
        %v2722 = vpop.permute.xlu0 %2721
        %2725 = vset.pattern.permute.xlu0 0
        %2726 = vperm.xlu0 %2725, %v2692
        %v2727 = vpop.permute.xlu0 %2726
        %2730 = vset.pattern.permute.xlu0 0
        %2731 = vperm.xlu0 %2730, %v2693
        %v2732 = vpop.permute.xlu0 %2731
        %2735 = vset.pattern.permute.xlu0 0
        %2736 = vperm.xlu0 %2735, %v2694
        %v2737 = vpop.permute.xlu0 %2736
        %2740 = vset.pattern.permute.xlu0 0
        %2741 = vperm.xlu0 %2740, %v2695
        %v2742 = vpop.permute.xlu0 %2741
        %2745 = vset.pattern.permute.xlu0 0
        %2746 = vperm.xlu0 %2745, %v2696
        %v2747 = vpop.permute.xlu0 %2746
        %2750 = vset.pattern.permute.xlu0 0
        %2751 = vperm.xlu0 %2750, %v2697
        %v2752 = vpop.permute.xlu0 %2751
        %2755 = vset.pattern.permute.xlu0 0
        %2756 = vperm.xlu0 %2755, %v2698
        %v2757 = vpop.permute.xlu0 %2756
        %2760 = vset.pattern.permute.xlu0 0
        %2761 = vperm.xlu0 %2760, %v2699
        %v2762 = vpop.permute.xlu0 %2761
        %2765 = vset.pattern.permute.xlu0 0
        %2766 = vperm.xlu0 %2765, %v2700
        %v2767 = vpop.permute.xlu0 %2766
        %2770 = vset.pattern.permute.xlu0 0
        %2771 = vperm.xlu0 %2770, %v2701
        %v2772 = vpop.permute.xlu0 %2771
        %2775 = vset.pattern.permute.xlu0 0
        %2776 = vperm.xlu0 %2775, %v2702
        %v2777 = vpop.permute.xlu0 %2776
        %2780 = vset.pattern.permute.xlu0 0
        %2781 = vperm.xlu0 %2780, %v2703
        %v2782 = vpop.permute.xlu0 %2781
        %v2800 = vunpack.c.l.b16 %v2668
        %v2801 = vunpack.c.l.b16 %v2669
        %v2802 = vunpack.c.l.b16 %v2670
        %v2803 = vunpack.c.l.b16 %v2671
        %v2804 = vunpack.c.l.b16 %v2672
        %v2805 = vunpack.c.l.b16 %v2673
        %v2806 = vunpack.c.l.b16 %v2674
        %v2807 = vunpack.c.l.b16 %v2675
        %v2808 = vunpack.c.l.b16 %v2676
        %v2809 = vunpack.c.l.b16 %v2677
        %v2810 = vunpack.c.l.b16 %v2678
        %v2811 = vunpack.c.l.b16 %v2679
        %v2812 = vunpack.c.l.b16 %v2680
        %v2813 = vunpack.c.l.b16 %v2681
        %v2814 = vunpack.c.l.b16 %v2682
        %v2815 = vunpack.c.l.b16 %v2683
        %v2816 = vpack.c.b16 %v2801, %v2800
        %v2817 = vpack.c.b16 %v2803, %v2802
        %v2818 = vpack.c.b16 %v2805, %v2804
        %v2819 = vpack.c.b16 %v2807, %v2806
        %v2820 = vpack.c.b16 %v2809, %v2808
        %v2821 = vpack.c.b16 %v2811, %v2810
        %v2822 = vpack.c.b16 %v2813, %v2812
        %v2823 = vpack.c.b16 %v2815, %v2814
        %vm2824 = vcmask 261120
        %v2826 = vsel %vm2824, %v2816, 0
        %v2829 = vsel %vm2824, %v2817, 0
        %v2832 = vsel %vm2824, %v2818, 0
        %v2835 = vsel %vm2824, %v2819, 0
        %v2838 = vsel %vm2824, %v2820, 0
        %v2841 = vsel %vm2824, %v2821, 0
        %v2844 = vsel %vm2824, %v2822, 0
        %v2847 = vsel %vm2824, %v2823, 0
        %2849 = vmatprep.subr.bf16.mxu0 0
        %2850 = vmatpush1.bf16.msra.mxu0 0
        %2851 = vmatprep.subr.bf16.mxu0 0
        %2852 = vmatpush1.bf16.msra.mxu0 0
        %2853 = vmatprep.subr.bf16.mxu0 0
        %2854 = vmatpush1.bf16.msra.mxu0 0
        %2855 = vmatprep.subr.bf16.mxu0 0
        %2856 = vmatpush1.bf16.msra.mxu0 0
        %2857 = vmatprep.subr.bf16.mxu0 0
        %2858 = vmatpush1.bf16.msra.mxu0 0
        %2859 = vmatprep.subr.bf16.mxu0 0
        %2860 = vmatpush1.bf16.msra.mxu0 0
        %2861 = vmatprep.subr.bf16.mxu0 %v2687
        %2862 = vmatpush1.bf16.msra.mxu0 %v2686
        %2863 = vmatprep.subr.bf16.mxu0 %v2685
        %2864 = vmatpush1.bf16.msra.mxu0 %v2684
        %2865 = vmatprep.subr.bf16.mxu0 0
        %2866 = vmatpush2.bf16.msra.mxu0 0
        %2867 = vmatprep.subr.bf16.mxu0 0
        %2868 = vmatpush2.bf16.msra.mxu0 0
        %2869 = vmatprep.subr.bf16.mxu0 0
        %2870 = vmatpush2.bf16.msra.mxu0 0
        %2871 = vmatprep.subr.bf16.mxu0 0
        %2872 = vmatpush2.bf16.msra.mxu0 0
        %2873 = vmatprep.subr.bf16.mxu0 0
        %2874 = vmatpush2.bf16.msra.mxu0 0
        %2875 = vmatprep.subr.bf16.mxu0 0
        %2876 = vmatpush2.bf16.msra.mxu0 0
        %2877 = vmatprep.subr.bf16.mxu0 0
        %2878 = vmatpush2.bf16.msra.mxu0 0
        %2879 = vmatprep.subr.bf16.mxu0 0
        %2880 = vmatpush2.bf16.msra.mxu0 0
        %2881 = vmatprep.mubr.bf16.mxu0 0
        %2882 = vmatmul.mubr.bf16.gmra.mxu0 %v2826
        %v2883 = vpop.f32.mrf.mxu0
        %v2884 = vadd.f32 %v2707, %v2883
        %v2885 = vpop.f32.mrf.mxu0
        %v2886 = vadd.f32 %v2707, %v2885
        %v2887 = vpop.f32.mrf.mxu0
        %v2888 = vadd.f32 %v2712, %v2887
        %v2889 = vpop.f32.mrf.mxu0
        %v2890 = vadd.f32 %v2712, %v2889
        %2891 = vmatprep.mubr.bf16.mxu0 0
        %2892 = vmatmul.mubr.bf16.gmra.mxu0 %v2829
        %v2893 = vpop.f32.mrf.mxu0
        %v2894 = vadd.f32 %v2717, %v2893
        %v2895 = vpop.f32.mrf.mxu0
        %v2896 = vadd.f32 %v2717, %v2895
        %v2897 = vpop.f32.mrf.mxu0
        %v2898 = vadd.f32 %v2722, %v2897
        %v2899 = vpop.f32.mrf.mxu0
        %v2900 = vadd.f32 %v2722, %v2899
        %2901 = vmatprep.mubr.bf16.mxu0 0
        %2902 = vmatmul.mubr.bf16.gmra.mxu0 %v2832
        %v2903 = vpop.f32.mrf.mxu0
        %v2904 = vadd.f32 %v2727, %v2903
        %v2905 = vpop.f32.mrf.mxu0
        %v2906 = vadd.f32 %v2727, %v2905
        %v2907 = vpop.f32.mrf.mxu0
        %v2908 = vadd.f32 %v2732, %v2907
        %v2909 = vpop.f32.mrf.mxu0
        %v2910 = vadd.f32 %v2732, %v2909
        %2911 = vmatprep.mubr.bf16.mxu0 0
        %2912 = vmatmul.mubr.bf16.gmra.mxu0 %v2835
        %v2913 = vpop.f32.mrf.mxu0
        %v2914 = vadd.f32 %v2737, %v2913
        %v2915 = vpop.f32.mrf.mxu0
        %v2916 = vadd.f32 %v2737, %v2915
        %v2917 = vpop.f32.mrf.mxu0
        %v2918 = vadd.f32 %v2742, %v2917
        %v2919 = vpop.f32.mrf.mxu0
        %v2920 = vadd.f32 %v2742, %v2919
        %2921 = vmatprep.mubr.bf16.mxu0 0
        %2922 = vmatmul.mubr.bf16.gmra.mxu0 %v2838
        %v2923 = vpop.f32.mrf.mxu0
        %v2924 = vadd.f32 %v2747, %v2923
        %v2925 = vpop.f32.mrf.mxu0
        %v2926 = vadd.f32 %v2747, %v2925
        %v2927 = vpop.f32.mrf.mxu0
        %v2928 = vadd.f32 %v2752, %v2927
        %v2929 = vpop.f32.mrf.mxu0
        %v2930 = vadd.f32 %v2752, %v2929
        %2931 = vmatprep.mubr.bf16.mxu0 0
        %2932 = vmatmul.mubr.bf16.gmra.mxu0 %v2841
        %v2933 = vpop.f32.mrf.mxu0
        %v2934 = vadd.f32 %v2757, %v2933
        %v2935 = vpop.f32.mrf.mxu0
        %v2936 = vadd.f32 %v2757, %v2935
        %v2937 = vpop.f32.mrf.mxu0
        %v2938 = vadd.f32 %v2762, %v2937
        %v2939 = vpop.f32.mrf.mxu0
        %v2940 = vadd.f32 %v2762, %v2939
        %2941 = vmatprep.mubr.bf16.mxu0 0
        %2942 = vmatmul.mubr.bf16.gmra.mxu0 %v2844
        %v2943 = vpop.f32.mrf.mxu0
        %v2944 = vadd.f32 %v2767, %v2943
        %v2945 = vpop.f32.mrf.mxu0
        %v2946 = vadd.f32 %v2767, %v2945
        %v2947 = vpop.f32.mrf.mxu0
        %v2948 = vadd.f32 %v2772, %v2947
        %v2949 = vpop.f32.mrf.mxu0
        %v2950 = vadd.f32 %v2772, %v2949
        %2951 = vmatprep.mubr.bf16.mxu0 0
        %2952 = vmatmul.mubr.bf16.gmra.mxu0 %v2847
        %v2953 = vpop.f32.mrf.mxu0
        %v2954 = vadd.f32 %v2777, %v2953
        %v2955 = vpop.f32.mrf.mxu0
        %v2956 = vadd.f32 %v2777, %v2955
        %v2957 = vpop.f32.mrf.mxu0
        %v2958 = vadd.f32 %v2782, %v2957
        %v2959 = vpop.f32.mrf.mxu0
        %v2960 = vadd.f32 %v2782, %v2959
        %2961 = vdwg.mxu0
        %v2962 = vmul.f32 %v2884, %v2884
        %v2963 = vmul.f32 %v2886, %v2886
        %v2964 = vmul.f32 %v2888, %v2888
        %v2965 = vmul.f32 %v2890, %v2890
        %v2966 = vmul.f32 %v2894, %v2894
        %v2967 = vmul.f32 %v2896, %v2896
        %v2968 = vmul.f32 %v2898, %v2898
        %v2969 = vmul.f32 %v2900, %v2900
        %v2970 = vmul.f32 %v2904, %v2904
        %v2971 = vmul.f32 %v2906, %v2906
        %v2972 = vmul.f32 %v2908, %v2908
        %v2973 = vmul.f32 %v2910, %v2910
        %v2974 = vmul.f32 %v2914, %v2914
        %v2975 = vmul.f32 %v2916, %v2916
        %v2976 = vmul.f32 %v2918, %v2918
        %v2977 = vmul.f32 %v2920, %v2920
        %v2978 = vmul.f32 %v2924, %v2924
        %v2979 = vmul.f32 %v2926, %v2926
        %v2980 = vmul.f32 %v2928, %v2928
        %v2981 = vmul.f32 %v2930, %v2930
        %v2982 = vmul.f32 %v2934, %v2934
        %v2983 = vmul.f32 %v2936, %v2936
        %v2984 = vmul.f32 %v2938, %v2938
        %v2985 = vmul.f32 %v2940, %v2940
        %v2986 = vmul.f32 %v2944, %v2944
        %v2987 = vmul.f32 %v2946, %v2946
        %v2988 = vmul.f32 %v2948, %v2948
        %v2989 = vmul.f32 %v2950, %v2950
        %v2990 = vmul.f32 %v2954, %v2954
        %v2991 = vmul.f32 %v2956, %v2956
        %v2992 = vmul.f32 %v2958, %v2958
        %v2993 = vmul.f32 %v2960, %v2960
        %v2994 = vmul.f32 %v2884, %v2962
        %v2995 = vmul.f32 %v2886, %v2963
        %v2996 = vmul.f32 %v2888, %v2964
        %v2997 = vmul.f32 %v2890, %v2965
        %v2998 = vmul.f32 %v2894, %v2966
        %v2999 = vmul.f32 %v2896, %v2967
        %v3000 = vmul.f32 %v2898, %v2968
        %v3001 = vmul.f32 %v2900, %v2969
        %v3002 = vmul.f32 %v2904, %v2970
        %v3003 = vmul.f32 %v2906, %v2971
        %v3004 = vmul.f32 %v2908, %v2972
        %v3005 = vmul.f32 %v2910, %v2973
        %v3006 = vmul.f32 %v2914, %v2974
        %v3007 = vmul.f32 %v2916, %v2975
        %v3008 = vmul.f32 %v2918, %v2976
        %v3009 = vmul.f32 %v2920, %v2977
        %v3010 = vmul.f32 %v2924, %v2978
        %v3011 = vmul.f32 %v2926, %v2979
        %v3012 = vmul.f32 %v2928, %v2980
        %v3013 = vmul.f32 %v2930, %v2981
        %v3014 = vmul.f32 %v2934, %v2982
        %v3015 = vmul.f32 %v2936, %v2983
        %v3016 = vmul.f32 %v2938, %v2984
        %v3017 = vmul.f32 %v2940, %v2985
        %v3018 = vmul.f32 %v2944, %v2986
        %v3019 = vmul.f32 %v2946, %v2987
        %v3020 = vmul.f32 %v2948, %v2988
        %v3021 = vmul.f32 %v2950, %v2989
        %v3022 = vmul.f32 %v2954, %v2990
        %v3023 = vmul.f32 %v2956, %v2991
        %v3024 = vmul.f32 %v2958, %v2992
        %v3025 = vmul.f32 %v2960, %v2993
        %v3026 = vmul.f32 %v2994, 0.044715
        %v3027 = vmul.f32 %v2995, 0.044715
        %v3028 = vmul.f32 %v2996, 0.044715
        %v3029 = vmul.f32 %v2997, 0.044715
        %v3030 = vmul.f32 %v2998, 0.044715
        %v3031 = vmul.f32 %v2999, 0.044715
        %v3032 = vmul.f32 %v3000, 0.044715
        %v3033 = vmul.f32 %v3001, 0.044715
        %v3034 = vmul.f32 %v3002, 0.044715
        %v3035 = vmul.f32 %v3003, 0.044715
        %v3036 = vmul.f32 %v3004, 0.044715
        %v3037 = vmul.f32 %v3005, 0.044715
        %v3038 = vmul.f32 %v3006, 0.044715
        %v3039 = vmul.f32 %v3007, 0.044715
        %v3040 = vmul.f32 %v3008, 0.044715
        %v3041 = vmul.f32 %v3009, 0.044715
        %v3042 = vmul.f32 %v3010, 0.044715
        %v3043 = vmul.f32 %v3011, 0.044715
        %v3044 = vmul.f32 %v3012, 0.044715
        %v3045 = vmul.f32 %v3013, 0.044715
        %v3046 = vmul.f32 %v3014, 0.044715
        %v3047 = vmul.f32 %v3015, 0.044715
        %v3048 = vmul.f32 %v3016, 0.044715
        %v3049 = vmul.f32 %v3017, 0.044715
        %v3050 = vmul.f32 %v3018, 0.044715
        %v3051 = vmul.f32 %v3019, 0.044715
        %v3052 = vmul.f32 %v3020, 0.044715
        %v3053 = vmul.f32 %v3021, 0.044715
        %v3054 = vmul.f32 %v3022, 0.044715
        %v3055 = vmul.f32 %v3023, 0.044715
        %v3056 = vmul.f32 %v3024, 0.044715
        %v3057 = vmul.f32 %v3025, 0.044715
        %v3058 = vadd.f32 %v2884, %v3026
        %v3059 = vadd.f32 %v2886, %v3027
        %v3060 = vadd.f32 %v2888, %v3028
        %v3061 = vadd.f32 %v2890, %v3029
        %v3062 = vadd.f32 %v2894, %v3030
        %v3063 = vadd.f32 %v2896, %v3031
        %v3064 = vadd.f32 %v2898, %v3032
        %v3065 = vadd.f32 %v2900, %v3033
        %v3066 = vadd.f32 %v2904, %v3034
        %v3067 = vadd.f32 %v2906, %v3035
        %v3068 = vadd.f32 %v2908, %v3036
        %v3069 = vadd.f32 %v2910, %v3037
        %v3070 = vadd.f32 %v2914, %v3038
        %v3071 = vadd.f32 %v2916, %v3039
        %v3072 = vadd.f32 %v2918, %v3040
        %v3073 = vadd.f32 %v2920, %v3041
        %v3074 = vadd.f32 %v2924, %v3042
        %v3075 = vadd.f32 %v2926, %v3043
        %v3076 = vadd.f32 %v2928, %v3044
        %v3077 = vadd.f32 %v2930, %v3045
        %v3078 = vadd.f32 %v2934, %v3046
        %v3079 = vadd.f32 %v2936, %v3047
        %v3080 = vadd.f32 %v2938, %v3048
        %v3081 = vadd.f32 %v2940, %v3049
        %v3082 = vadd.f32 %v2944, %v3050
        %v3083 = vadd.f32 %v2946, %v3051
        %v3084 = vadd.f32 %v2948, %v3052
        %v3085 = vadd.f32 %v2950, %v3053
        %v3086 = vadd.f32 %v2954, %v3054
        %v3087 = vadd.f32 %v2956, %v3055
        %v3088 = vadd.f32 %v2958, %v3056
        %v3089 = vadd.f32 %v2960, %v3057
        %v3090 = vmul.f32 %v3058, 0.7978846
        %v3091 = vmul.f32 %v3059, 0.7978846
        %v3092 = vmul.f32 %v3060, 0.7978846
        %v3093 = vmul.f32 %v3061, 0.7978846
        %v3094 = vmul.f32 %v3062, 0.7978846
        %v3095 = vmul.f32 %v3063, 0.7978846
        %v3096 = vmul.f32 %v3064, 0.7978846
        %v3097 = vmul.f32 %v3065, 0.7978846
        %v3098 = vmul.f32 %v3066, 0.7978846
        %v3099 = vmul.f32 %v3067, 0.7978846
        %v3100 = vmul.f32 %v3068, 0.7978846
        %v3101 = vmul.f32 %v3069, 0.7978846
        %v3102 = vmul.f32 %v3070, 0.7978846
        %v3103 = vmul.f32 %v3071, 0.7978846
        %v3104 = vmul.f32 %v3072, 0.7978846
        %v3105 = vmul.f32 %v3073, 0.7978846
        %v3106 = vmul.f32 %v3074, 0.7978846
        %v3107 = vmul.f32 %v3075, 0.7978846
        %v3108 = vmul.f32 %v3076, 0.7978846
        %v3109 = vmul.f32 %v3077, 0.7978846
        %v3110 = vmul.f32 %v3078, 0.7978846
        %v3111 = vmul.f32 %v3079, 0.7978846
        %v3112 = vmul.f32 %v3080, 0.7978846
        %v3113 = vmul.f32 %v3081, 0.7978846
        %v3114 = vmul.f32 %v3082, 0.7978846
        %v3115 = vmul.f32 %v3083, 0.7978846
        %v3116 = vmul.f32 %v3084, 0.7978846
        %v3117 = vmul.f32 %v3085, 0.7978846
        %v3118 = vmul.f32 %v3086, 0.7978846
        %v3119 = vmul.f32 %v3087, 0.7978846
        %v3120 = vmul.f32 %v3088, 0.7978846
        %v3121 = vmul.f32 %v3089, 0.7978846
        %v3122 = vtanh.pop %v3090
        %v3123 = vtanh.pop %v3091
        %v3124 = vtanh.pop %v3092
        %v3125 = vtanh.pop %v3093
        %v3126 = vtanh.pop %v3094
        %v3127 = vtanh.pop %v3095
        %v3128 = vtanh.pop %v3096
        %v3129 = vtanh.pop %v3097
        %v3130 = vtanh.pop %v3098
        %v3131 = vtanh.pop %v3099
        %v3132 = vtanh.pop %v3100
        %v3133 = vtanh.pop %v3101
        %v3134 = vtanh.pop %v3102
        %v3135 = vtanh.pop %v3103
        %v3136 = vtanh.pop %v3104
        %v3137 = vtanh.pop %v3105
        %v3138 = vtanh.pop %v3106
        %v3139 = vtanh.pop %v3107
        %v3140 = vtanh.pop %v3108
        %v3141 = vtanh.pop %v3109
        %v3142 = vtanh.pop %v3110
        %v3143 = vtanh.pop %v3111
        %v3144 = vtanh.pop %v3112
        %v3145 = vtanh.pop %v3113
        %v3146 = vtanh.pop %v3114
        %v3147 = vtanh.pop %v3115
        %v3148 = vtanh.pop %v3116
        %v3149 = vtanh.pop %v3117
        %v3150 = vtanh.pop %v3118
        %v3151 = vtanh.pop %v3119
        %v3152 = vtanh.pop %v3120
        %v3153 = vtanh.pop %v3121
        %v3154 = vadd.f32 %v3122, 1.0
        %v3155 = vadd.f32 %v3123, 1.0
        %v3156 = vadd.f32 %v3124, 1.0
        %v3157 = vadd.f32 %v3125, 1.0
        %v3158 = vadd.f32 %v3126, 1.0
        %v3159 = vadd.f32 %v3127, 1.0
        %v3160 = vadd.f32 %v3128, 1.0
        %v3161 = vadd.f32 %v3129, 1.0
        %v3162 = vadd.f32 %v3130, 1.0
        %v3163 = vadd.f32 %v3131, 1.0
        %v3164 = vadd.f32 %v3132, 1.0
        %v3165 = vadd.f32 %v3133, 1.0
        %v3166 = vadd.f32 %v3134, 1.0
        %v3167 = vadd.f32 %v3135, 1.0
        %v3168 = vadd.f32 %v3136, 1.0
        %v3169 = vadd.f32 %v3137, 1.0
        %v3170 = vadd.f32 %v3138, 1.0
        %v3171 = vadd.f32 %v3139, 1.0
        %v3172 = vadd.f32 %v3140, 1.0
        %v3173 = vadd.f32 %v3141, 1.0
        %v3174 = vadd.f32 %v3142, 1.0
        %v3175 = vadd.f32 %v3143, 1.0
        %v3176 = vadd.f32 %v3144, 1.0
        %v3177 = vadd.f32 %v3145, 1.0
        %v3178 = vadd.f32 %v3146, 1.0
        %v3179 = vadd.f32 %v3147, 1.0
        %v3180 = vadd.f32 %v3148, 1.0
        %v3181 = vadd.f32 %v3149, 1.0
        %v3182 = vadd.f32 %v3150, 1.0
        %v3183 = vadd.f32 %v3151, 1.0
        %v3184 = vadd.f32 %v3152, 1.0
        %v3185 = vadd.f32 %v3153, 1.0
        %v3186 = vmul.f32 %v3154, 0.5
        %v3187 = vmul.f32 %v3155, 0.5
        %v3188 = vmul.f32 %v3156, 0.5
        %v3189 = vmul.f32 %v3157, 0.5
        %v3190 = vmul.f32 %v3158, 0.5
        %v3191 = vmul.f32 %v3159, 0.5
        %v3192 = vmul.f32 %v3160, 0.5
        %v3193 = vmul.f32 %v3161, 0.5
        %v3194 = vmul.f32 %v3162, 0.5
        %v3195 = vmul.f32 %v3163, 0.5
        %v3196 = vmul.f32 %v3164, 0.5
        %v3197 = vmul.f32 %v3165, 0.5
        %v3198 = vmul.f32 %v3166, 0.5
        %v3199 = vmul.f32 %v3167, 0.5
        %v3200 = vmul.f32 %v3168, 0.5
        %v3201 = vmul.f32 %v3169, 0.5
        %v3202 = vmul.f32 %v3170, 0.5
        %v3203 = vmul.f32 %v3171, 0.5
        %v3204 = vmul.f32 %v3172, 0.5
        %v3205 = vmul.f32 %v3173, 0.5
        %v3206 = vmul.f32 %v3174, 0.5
        %v3207 = vmul.f32 %v3175, 0.5
        %v3208 = vmul.f32 %v3176, 0.5
        %v3209 = vmul.f32 %v3177, 0.5
        %v3210 = vmul.f32 %v3178, 0.5
        %v3211 = vmul.f32 %v3179, 0.5
        %v3212 = vmul.f32 %v3180, 0.5
        %v3213 = vmul.f32 %v3181, 0.5
        %v3214 = vmul.f32 %v3182, 0.5
        %v3215 = vmul.f32 %v3183, 0.5
        %v3216 = vmul.f32 %v3184, 0.5
        %v3217 = vmul.f32 %v3185, 0.5
        %v3218 = vmul.f32 %v2884, %v3186
        %v3219 = vmul.f32 %v2886, %v3187
        %v3220 = vmul.f32 %v2888, %v3188
        %v3221 = vmul.f32 %v2890, %v3189
        %v3222 = vmul.f32 %v2894, %v3190
        %v3223 = vmul.f32 %v2896, %v3191
        %v3224 = vmul.f32 %v2898, %v3192
        %v3225 = vmul.f32 %v2900, %v3193
        %v3226 = vmul.f32 %v2904, %v3194
        %v3227 = vmul.f32 %v2906, %v3195
        %v3228 = vmul.f32 %v2908, %v3196
        %v3229 = vmul.f32 %v2910, %v3197
        %v3230 = vmul.f32 %v2914, %v3198
        %v3231 = vmul.f32 %v2916, %v3199
        %v3232 = vmul.f32 %v2918, %v3200
        %v3233 = vmul.f32 %v2920, %v3201
        %v3234 = vmul.f32 %v2924, %v3202
        %v3235 = vmul.f32 %v2926, %v3203
        %v3236 = vmul.f32 %v2928, %v3204
        %v3237 = vmul.f32 %v2930, %v3205
        %v3238 = vmul.f32 %v2934, %v3206
        %v3239 = vmul.f32 %v2936, %v3207
        %v3240 = vmul.f32 %v2938, %v3208
        %v3241 = vmul.f32 %v2940, %v3209
        %v3242 = vmul.f32 %v2944, %v3210
        %v3243 = vmul.f32 %v2946, %v3211
        %v3244 = vmul.f32 %v2948, %v3212
        %v3245 = vmul.f32 %v2950, %v3213
        %v3246 = vmul.f32 %v2954, %v3214
        %v3247 = vmul.f32 %v2956, %v3215
        %v3248 = vmul.f32 %v2958, %v3216
        %v3249 = vmul.f32 %v2960, %v3217
        %v3250 = vld [vmem:[%s9] sm:$0xf]
        %v3251 = vld [vmem:[%s9 + $0x4] sm:$0xf]
        %v3252 = vld [vmem:[%s9 + $0x8] sm:$0xf]
        %v3253 = vld [vmem:[%s9 + $0xc] sm:$0xf]
        %v3254 = vpack.c.bf16 %v3220, %v3218
        %v3255 = vpack.c.bf16 %v3221, %v3219
        %v3256 = vpack.c.bf16 %v3224, %v3222
        %v3257 = vpack.c.bf16 %v3225, %v3223
        %v3258 = vpack.c.bf16 %v3228, %v3226
        %v3259 = vpack.c.bf16 %v3229, %v3227
        %v3260 = vpack.c.bf16 %v3232, %v3230
        %v3261 = vpack.c.bf16 %v3233, %v3231
        %v3262 = vpack.c.bf16 %v3236, %v3234
        %v3263 = vpack.c.bf16 %v3237, %v3235
        %v3264 = vpack.c.bf16 %v3240, %v3238
        %v3265 = vpack.c.bf16 %v3241, %v3239
        %v3266 = vpack.c.bf16 %v3244, %v3242
        %v3267 = vpack.c.bf16 %v3245, %v3243
        %v3268 = vpack.c.bf16 %v3248, %v3246
        %v3269 = vpack.c.bf16 %v3249, %v3247
        %v3270 = vld [vmem:[%s10] sm:$0xff]
        %v3271 = vld [vmem:[%s10 + $0x8] sm:$0xff]
        %v3272 = vld [vmem:[%s10 + $0x10] sm:$0xff]
        %v3273 = vld [vmem:[%s10 + $0x18] sm:$0xff]
        %3275 = vset.pattern.permute.xlu0 0
        %3276 = vperm.xlu0 %3275, %v3270
        %v3277 = vpop.permute.xlu0 %3276
        %3280 = vset.pattern.permute.xlu0 0
        %3281 = vperm.xlu0 %3280, %v3271
        %v3282 = vpop.permute.xlu0 %3281
        %3285 = vset.pattern.permute.xlu0 0
        %3286 = vperm.xlu0 %3285, %v3272
        %v3287 = vpop.permute.xlu0 %3286
        %3290 = vset.pattern.permute.xlu0 0
        %3291 = vperm.xlu0 %3290, %v3273
        %v3292 = vpop.permute.xlu0 %3291
        %v3298 = vunpack.c.l.b16 %v3250
        %v3299 = vunpack.c.l.b16 %v3251
        %v3300 = vunpack.c.l.b16 %v3252
        %v3301 = vunpack.c.l.b16 %v3253
        %v3302 = vpack.c.b16 %v3299, %v3298
        %v3303 = vpack.c.b16 %v3301, %v3300
        %3306 = vmatprep.subr.bf16.mxu0 %v3269
        %3307 = vmatpush1.bf16.msra.mxu0 %v3268
        %3308 = vmatprep.subr.bf16.mxu0 %v3267
        %3309 = vmatpush1.bf16.msra.mxu0 %v3266
        %3310 = vmatprep.subr.bf16.mxu0 %v3265
        %3311 = vmatpush1.bf16.msra.mxu0 %v3264
        %3312 = vmatprep.subr.bf16.mxu0 %v3263
        %3313 = vmatpush1.bf16.msra.mxu0 %v3262
        %3314 = vmatprep.subr.bf16.mxu0 %v3261
        %3315 = vmatpush1.bf16.msra.mxu0 %v3260
        %3316 = vmatprep.subr.bf16.mxu0 %v3259
        %3317 = vmatpush1.bf16.msra.mxu0 %v3258
        %3318 = vmatprep.subr.bf16.mxu0 %v3257
        %3319 = vmatpush1.bf16.msra.mxu0 %v3256
        %3320 = vmatprep.subr.bf16.mxu0 %v3255
        %3321 = vmatpush1.bf16.msra.mxu0 %v3254
        %3322 = vmatprep.subr.bf16.mxu0 0
        %3323 = vmatpush2.bf16.msra.mxu0 0
        %3324 = vmatprep.subr.bf16.mxu0 0
        %3325 = vmatpush2.bf16.msra.mxu0 0
        %3326 = vmatprep.subr.bf16.mxu0 0
        %3327 = vmatpush2.bf16.msra.mxu0 0
        %3328 = vmatprep.subr.bf16.mxu0 0
        %3329 = vmatpush2.bf16.msra.mxu0 0
        %3330 = vmatprep.subr.bf16.mxu0 0
        %3331 = vmatpush2.bf16.msra.mxu0 0
        %3332 = vmatprep.subr.bf16.mxu0 0
        %3333 = vmatpush2.bf16.msra.mxu0 0
        %3334 = vmatprep.subr.bf16.mxu0 0
        %3335 = vmatpush2.bf16.msra.mxu0 0
        %3336 = vmatprep.subr.bf16.mxu0 0
        %3337 = vmatpush2.bf16.msra.mxu0 0
        %3338 = vmatprep.mubr.bf16.mxu0 0
        %3339 = vmatmul.mubr.bf16.gmra.mxu0 %v3302
        %v3340 = vpop.f32.mrf.mxu0
        %v3341 = vadd.f32 %v3277, %v3340
        %v3342 = vpop.f32.mrf.mxu0
        %v3343 = vadd.f32 %v3277, %v3342
        %v3344 = vpop.f32.mrf.mxu0
        %v3345 = vadd.f32 %v3282, %v3344
        %v3346 = vpop.f32.mrf.mxu0
        %v3347 = vadd.f32 %v3282, %v3346
        %3348 = vmatprep.mubr.bf16.mxu0 0
        %3349 = vmatmul.mubr.bf16.gmra.mxu0 %v3303
        %v3350 = vpop.f32.mrf.mxu0
        %v3351 = vadd.f32 %v3287, %v3350
        %v3352 = vpop.f32.mrf.mxu0
        %v3353 = vadd.f32 %v3287, %v3352
        %v3354 = vpop.f32.mrf.mxu0
        %v3355 = vadd.f32 %v3292, %v3354
        %v3356 = vpop.f32.mrf.mxu0
        %v3357 = vadd.f32 %v3292, %v3356
        %3358 = vdwg.mxu0
        %v3359 = vld [vmem:[%s11] sm:$0xff]
        %v3360 = vld [vmem:[%s11 + $0x8] sm:$0xff]
        %v3361 = vld [vmem:[%s11 + $0x10] sm:$0xff]
        %v3362 = vld [vmem:[%s11 + $0x18] sm:$0xff]
        %3364 = vset.pattern.permute.xlu0 0
        %3365 = vperm.xlu0 %3364, %v3359
        %v3366 = vpop.permute.xlu0 %3365
        %3369 = vset.pattern.permute.xlu0 0
        %3370 = vperm.xlu0 %3369, %v3360
        %v3371 = vpop.permute.xlu0 %3370
        %3374 = vset.pattern.permute.xlu0 0
        %3375 = vperm.xlu0 %3374, %v3361
        %v3376 = vpop.permute.xlu0 %3375
        %3379 = vset.pattern.permute.xlu0 0
        %3380 = vperm.xlu0 %3379, %v3362
        %v3381 = vpop.permute.xlu0 %3380
        %v3383 = vmul.f32 %v3341, %v3366
        %v3384 = vmul.f32 %v3343, %v3366
        %v3385 = vmul.f32 %v3345, %v3371
        %v3386 = vmul.f32 %v3347, %v3371
        %v3387 = vmul.f32 %v3351, %v3376
        %v3388 = vmul.f32 %v3353, %v3376
        %v3389 = vmul.f32 %v3355, %v3381
        %v3390 = vmul.f32 %v3357, %v3381
        %v3391 = vld [vmem:[%s411] sm:$0xff]
        %v3392 = vld [vmem:[%s411 + $0x8] sm:$0xff]
        %v3393 = vld [vmem:[%s411 + $0x10] sm:$0xff]
        %v3394 = vld [vmem:[%s411 + $0x18] sm:$0xff]
        %v3395 = vld [vmem:[%s411 + $0x20] sm:$0xff]
        %v3396 = vld [vmem:[%s411 + $0x28] sm:$0xff]
        %v3397 = vld [vmem:[%s411 + $0x30] sm:$0xff]
        %v3398 = vld [vmem:[%s411 + $0x38] sm:$0xff]
        %v3399 = vadd.f32 %v3391, %v3383
        %v3400 = vadd.f32 %v3392, %v3384
        %v3401 = vadd.f32 %v3393, %v3385
        %v3402 = vadd.f32 %v3394, %v3386
        %v3403 = vadd.f32 %v3395, %v3387
        %v3404 = vadd.f32 %v3396, %v3388
        %v3405 = vadd.f32 %v3397, %v3389
        %v3406 = vadd.f32 %v3398, %v3390
        %3407 = vst [vmem:[%s406] sm:$0xff] %v3399
        %3408 = vst [vmem:[%s406 + $0x8] sm:$0xff] %v3400
        %3409 = vst [vmem:[%s406 + $0x10] sm:$0xff] %v3401
        %3410 = vst [vmem:[%s406 + $0x18] sm:$0xff] %v3402
        %3411 = vst [vmem:[%s406 + $0x20] sm:$0xff] %v3403
        %3412 = vst [vmem:[%s406 + $0x28] sm:$0xff] %v3404
        %3413 = vst [vmem:[%s406 + $0x30] sm:$0xff] %v3405
        %3414 = vst [vmem:[%s406 + $0x38] sm:$0xff] %v3406
        %s3415 = sand.u32 %s291, 1
        %s3416 = scalar_lea.sflag [#allocation4], %s3415
        %s3417 = sand.u32 %s291, 1
        %s3418 = smul.addr %s3417, 64
        %s3419 = scalar_lea.vmem [#allocation3], %s3418
        // Predicated region
        $region69: #{tpu_custom_call.1} parent=67 // pred_check
          %p3420 = pneg %p301
        $region70: #{tpu_custom_call.1} parent=67 // pred_check_branch
          %3422 = sbr.rel (%p3420) target = $region72
        $region71: #{tpu_custom_call.1} parent=67 // pred_region
          %s3424 = ssub.s32 1024, 1024
          %3425 = vsyncadd %s3416, %s3424
          %s3426 = smul.addr %s26, 8
          %s3427 = smul.addr %s3426, 128
          %s3428 = scalar_lea.hbm %s12, %s3427
          %s3429 = sshll.u32 %s3419, 4
          %s3430 = int_to_ptr.vmem [resolvable:$true] %s3429
          %3435 = dma.vmem_to_hbm [thread:$0]  %s3430, 1024, %s3428, %s3416, 256, 256, 16
        $region72: #{tpu_custom_call.1} parent=67 // pred_fallthru
          _
      $region68: #{tpu_custom_call.1} parent=5 // pred_fallthru
        _
      %p3436 = scmp.le.s32.totalorder 2, %s21
      // Predicated region
      $region73: #{tpu_custom_call.1} parent=5 // pred_check
        %p3437 = pneg %p3436
      $region74: #{tpu_custom_call.1} parent=5 // pred_check_branch
        %3439 = sbr.rel (%p3437) target = $region76
      $region75: #{tpu_custom_call.1} parent=5 // pred_region
        %s3440 = ssub.s32 %s21, 2
        // Predicated region
        $region77: #{tpu_custom_call.1} parent=75 // pred_check
          %p3441 = pneg %p307
        $region78: #{tpu_custom_call.1} parent=75 // pred_check_branch
          %3443 = sbr.rel (%p3441) target = $region80
        $region79: #{tpu_custom_call.1} parent=75 // pred_region
          %s3444 = sand.u32 %s292, 1
          %s3445 = scalar_lea.sflag [#allocation4], %s3444
          %s3446 = sand.u32 %s292, 1
          %s3447 = smul.addr %s3446, 64
          %s3448 = scalar_lea.vmem [#allocation3], %s3447
          %3449 = dma.done %s3445, 1024
        $region80: #{tpu_custom_call.1} parent=75 // pred_fallthru
          _
      $region76: #{tpu_custom_call.1} parent=5 // pred_fallthru
        _
    $region6: #{tpu_custom_call.1} parent=1 // loop_footer
      %s25 = sadd.s32 1, %s21
    $region7: #{tpu_custom_call.1} parent=1 // loop_footer_branch
      %20 = sbr.rel target = $region3
    $region8: #{tpu_custom_call.1} parent=1 // loop_exit
      _
    %3450 = vsyncpa [#allocation4], 1
    %s3451 = scalar_lea.sflag [#allocation4], 1
    %3452 = vsyncpa %s3451, 1

</llo_original>
